<compile_context>
chip_gen: v6e
topology: v6e:2x2x1
jax: 0.10.0
libtpu: 0.0.40
codegen_flags: <defaults>
</compile_context>

<pallas_src>
import functools

import jax
import jax.numpy as jnp
from jax import lax
from jax.experimental import pallas as pl
from jax.experimental.pallas import tpu as pltpu

EPS = 1e-5
LANE = 128
DEFAULT_TILE_M = 512
VMEM_LIMIT = 64 * 1024 * 1024
COMPUTE_DTYPE = jnp.bfloat16


def _round_up(x, m):
    return (x + m - 1) // m * m


# ----------------------------------------------------------------------------
# Pallas kernels
# ----------------------------------------------------------------------------
def _mm_stats_kernel(x_ref, w_ref, y_ref, s_ref, *, m_real, tile_m):
    """1x1-conv row tile: y = x @ w (bf16 MXU, f32 accum) + per-tile BN stats."""
    i = pl.program_id(0)
    y = jnp.dot(x_ref[...], w_ref[...], preferred_element_type=jnp.float32)
    y_ref[...] = y

    # Per-tile BatchNorm partials, masking out padded rows.
    row0 = i * tile_m
    rid = lax.broadcasted_iota(jnp.int32, y.shape, 0) + row0
    valid = rid < m_real
    nval = jnp.maximum(jnp.minimum(m_real - row0, tile_m), 1).astype(jnp.float32)
    ym = jnp.where(valid, y, 0.0)
    csum = jnp.sum(ym, axis=0, keepdims=True)                # (1, C) column sum
    mu = csum / nval
    dev = jnp.where(valid, y - mu, 0.0)
    m2 = jnp.sum(dev * dev, axis=0, keepdims=True)           # (1, C) sum sq dev
    pad = jnp.zeros((6, y.shape[1]), jnp.float32)
    s_ref[...] = jnp.concatenate([csum, m2, pad], axis=0)    # (8, C)


def _conv3x3_stats_kernel(x_ref, w_ref, y_ref, s_ref,
                          *, stride, k, ho, wo, cin, cpad):
    """Per-image 3x3 conv: accumulate the k*k taps from shifted unit-stride
    slices of the stride-phase planes (no materialized im2col) + BN stats."""
    acc = jnp.zeros((ho * wo, cpad), jnp.float32)
    for kh in range(k):
        for kw in range(k):
            p = (kh % stride) * stride + (kw % stride)     # phase plane index
            oh, ow = kh // stride, kw // stride            # offset inside phase
            tap = x_ref[p, pl.ds(oh, ho), pl.ds(ow, wo), :]          # (ho,wo,cin)
            acc = acc + jnp.dot(tap.reshape(ho * wo, cin),
                                w_ref[kh * k + kw],
                                preferred_element_type=jnp.float32)
    y_ref[...] = acc
    n = float(ho * wo)
    csum = jnp.sum(acc, axis=0, keepdims=True)
    mu = csum / n
    dev = acc - mu
    m2 = jnp.sum(dev * dev, axis=0, keepdims=True)
    pad = jnp.zeros((6, cpad), jnp.float32)
    s_ref[...] = jnp.concatenate([csum, m2, pad], axis=0)


def _bn_act_kernel(y_ref, scale_ref, shift_ref, o_ref, *, relu):
    out = y_ref[...] * scale_ref[...] + shift_ref[...]
    if relu:
        out = jnp.maximum(out, 0.0)
    o_ref[...] = out


def _bn_add_relu_kernel(y_ref, res_ref, scale_ref, shift_ref, o_ref):
    # BN epilogue fused with the residual add + final ReLU of the bottleneck.
    out = y_ref[...] * scale_ref[...] + shift_ref[...] + res_ref[...]
    o_ref[...] = jnp.maximum(out, 0.0)


# ----------------------------------------------------------------------------
# Pallas wrappers
# ----------------------------------------------------------------------------
def _combine_stats(stats, counts):
    """Exact (Chan) combination of per-tile BN partials -> mean, biased var."""
    sums = stats[:, 0, :]                    # (T, C)
    m2s = stats[:, 1, :]                     # (T, C)
    n = counts[:, None]                      # (T, 1)
    n_tot = jnp.sum(counts)
    mean = jnp.sum(sums, axis=0) / n_tot
    tile_mean = sums / n
    m2 = jnp.sum(m2s, axis=0) + jnp.sum(n * (tile_mean - mean[None, :]) ** 2, axis=0)
    var = m2 / n_tot
    return mean, var


def matmul_stats(x, wmat, m_real, *, tile_m):
    """x: (m_real, K) bf16; wmat: (K, C) bf16 with C % 128 == 0."""
    K = x.shape[1]
    C = wmat.shape[1]
    tm = m_real if m_real <= tile_m else tile_m
    T = pl.cdiv(m_real, tm)
    m_pad = T * tm
    if m_pad != m_real:
        x = jnp.pad(x, ((0, m_pad - m_real), (0, 0)))
    kern = functools.partial(_mm_stats_kernel, m_real=m_real, tile_m=tm)
    y, stats = pl.pallas_call(
        kern,
        grid=(T,),
        in_specs=[pl.BlockSpec((tm, K), lambda i: (i, 0)),
                  pl.BlockSpec((K, C), lambda i: (0, 0))],
        out_specs=[pl.BlockSpec((tm, C), lambda i: (i, 0)),
                   pl.BlockSpec((None, 8, C), lambda i: (i, 0, 0))],
        out_shape=[jax.ShapeDtypeStruct((m_pad, C), jnp.float32),
                   jax.ShapeDtypeStruct((T, 8, C), jnp.float32)],
        compiler_params=pltpu.CompilerParams(
            dimension_semantics=("parallel",), vmem_limit_bytes=VMEM_LIMIT),
        cost_estimate=pl.CostEstimate(
            flops=2 * m_pad * K * C,
            transcendentals=0,
            bytes_accessed=m_pad * K * 2 + K * C * 2 + m_pad * C * 4 + T * 8 * C * 4),
    )(x, wmat)
    counts = jnp.asarray([min(tm, m_real - i * tm) for i in range(T)], jnp.float32)
    mean, var = _combine_stats(stats, counts)
    return y, mean, var


def bn_apply(y, scale, shift, *, relu, residual=None, tile_m):
    M, C = y.shape
    tm = M if M <= tile_m else tile_m
    grid = (pl.cdiv(M, tm),)
    row = pl.BlockSpec((tm, C), lambda i: (i, 0))
    vec = pl.BlockSpec((1, C), lambda i: (0, 0))       # DMA'd once (constant index)
    cp = pltpu.CompilerParams(dimension_semantics=("parallel",),
                              vmem_limit_bytes=VMEM_LIMIT)
    if residual is None:
        return pl.pallas_call(
            functools.partial(_bn_act_kernel, relu=relu),
            grid=grid,
            in_specs=[row, vec, vec],
            out_specs=row,
            out_shape=jax.ShapeDtypeStruct((M, C), jnp.float32),
            compiler_params=cp,
        )(y, scale, shift)
    return pl.pallas_call(
        _bn_add_relu_kernel,
        grid=grid,
        in_specs=[row, row, vec, vec],
        out_specs=row,
        out_shape=jax.ShapeDtypeStruct((M, C), jnp.float32),
        compiler_params=cp,
    )(y, residual, scale, shift)


def bn_epilogue(y, mean, var, gamma, beta, *, relu, residual=None, tile_m):
    C = y.shape[1]
    c = gamma.shape[0]
    g = jnp.pad(gamma, (0, C - c))
    b = jnp.pad(beta, (0, C - c))
    inv = lax.rsqrt(var + EPS)
    scale = (g * inv).reshape(1, C).astype(jnp.float32)
    shift = (b - mean * g * inv).reshape(1, C).astype(jnp.float32)
    return bn_apply(y, scale, shift, relu=relu, residual=residual, tile_m=tile_m)


# ----------------------------------------------------------------------------
# Conv pass-1 wrappers (plain-JAX glue: PH weight build, layout, phase planes)
# ----------------------------------------------------------------------------
def ph_weight(A, Fw):
    # A: (n, n, n); Fw: (n, Cout//n, Cin//n, k, k)
    n, co_n, ci_n, k, _ = Fw.shape
    W = jnp.einsum("iac,ibdhw->abcdhw", A, Fw)
    return W.reshape(n * co_n, n * ci_n, k, k)            # (Cout, Cin, k, k) OIHW


def conv1x1_pass1(x_nhwc, A, Fw, *, stride, tile_m):
    W = ph_weight(A, Fw)[:, :, 0, 0]                      # (Cout, Cin)
    Cout, Cin = W.shape
    cpad = _round_up(Cout, LANE)
    wmat = jnp.pad(W.T, ((0, 0), (0, cpad - Cout))).astype(COMPUTE_DTYPE)
    if stride > 1:
        x_nhwc = x_nhwc[:, ::stride, ::stride, :]
    N, H, Wd, _ = x_nhwc.shape
    M = N * H * Wd
    xf = x_nhwc.reshape(M, Cin).astype(COMPUTE_DTYPE)
    y, mean, var = matmul_stats(xf, wmat, M, tile_m=tile_m)
    return y, mean, var, (N, H, Wd, Cout)


def conv3x3_pass1(x_nhwc, A, Fw, *, stride, padding):
    W = ph_weight(A, Fw)                                  # (Cout, Cin, k, k)
    Cout, Cin, k, _ = W.shape
    cpad = _round_up(Cout, LANE)
    w9 = W.transpose(2, 3, 1, 0).reshape(k * k, Cin, Cout)
    w9 = jnp.pad(w9, ((0, 0), (0, 0), (0, cpad - Cout))).astype(COMPUTE_DTYPE)

    N, H, Wd, _ = x_nhwc.shape
    ho = (H + 2 * padding - k) // stride + 1
    wo = (Wd + 2 * padding - k) // stride + 1
    xp = jnp.pad(x_nhwc, ((0, 0), (padding, padding),
                          (padding, padding), (0, 0))).astype(COMPUTE_DTYPE)

    s = stride
    s2 = s * s
    need_h = (k - 1) // s + ho
    need_w = (k - 1) // s + wo
    phases = []
    for p in range(s):
        for q in range(s):
            ph = xp[:, p::s, q::s, :][:, :need_h, :need_w, :]
            ph = jnp.pad(ph, ((0, 0), (0, need_h - ph.shape[1]),
                              (0, need_w - ph.shape[2]), (0, 0)))
            phases.append(ph)
    xph = jnp.stack(phases, axis=1).reshape(N * s2, need_h, need_w, Cin)

    kern = functools.partial(_conv3x3_stats_kernel, stride=s, k=k, ho=ho, wo=wo,
                             cin=Cin, cpad=cpad)
    # TODO(synk): for very large feature maps, additionally tile the output-row
    # axis inside each image instead of one whole image per grid step.
    y, stats = pl.pallas_call(
        kern,
        grid=(N,),
        in_specs=[pl.BlockSpec((s2, need_h, need_w, Cin), lambda b: (b, 0, 0, 0)),
                  pl.BlockSpec((k * k, Cin, cpad), lambda b: (0, 0, 0))],
        out_specs=[pl.BlockSpec((None, ho * wo, cpad), lambda b: (b, 0, 0)),
                   pl.BlockSpec((None, 8, cpad), lambda b: (b, 0, 0))],
        out_shape=[jax.ShapeDtypeStruct((N, ho * wo, cpad), jnp.float32),
                   jax.ShapeDtypeStruct((N, 8, cpad), jnp.float32)],
        compiler_params=pltpu.CompilerParams(
            dimension_semantics=("parallel",), vmem_limit_bytes=VMEM_LIMIT),
        cost_estimate=pl.CostEstimate(
            flops=2 * N * ho * wo * k * k * Cin * cpad,
            transcendentals=0,
            bytes_accessed=(N * s2 * need_h * need_w * Cin * 2
                            + k * k * Cin * cpad * 2
                            + N * ho * wo * cpad * 4 + N * 8 * cpad * 4)),
    )(xph, w9)

    counts = jnp.full((N,), float(ho * wo), jnp.float32)
    mean, var = _combine_stats(stats, counts)
    return y.reshape(N * ho * wo, cpad), mean, var, (N, ho, wo, Cout)


def _unflatten(y_flat, meta):
    N, H, Wd, Cout = meta
    return y_flat[:N * H * Wd, :Cout].reshape(N, H, Wd, Cout)


# ----------------------------------------------------------------------------
# PHBottleneck forward
# ----------------------------------------------------------------------------
def ph_bottleneck_forward(x_nchw, params, *, stride, tile_m=DEFAULT_TILE_M):
    # TODO(synk): BatchNorm running_mean/var buffer updates (a training-mode
    # side effect) are not emitted; normalization uses batch statistics, which
    # is what determines the forward output.
    x = jnp.transpose(x_nchw, (0, 2, 3, 1)).astype(jnp.float32)   # NCHW -> NHWC

    # conv1 (1x1) + bn1 + relu
    y1, m1, v1, meta1 = conv1x1_pass1(x, *params["conv1"], stride=1, tile_m=tile_m)
    a1 = _unflatten(bn_epilogue(y1, m1, v1, *params["bn1"], relu=True,
                                tile_m=tile_m), meta1)

    # conv2 (3x3, stride) + bn2 + relu
    y2, m2, v2, meta2 = conv3x3_pass1(a1, *params["conv2"], stride=stride, padding=1)
    a2 = _unflatten(bn_epilogue(y2, m2, v2, *params["bn2"], relu=True,
                                tile_m=tile_m), meta2)

    # conv3 (1x1) pass 1
    y3, m3, v3, meta3 = conv1x1_pass1(a2, *params["conv3"], stride=1, tile_m=tile_m)

    # shortcut branch, kept in the padded flat (M_pad, C_pad) layout of y3
    if "shortcut_conv" in params:
        ys, ms, vs, _ = conv1x1_pass1(x, *params["shortcut_conv"],
                                      stride=stride, tile_m=tile_m)
        sc = bn_epilogue(ys, ms, vs, *params["shortcut_bn"], relu=False,
                         tile_m=tile_m)
    else:
        N, H, Wd, C = x.shape
        sc = jnp.pad(x.reshape(N * H * Wd, C),
                     ((0, y3.shape[0] - N * H * Wd), (0, y3.shape[1] - C)))

    # conv3 BN epilogue fused with residual add + final ReLU
    out = bn_epilogue(y3, m3, v3, *params["bn3"], relu=True, residual=sc,
                      tile_m=tile_m)
    out = _unflatten(out, meta3)
    return jnp.transpose(out, (0, 3, 1, 2))                       # NHWC -> NCHW


# ----------------------------------------------------------------------------
# Deterministic parameter init (shapes per PHConv / BatchNorm2d __init__)
# ----------------------------------------------------------------------------
def init_phconv(key, n, cin, cout, k):
    ka, kf = jax.random.split(key)
    a_bound = (6.0 / (n + n)) ** 0.5
    f_bound = (6.0 / ((cin // n) * k * k + (cout // n) * k * k)) ** 0.5
    A = jax.random.uniform(ka, (n, n, n), jnp.float32, -a_bound, a_bound)
    Fw = jax.random.uniform(kf, (n, cout // n, cin // n, k, k), jnp.float32,
                            -f_bound, f_bound)
    return A, Fw


def init_bn(c):
    return jnp.ones((c,), jnp.float32), jnp.zeros((c,), jnp.float32)


# ----------------------------------------------------------------------------
# Pure-JAX f32 reference (for correctness check)
# ----------------------------------------------------------------------------
def _ref_conv(x_nchw, W, stride, padding):
    return lax.conv_general_dilated(
        x_nchw, W, (stride, stride), [(padding, padding), (padding, padding)],
        dimension_numbers=("NCHW", "OIHW", "NCHW"))


def _ref_bn(y, gamma, beta):
    mean = jnp.mean(y, axis=(0, 2, 3), keepdims=True)
    var = jnp.var(y, axis=(0, 2, 3), keepdims=True)
    return (y - mean) * lax.rsqrt(var + EPS) * gamma.reshape(1, -1, 1, 1) \
        + beta.reshape(1, -1, 1, 1)


def reference_forward(x, params, *, stride):
    def block(inp, conv_p, bn_p, s, p, relu):
        W = ph_weight(*conv_p)
        y = _ref_bn(_ref_conv(inp, W, s, p), *bn_p)
        return jnp.maximum(y, 0.0) if relu else y

    out = block(x, params["conv1"], params["bn1"], 1, 0, True)
    out = block(out, params["conv2"], params["bn2"], stride, 1, True)
    out = block(out, params["conv3"], params["bn3"], 1, 0, False)
    if "shortcut_conv" in params:
        sc = block(x, params["shortcut_conv"], params["shortcut_bn"], stride, 0, False)
    else:
        sc = x
    return jnp.maximum(out + sc, 0.0)


# ----------------------------------------------------------------------------
if __name__ == "__main__":
    expansion = 2
    key = jax.random.PRNGKey(0)

    def build_params(k, in_planes, planes, stride, n):
        keys = jax.random.split(k, 5)
        p = {
            "conv1": init_phconv(keys[0], n, in_planes, planes, 1),
            "bn1": init_bn(planes),
            "conv2": init_phconv(keys[1], n, planes, planes, 3),
            "bn2": init_bn(planes),
            "conv3": init_phconv(keys[2], n, planes, expansion * planes, 1),
            "bn3": init_bn(expansion * planes),
        }
        if stride != 1 or in_planes != expansion * planes:
            p["shortcut_conv"] = init_phconv(keys[3], n, in_planes,
                                             expansion * planes, 1)
            p["shortcut_bn"] = init_bn(expansion * planes)
        return p

    # (in_planes, planes, stride, H, W, tile_m)
    configs = [
        (8, 8, 2, 16, 16, 128),    # projection shortcut; small tile -> multi-tile BN stats
        (16, 8, 1, 16, 16, 512),   # identity shortcut
    ]
    for idx, (cin, planes, stride, H, W, tile_m) in enumerate(configs):
        kcfg, kx = jax.random.split(jax.random.fold_in(key, idx))
        x = jax.random.normal(kx, (2, cin, H, W), dtype=jnp.float32)
        params = build_params(kcfg, cin, planes, stride, 4)

        fwd = jax.jit(functools.partial(ph_bottleneck_forward,
                                        stride=stride, tile_m=tile_m))
        out = jax.block_until_ready(fwd(x, params))
        ref = jax.block_until_ready(reference_forward(x, params, stride=stride))

        assert out.shape == (2, expansion * planes, H // stride, W // stride), out.shape
        err = float(jnp.max(jnp.abs(out - ref)))
        # bf16 MXU inputs vs. the f32 reference -> relaxed tolerance.
        assert jnp.allclose(out, ref, atol=5e-2, rtol=5e-2), (idx, err)

    print("KERNEL_OK")
</pallas_src>

<mosaic_0001>
module attributes {stable_mosaic.version = 11 : i64} {
  func.func @_bn_act_kernel(%arg0: i32, %arg1: memref<128x128xf32, #tpu.memory_space<vmem>>, %arg2: memref<1x128xf32, #tpu.memory_space<vmem>>, %arg3: memref<1x128xf32, #tpu.memory_space<vmem>>, %arg4: memref<128x128xf32, #tpu.memory_space<vmem>>) attributes {dimension_semantics = [#tpu.dimension_semantics<parallel>], iteration_bounds = array<i64: 4>, scalar_prefetch = 0 : i64, scratch_operands = 0 : i64, tpu.core_type = #tpu.core_type<tc>, window_params = [{transform_indices = @transform_0, window_bounds = array<i64: 128, 128>}, {pipeline_mode = #tpu.pipeline_mode<synchronous>, transform_indices = @transform_1, window_bounds = array<i64: 1, 128>}, {pipeline_mode = #tpu.pipeline_mode<synchronous>, transform_indices = @transform_2, window_bounds = array<i64: 1, 128>}, {transform_indices = @transform_3, window_bounds = array<i64: 128, 128>}]} {
    %c0 = arith.constant 0 : index
    %c0_0 = arith.constant 0 : index
    %0 = vector.load %arg1[%c0, %c0_0] : memref<128x128xf32, #tpu.memory_space<vmem>>, vector<128x128xf32>
    %c0_1 = arith.constant 0 : index
    %c0_2 = arith.constant 0 : index
    %1 = vector.load %arg2[%c0_1, %c0_2] : memref<1x128xf32, #tpu.memory_space<vmem>>, vector<1x128xf32>
    %2 = vector.broadcast %1 : vector<1x128xf32> to vector<128x128xf32>
    %3 = arith.mulf %0, %2 : vector<128x128xf32>
    %c0_3 = arith.constant 0 : index
    %c0_4 = arith.constant 0 : index
    %4 = vector.load %arg3[%c0_3, %c0_4] : memref<1x128xf32, #tpu.memory_space<vmem>>, vector<1x128xf32>
    %5 = vector.broadcast %4 : vector<1x128xf32> to vector<128x128xf32>
    %6 = arith.addf %3, %5 : vector<128x128xf32>
    %cst = arith.constant 0.000000e+00 : f32
    %7 = vector.broadcast %cst : f32 to vector<128x128xf32>
    %8 = arith.maximumf %6, %7 : vector<128x128xf32>
    %c0_5 = arith.constant 0 : index
    %c0_6 = arith.constant 0 : index
    %9 = vector.load %arg4[%c0_5, %c0_6] : memref<128x128xf32, #tpu.memory_space<vmem>>, vector<128x128xf32>
    tpu.vector_store %arg4[%c0_5, %c0_6], %8 {strides = array<i32>} : memref<128x128xf32, #tpu.memory_space<vmem>>, vector<128x128xf32>,
    return
  }
  func.func @transform_0(%arg0: i32) -> (i32, i32) {
    %c0_i32 = arith.constant 0 : i32
    %c0_i32_0 = arith.constant 0 : i32
    return %arg0, %c0_i32 : i32, i32
  }
  func.func @transform_1(%arg0: i32) -> (i32, i32) {
    %c0_i32 = arith.constant 0 : i32
    %c0_i32_0 = arith.constant 0 : i32
    %c0_i32_1 = arith.constant 0 : i32
    return %c0_i32, %c0_i32_0 : i32, i32
  }
  func.func @transform_2(%arg0: i32) -> (i32, i32) {
    %c0_i32 = arith.constant 0 : i32
    %c0_i32_0 = arith.constant 0 : i32
    %c0_i32_1 = arith.constant 0 : i32
    return %c0_i32, %c0_i32_0 : i32, i32
  }
  func.func @transform_3(%arg0: i32) -> (i32, i32) {
    %c0_i32 = arith.constant 0 : i32
    %c0_i32_0 = arith.constant 0 : i32
    return %arg0, %c0_i32 : i32, i32
  }
}

module attributes {stable_mosaic.version = 11 : i64} {
  func.func @_mm_stats_kernel(%arg0: i32, %arg1: memref<128x8xbf16, #tpu.memory_space<vmem>>, %arg2: memref<8x128xbf16, #tpu.memory_space<vmem>>, %arg3: memref<128x128xf32, #tpu.memory_space<vmem>>, %arg4: memref<1x8x128xf32, #tpu.memory_space<vmem>>) attributes {dimension_semantics = [#tpu.dimension_semantics<parallel>], iteration_bounds = array<i64: 4>, scalar_prefetch = 0 : i64, scratch_operands = 0 : i64, tpu.core_type = #tpu.core_type<tc>, window_params = [{transform_indices = @transform_0, window_bounds = array<i64: 128, 8>}, {pipeline_mode = #tpu.pipeline_mode<synchronous>, transform_indices = @transform_1, window_bounds = array<i64: 8, 128>}, {transform_indices = @transform_2, window_bounds = array<i64: 128, 128>}, {transform_indices = @transform_3, window_bounds = array<i64: 1, 8, 128>}]} {
    %c0 = arith.constant 0 : index
    %c0_0 = arith.constant 0 : index
    %0 = vector.load %arg1[%c0, %c0_0] : memref<128x8xbf16, #tpu.memory_space<vmem>>, vector<128x8xbf16>
    %c0_1 = arith.constant 0 : index
    %c0_2 = arith.constant 0 : index
    %1 = vector.load %arg2[%c0_1, %c0_2] : memref<8x128xbf16, #tpu.memory_space<vmem>>, vector<8x128xbf16>
    %cst = arith.constant dense<0.000000e+00> : vector<128x128xf32>
    %2 = tpu.matmul %0, %1, %cst {dimension_numbers = #tpu.dot_dimension_numbers<[1], [0], [0], [1], [0, 0, 1, 1], [], []>} : vector<128x8xbf16>, vector<8x128xbf16>, vector<128x128xf32> -> vector<128x128xf32>
    %c0_3 = arith.constant 0 : index
    %c0_4 = arith.constant 0 : index
    %3 = vector.load %arg3[%c0_3, %c0_4] : memref<128x128xf32, #tpu.memory_space<vmem>>, vector<128x128xf32>
    tpu.vector_store %arg3[%c0_3, %c0_4], %2 {strides = array<i32>} : memref<128x128xf32, #tpu.memory_space<vmem>>, vector<128x128xf32>,
    %c128_i32 = arith.constant 128 : i32
    %4 = arith.muli %arg0, %c128_i32 : i32
    %5 = tpu.iota {dimensions = array<i32: 0>} : vector<128x128xi32>
    %6 = vector.broadcast %4 : i32 to vector<128x128xi32>
    %7 = arith.addi %5, %6 : vector<128x128xi32>
    %c512_i32 = arith.constant 512 : i32
    %8 = vector.broadcast %c512_i32 : i32 to vector<128x128xi32>
    %9 = arith.cmpi slt, %7, %8 : vector<128x128xi32>
    %c512_i32_5 = arith.constant 512 : i32
    %10 = arith.subi %c512_i32_5, %4 : i32
    %c128_i32_6 = arith.constant 128 : i32
    %11 = arith.minsi %10, %c128_i32_6 : i32
    %c1_i32 = arith.constant 1 : i32
    %12 = arith.maxsi %11, %c1_i32 : i32
    %13 = arith.sitofp %12 : i32 to f32
    %cst_7 = arith.constant 0.000000e+00 : f32
    %14 = vector.broadcast %cst_7 : f32 to vector<128x128xf32>
    %15 = arith.select %9, %2, %14 : vector<128x128xi1>, vector<128x128xf32>
    %cst_8 = arith.constant dense<0.000000e+00> : vector<128xf32>
    %16 = vector.multi_reduction <add>, %15, %cst_8 [0] : vector<128x128xf32> to vector<128xf32>
    %17 = vector.shape_cast %16 : vector<128xf32> to vector<1x128xf32>
    %18 = vector.broadcast %13 : f32 to vector<1x128xf32>
    %19 = arith.divf %17, %18 : vector<1x128xf32>
    %20 = vector.broadcast %19 : vector<1x128xf32> to vector<128x128xf32>
    %21 = arith.subf %2, %20 : vector<128x128xf32>
    %cst_9 = arith.constant 0.000000e+00 : f32
    %22 = vector.broadcast %cst_9 : f32 to vector<128x128xf32>
    %23 = arith.select %9, %21, %22 : vector<128x128xi1>, vector<128x128xf32>
    %24 = arith.mulf %23, %23 : vector<128x128xf32>
    %cst_10 = arith.constant dense<0.000000e+00> : vector<128xf32>
    %25 = vector.multi_reduction <add>, %24, %cst_10 [0] : vector<128x128xf32> to vector<128xf32>
    %26 = vector.shape_cast %25 : vector<128xf32> to vector<1x128xf32>
    %cst_11 = arith.constant 0.000000e+00 : f32
    %27 = vector.broadcast %cst_11 : f32 to vector<6x128xf32>
    %28 = tpu.concatenate %17, %26, %27 in 0 : vector<1x128xf32>, vector<1x128xf32>, vector<6x128xf32> -> vector<8x128xf32>
    %c0_12 = arith.constant 0 : index
    %c0_13 = arith.constant 0 : index
    %c0_14 = arith.constant 0 : index
    %29 = vector.load %arg4[%c0_12, %c0_13, %c0_14] : memref<1x8x128xf32, #tpu.memory_space<vmem>>, vector<1x8x128xf32>
    %30 = vector.shape_cast %29 : vector<1x8x128xf32> to vector<8x128xf32>
    %31 = vector.shape_cast %28 : vector<8x128xf32> to vector<1x8x128xf32>
    tpu.vector_store %arg4[%c0_12, %c0_13, %c0_14], %31 {strides = array<i32>} : memref<1x8x128xf32, #tpu.memory_space<vmem>>, vector<1x8x128xf32>,
    return
  }
  func.func @transform_0(%arg0: i32) -> (i32, i32) {
    %c0_i32 = arith.constant 0 : i32
    %c0_i32_0 = arith.constant 0 : i32
    return %arg0, %c0_i32 : i32, i32
  }
  func.func @transform_1(%arg0: i32) -> (i32, i32) {
    %c0_i32 = arith.constant 0 : i32
    %c0_i32_0 = arith.constant 0 : i32
    %c0_i32_1 = arith.constant 0 : i32
    return %c0_i32, %c0_i32_0 : i32, i32
  }
  func.func @transform_2(%arg0: i32) -> (i32, i32) {
    %c0_i32 = arith.constant 0 : i32
    %c0_i32_0 = arith.constant 0 : i32
    return %arg0, %c0_i32 : i32, i32
  }
  func.func @transform_3(%arg0: i32) -> (i32, i32, i32) {
    %c0_i32 = arith.constant 0 : i32
    %c0_i32_0 = arith.constant 0 : i32
    %c0_i32_1 = arith.constant 0 : i32
    return %arg0, %c0_i32, %c0_i32_0 : i32, i32, i32
  }
}

module attributes {stable_mosaic.version = 11 : i64} {
  func.func @_bn_act_kernel(%arg0: i32, %arg1: memref<128x128xf32, #tpu.memory_space<vmem>>, %arg2: memref<1x128xf32, #tpu.memory_space<vmem>>, %arg3: memref<1x128xf32, #tpu.memory_space<vmem>>, %arg4: memref<128x128xf32, #tpu.memory_space<vmem>>) attributes {dimension_semantics = [#tpu.dimension_semantics<parallel>], iteration_bounds = array<i64: 1>, scalar_prefetch = 0 : i64, scratch_operands = 0 : i64, tpu.core_type = #tpu.core_type<tc>, window_params = [{transform_indices = @transform_0, window_bounds = array<i64: 128, 128>}, {pipeline_mode = #tpu.pipeline_mode<synchronous>, transform_indices = @transform_1, window_bounds = array<i64: 1, 128>}, {pipeline_mode = #tpu.pipeline_mode<synchronous>, transform_indices = @transform_2, window_bounds = array<i64: 1, 128>}, {transform_indices = @transform_3, window_bounds = array<i64: 128, 128>}]} {
    %c0 = arith.constant 0 : index
    %c0_0 = arith.constant 0 : index
    %0 = vector.load %arg1[%c0, %c0_0] : memref<128x128xf32, #tpu.memory_space<vmem>>, vector<128x128xf32>
    %c0_1 = arith.constant 0 : index
    %c0_2 = arith.constant 0 : index
    %1 = vector.load %arg2[%c0_1, %c0_2] : memref<1x128xf32, #tpu.memory_space<vmem>>, vector<1x128xf32>
    %2 = vector.broadcast %1 : vector<1x128xf32> to vector<128x128xf32>
    %3 = arith.mulf %0, %2 : vector<128x128xf32>
    %c0_3 = arith.constant 0 : index
    %c0_4 = arith.constant 0 : index
    %4 = vector.load %arg3[%c0_3, %c0_4] : memref<1x128xf32, #tpu.memory_space<vmem>>, vector<1x128xf32>
    %5 = vector.broadcast %4 : vector<1x128xf32> to vector<128x128xf32>
    %6 = arith.addf %3, %5 : vector<128x128xf32>
    %cst = arith.constant 0.000000e+00 : f32
    %7 = vector.broadcast %cst : f32 to vector<128x128xf32>
    %8 = arith.maximumf %6, %7 : vector<128x128xf32>
    %c0_5 = arith.constant 0 : index
    %c0_6 = arith.constant 0 : index
    %9 = vector.load %arg4[%c0_5, %c0_6] : memref<128x128xf32, #tpu.memory_space<vmem>>, vector<128x128xf32>
    tpu.vector_store %arg4[%c0_5, %c0_6], %8 {strides = array<i32>} : memref<128x128xf32, #tpu.memory_space<vmem>>, vector<128x128xf32>,
    return
  }
  func.func @transform_0(%arg0: i32) -> (i32, i32) {
    %c0_i32 = arith.constant 0 : i32
    %c0_i32_0 = arith.constant 0 : i32
    return %arg0, %c0_i32 : i32, i32
  }
  func.func @transform_1(%arg0: i32) -> (i32, i32) {
    %c0_i32 = arith.constant 0 : i32
    %c0_i32_0 = arith.constant 0 : i32
    %c0_i32_1 = arith.constant 0 : i32
    return %c0_i32, %c0_i32_0 : i32, i32
  }
  func.func @transform_2(%arg0: i32) -> (i32, i32) {
    %c0_i32 = arith.constant 0 : i32
    %c0_i32_0 = arith.constant 0 : i32
    %c0_i32_1 = arith.constant 0 : i32
    return %c0_i32, %c0_i32_0 : i32, i32
  }
  func.func @transform_3(%arg0: i32) -> (i32, i32) {
    %c0_i32 = arith.constant 0 : i32
    %c0_i32_0 = arith.constant 0 : i32
    return %arg0, %c0_i32 : i32, i32
  }
}

module attributes {stable_mosaic.version = 11 : i64} {
  func.func @_conv3x3_stats_kernel(%arg0: i32, %arg1: memref<4x9x9x8xbf16, #tpu.memory_space<vmem>>, %arg2: memref<9x8x128xbf16, #tpu.memory_space<vmem>>, %arg3: memref<1x64x128xf32, #tpu.memory_space<vmem>>, %arg4: memref<1x8x128xf32, #tpu.memory_space<vmem>>) attributes {dimension_semantics = [#tpu.dimension_semantics<parallel>], iteration_bounds = array<i64: 2>, scalar_prefetch = 0 : i64, scratch_operands = 0 : i64, tpu.core_type = #tpu.core_type<tc>, window_params = [{transform_indices = @transform_0, window_bounds = array<i64: 4, 9, 9, 8>}, {pipeline_mode = #tpu.pipeline_mode<synchronous>, transform_indices = @transform_1, window_bounds = array<i64: 9, 8, 128>}, {transform_indices = @transform_2, window_bounds = array<i64: 1, 64, 128>}, {transform_indices = @transform_3, window_bounds = array<i64: 1, 8, 128>}]} {
    %cst = arith.constant 0.000000e+00 : f32
    %0 = vector.broadcast %cst : f32 to vector<64x128xf32>
    %c0 = arith.constant 0 : index
    %c0_0 = arith.constant 0 : index
    %c0_1 = arith.constant 0 : index
    %c0_2 = arith.constant 0 : index
    %1 = vector.load %arg1[%c0, %c0_0, %c0_1, %c0_2] : memref<4x9x9x8xbf16, #tpu.memory_space<vmem>>, vector<1x8x8x8xbf16>
    %2 = vector.shape_cast %1 : vector<1x8x8x8xbf16> to vector<8x8x8xbf16>
    %3 = vector.shape_cast %2 : vector<8x8x8xbf16> to vector<64x8xbf16>
    %c0_3 = arith.constant 0 : index
    %c0_4 = arith.constant 0 : index
    %c0_5 = arith.constant 0 : index
    %4 = vector.load %arg2[%c0_3, %c0_4, %c0_5] : memref<9x8x128xbf16, #tpu.memory_space<vmem>>, vector<1x8x128xbf16>
    %5 = vector.shape_cast %4 : vector<1x8x128xbf16> to vector<8x128xbf16>
    %cst_6 = arith.constant dense<0.000000e+00> : vector<64x128xf32>
    %6 = tpu.matmul %3, %5, %cst_6 {dimension_numbers = #tpu.dot_dimension_numbers<[1], [0], [0], [1], [0, 0, 1, 1], [], []>} : vector<64x8xbf16>, vector<8x128xbf16>, vector<64x128xf32> -> vector<64x128xf32>
    %7 = arith.addf %0, %6 : vector<64x128xf32>
    %c1 = arith.constant 1 : index
    %c0_7 = arith.constant 0 : index
    %c0_8 = arith.constant 0 : index
    %c0_9 = arith.constant 0 : index
    %8 = vector.load %arg1[%c1, %c0_7, %c0_8, %c0_9] : memref<4x9x9x8xbf16, #tpu.memory_space<vmem>>, vector<1x8x8x8xbf16>
    %9 = vector.shape_cast %8 : vector<1x8x8x8xbf16> to vector<8x8x8xbf16>
    %10 = vector.shape_cast %9 : vector<8x8x8xbf16> to vector<64x8xbf16>
    %c1_10 = arith.constant 1 : index
    %c0_11 = arith.constant 0 : index
    %c0_12 = arith.constant 0 : index
    %11 = vector.load %arg2[%c1_10, %c0_11, %c0_12] : memref<9x8x128xbf16, #tpu.memory_space<vmem>>, vector<1x8x128xbf16>
    %12 = vector.shape_cast %11 : vector<1x8x128xbf16> to vector<8x128xbf16>
    %cst_13 = arith.constant dense<0.000000e+00> : vector<64x128xf32>
    %13 = tpu.matmul %10, %12, %cst_13 {dimension_numbers = #tpu.dot_dimension_numbers<[1], [0], [0], [1], [0, 0, 1, 1], [], []>} : vector<64x8xbf16>, vector<8x128xbf16>, vector<64x128xf32> -> vector<64x128xf32>
    %14 = arith.addf %7, %13 : vector<64x128xf32>
    %c0_14 = arith.constant 0 : index
    %c0_15 = arith.constant 0 : index
    %c1_16 = arith.constant 1 : index
    %c0_17 = arith.constant 0 : index
    %15 = vector.load %arg1[%c0_14, %c0_15, %c1_16, %c0_17] : memref<4x9x9x8xbf16, #tpu.memory_space<vmem>>, vector<1x8x8x8xbf16>
    %16 = vector.shape_cast %15 : vector<1x8x8x8xbf16> to vector<8x8x8xbf16>
    %17 = vector.shape_cast %16 : vector<8x8x8xbf16> to vector<64x8xbf16>
    %c2 = arith.constant 2 : index
    %c0_18 = arith.constant 0 : index
    %c0_19 = arith.constant 0 : index
    %18 = vector.load %arg2[%c2, %c0_18, %c0_19] : memref<9x8x128xbf16, #tpu.memory_space<vmem>>, vector<1x8x128xbf16>
    %19 = vector.shape_cast %18 : vector<1x8x128xbf16> to vector<8x128xbf16>
    %cst_20 = arith.constant dense<0.000000e+00> : vector<64x128xf32>
    %20 = tpu.matmul %17, %19, %cst_20 {dimension_numbers = #tpu.dot_dimension_numbers<[1], [0], [0], [1], [0, 0, 1, 1], [], []>} : vector<64x8xbf16>, vector<8x128xbf16>, vector<64x128xf32> -> vector<64x128xf32>
    %21 = arith.addf %14, %20 : vector<64x128xf32>
    %c2_21 = arith.constant 2 : index
    %c0_22 = arith.constant 0 : index
    %c0_23 = arith.constant 0 : index
    %c0_24 = arith.constant 0 : index
    %22 = vector.load %arg1[%c2_21, %c0_22, %c0_23, %c0_24] : memref<4x9x9x8xbf16, #tpu.memory_space<vmem>>, vector<1x8x8x8xbf16>
    %23 = vector.shape_cast %22 : vector<1x8x8x8xbf16> to vector<8x8x8xbf16>
    %24 = vector.shape_cast %23 : vector<8x8x8xbf16> to vector<64x8xbf16>
    %c3 = arith.constant 3 : index
    %c0_25 = arith.constant 0 : index
    %c0_26 = arith.constant 0 : index
    %25 = vector.load %arg2[%c3, %c0_25, %c0_26] : memref<9x8x128xbf16, #tpu.memory_space<vmem>>, vector<1x8x128xbf16>
    %26 = vector.shape_cast %25 : vector<1x8x128xbf16> to vector<8x128xbf16>
    %cst_27 = arith.constant dense<0.000000e+00> : vector<64x128xf32>
    %27 = tpu.matmul %24, %26, %cst_27 {dimension_numbers = #tpu.dot_dimension_numbers<[1], [0], [0], [1], [0, 0, 1, 1], [], []>} : vector<64x8xbf16>, vector<8x128xbf16>, vector<64x128xf32> -> vector<64x128xf32>
    %28 = arith.addf %21, %27 : vector<64x128xf32>
    %c3_28 = arith.constant 3 : index
    %c0_29 = arith.constant 0 : index
    %c0_30 = arith.constant 0 : index
    %c0_31 = arith.constant 0 : index
    %29 = vector.load %arg1[%c3_28, %c0_29, %c0_30, %c0_31] : memref<4x9x9x8xbf16, #tpu.memory_space<vmem>>, vector<1x8x8x8xbf16>
    %30 = vector.shape_cast %29 : vector<1x8x8x8xbf16> to vector<8x8x8xbf16>
    %31 = vector.shape_cast %30 : vector<8x8x8xbf16> to vector<64x8xbf16>
    %c4 = arith.constant 4 : index
    %c0_32 = arith.constant 0 : index
    %c0_33 = arith.constant 0 : index
    %32 = vector.load %arg2[%c4, %c0_32, %c0_33] : memref<9x8x128xbf16, #tpu.memory_space<vmem>>, vector<1x8x128xbf16>
    %33 = vector.shape_cast %32 : vector<1x8x128xbf16> to vector<8x128xbf16>
    %cst_34 = arith.constant dense<0.000000e+00> : vector<64x128xf32>
    %34 = tpu.matmul %31, %33, %cst_34 {dimension_numbers = #tpu.dot_dimension_numbers<[1], [0], [0], [1], [0, 0, 1, 1], [], []>} : vector<64x8xbf16>, vector<8x128xbf16>, vector<64x128xf32> -> vector<64x128xf32>
    %35 = arith.addf %28, %34 : vector<64x128xf32>
    %c2_35 = arith.constant 2 : index
    %c0_36 = arith.constant 0 : index
    %c1_37 = arith.constant 1 : index
    %c0_38 = arith.constant 0 : index
    %36 = vector.load %arg1[%c2_35, %c0_36, %c1_37, %c0_38] : memref<4x9x9x8xbf16, #tpu.memory_space<vmem>>, vector<1x8x8x8xbf16>
    %37 = vector.shape_cast %36 : vector<1x8x8x8xbf16> to vector<8x8x8xbf16>
    %38 = vector.shape_cast %37 : vector<8x8x8xbf16> to vector<64x8xbf16>
    %c5 = arith.constant 5 : index
    %c0_39 = arith.constant 0 : index
    %c0_40 = arith.constant 0 : index
    %39 = vector.load %arg2[%c5, %c0_39, %c0_40] : memref<9x8x128xbf16, #tpu.memory_space<vmem>>, vector<1x8x128xbf16>
    %40 = vector.shape_cast %39 : vector<1x8x128xbf16> to vector<8x128xbf16>
    %cst_41 = arith.constant dense<0.000000e+00> : vector<64x128xf32>
    %41 = tpu.matmul %38, %40, %cst_41 {dimension_numbers = #tpu.dot_dimension_numbers<[1], [0], [0], [1], [0, 0, 1, 1], [], []>} : vector<64x8xbf16>, vector<8x128xbf16>, vector<64x128xf32> -> vector<64x128xf32>
    %42 = arith.addf %35, %41 : vector<64x128xf32>
    %c0_42 = arith.constant 0 : index
    %c1_43 = arith.constant 1 : index
    %c0_44 = arith.constant 0 : index
    %c0_45 = arith.constant 0 : index
    %43 = vector.load %arg1[%c0_42, %c1_43, %c0_44, %c0_45] : memref<4x9x9x8xbf16, #tpu.memory_space<vmem>>, vector<1x8x8x8xbf16>
    %44 = vector.shape_cast %43 : vector<1x8x8x8xbf16> to vector<8x8x8xbf16>
    %45 = vector.shape_cast %44 : vector<8x8x8xbf16> to vector<64x8xbf16>
    %c6 = arith.constant 6 : index
    %c0_46 = arith.constant 0 : index
    %c0_47 = arith.constant 0 : index
    %46 = vector.load %arg2[%c6, %c0_46, %c0_47] : memref<9x8x128xbf16, #tpu.memory_space<vmem>>, vector<1x8x128xbf16>
    %47 = vector.shape_cast %46 : vector<1x8x128xbf16> to vector<8x128xbf16>
    %cst_48 = arith.constant dense<0.000000e+00> : vector<64x128xf32>
    %48 = tpu.matmul %45, %47, %cst_48 {dimension_numbers = #tpu.dot_dimension_numbers<[1], [0], [0], [1], [0, 0, 1, 1], [], []>} : vector<64x8xbf16>, vector<8x128xbf16>, vector<64x128xf32> -> vector<64x128xf32>
    %49 = arith.addf %42, %48 : vector<64x128xf32>
    %c1_49 = arith.constant 1 : index
    %c1_50 = arith.constant 1 : index
    %c0_51 = arith.constant 0 : index
    %c0_52 = arith.constant 0 : index
    %50 = vector.load %arg1[%c1_49, %c1_50, %c0_51, %c0_52] : memref<4x9x9x8xbf16, #tpu.memory_space<vmem>>, vector<1x8x8x8xbf16>
    %51 = vector.shape_cast %50 : vector<1x8x8x8xbf16> to vector<8x8x8xbf16>
    %52 = vector.shape_cast %51 : vector<8x8x8xbf16> to vector<64x8xbf16>
    %c7 = arith.constant 7 : index
    %c0_53 = arith.constant 0 : index
    %c0_54 = arith.constant 0 : index
    %53 = vector.load %arg2[%c7, %c0_53, %c0_54] : memref<9x8x128xbf16, #tpu.memory_space<vmem>>, vector<1x8x128xbf16>
    %54 = vector.shape_cast %53 : vector<1x8x128xbf16> to vector<8x128xbf16>
    %cst_55 = arith.constant dense<0.000000e+00> : vector<64x128xf32>
    %55 = tpu.matmul %52, %54, %cst_55 {dimension_numbers = #tpu.dot_dimension_numbers<[1], [0], [0], [1], [0, 0, 1, 1], [], []>} : vector<64x8xbf16>, vector<8x128xbf16>, vector<64x128xf32> -> vector<64x128xf32>
    %56 = arith.addf %49, %55 : vector<64x128xf32>
    %c0_56 = arith.constant 0 : index
    %c1_57 = arith.constant 1 : index
    %c1_58 = arith.constant 1 : index
    %c0_59 = arith.constant 0 : index
    %57 = vector.load %arg1[%c0_56, %c1_57, %c1_58, %c0_59] : memref<4x9x9x8xbf16, #tpu.memory_space<vmem>>, vector<1x8x8x8xbf16>
    %58 = vector.shape_cast %57 : vector<1x8x8x8xbf16> to vector<8x8x8xbf16>
    %59 = vector.shape_cast %58 : vector<8x8x8xbf16> to vector<64x8xbf16>
    %c8 = arith.constant 8 : index
    %c0_60 = arith.constant 0 : index
    %c0_61 = arith.constant 0 : index
    %60 = vector.load %arg2[%c8, %c0_60, %c0_61] : memref<9x8x128xbf16, #tpu.memory_space<vmem>>, vector<1x8x128xbf16>
    %61 = vector.shape_cast %60 : vector<1x8x128xbf16> to vector<8x128xbf16>
    %cst_62 = arith.constant dense<0.000000e+00> : vector<64x128xf32>
    %62 = tpu.matmul %59, %61, %cst_62 {dimension_numbers = #tpu.dot_dimension_numbers<[1], [0], [0], [1], [0, 0, 1, 1], [], []>} : vector<64x8xbf16>, vector<8x128xbf16>, vector<64x128xf32> -> vector<64x128xf32>
    %63 = arith.addf %56, %62 : vector<64x128xf32>
    %c0_63 = arith.constant 0 : index
    %c0_64 = arith.constant 0 : index
    %c0_65 = arith.constant 0 : index
    %64 = vector.load %arg3[%c0_63, %c0_64, %c0_65] : memref<1x64x128xf32, #tpu.memory_space<vmem>>, vector<1x64x128xf32>
    %65 = vector.shape_cast %64 : vector<1x64x128xf32> to vector<64x128xf32>
    %66 = vector.shape_cast %63 : vector<64x128xf32> to vector<1x64x128xf32>
    tpu.vector_store %arg3[%c0_63, %c0_64, %c0_65], %66 {strides = array<i32>} : memref<1x64x128xf32, #tpu.memory_space<vmem>>, vector<1x64x128xf32>,
    %cst_66 = arith.constant dense<0.000000e+00> : vector<128xf32>
    %67 = vector.multi_reduction <add>, %63, %cst_66 [0] : vector<64x128xf32> to vector<128xf32>
    %68 = vector.shape_cast %67 : vector<128xf32> to vector<1x128xf32>
    %cst_67 = arith.constant 6.400000e+01 : f32
    %69 = vector.broadcast %cst_67 : f32 to vector<1x128xf32>
    %70 = arith.divf %68, %69 : vector<1x128xf32>
    %71 = vector.broadcast %70 : vector<1x128xf32> to vector<64x128xf32>
    %72 = arith.subf %63, %71 : vector<64x128xf32>
    %73 = arith.mulf %72, %72 : vector<64x128xf32>
    %cst_68 = arith.constant dense<0.000000e+00> : vector<128xf32>
    %74 = vector.multi_reduction <add>, %73, %cst_68 [0] : vector<64x128xf32> to vector<128xf32>
    %75 = vector.shape_cast %74 : vector<128xf32> to vector<1x128xf32>
    %cst_69 = arith.constant 0.000000e+00 : f32
    %76 = vector.broadcast %cst_69 : f32 to vector<6x128xf32>
    %77 = tpu.concatenate %68, %75, %76 in 0 : vector<1x128xf32>, vector<1x128xf32>, vector<6x128xf32> -> vector<8x128xf32>
    %c0_70 = arith.constant 0 : index
    %c0_71 = arith.constant 0 : index
    %c0_72 = arith.constant 0 : index
    %78 = vector.load %arg4[%c0_70, %c0_71, %c0_72] : memref<1x8x128xf32, #tpu.memory_space<vmem>>, vector<1x8x128xf32>
    %79 = vector.shape_cast %78 : vector<1x8x128xf32> to vector<8x128xf32>
    %80 = vector.shape_cast %77 : vector<8x128xf32> to vector<1x8x128xf32>
    tpu.vector_store %arg4[%c0_70, %c0_71, %c0_72], %80 {strides = array<i32>} : memref<1x8x128xf32, #tpu.memory_space<vmem>>, vector<1x8x128xf32>,
    return
  }
  func.func @transform_0(%arg0: i32) -> (i32, i32, i32, i32) {
    %c0_i32 = arith.constant 0 : i32
    %c0_i32_0 = arith.constant 0 : i32
    %c0_i32_1 = arith.constant 0 : i32
    %c0_i32_2 = arith.constant 0 : i32
    return %arg0, %c0_i32, %c0_i32_0, %c0_i32_1 : i32, i32, i32, i32
  }
  func.func @transform_1(%arg0: i32) -> (i32, i32, i32) {
    %c0_i32 = arith.constant 0 : i32
    %c0_i32_0 = arith.constant 0 : i32
    %c0_i32_1 = arith.constant 0 : i32
    %c0_i32_2 = arith.constant 0 : i32
    return %c0_i32, %c0_i32_0, %c0_i32_1 : i32, i32, i32
  }
  func.func @transform_2(%arg0: i32) -> (i32, i32, i32) {
    %c0_i32 = arith.constant 0 : i32
    %c0_i32_0 = arith.constant 0 : i32
    %c0_i32_1 = arith.constant 0 : i32
    return %arg0, %c0_i32, %c0_i32_0 : i32, i32, i32
  }
  func.func @transform_3(%arg0: i32) -> (i32, i32, i32) {
    %c0_i32 = arith.constant 0 : i32
    %c0_i32_0 = arith.constant 0 : i32
    %c0_i32_1 = arith.constant 0 : i32
    return %arg0, %c0_i32, %c0_i32_0 : i32, i32, i32
  }
}

module attributes {stable_mosaic.version = 11 : i64} {
  func.func @_mm_stats_kernel(%arg0: i32, %arg1: memref<128x8xbf16, #tpu.memory_space<vmem>>, %arg2: memref<8x128xbf16, #tpu.memory_space<vmem>>, %arg3: memref<128x128xf32, #tpu.memory_space<vmem>>, %arg4: memref<1x8x128xf32, #tpu.memory_space<vmem>>) attributes {dimension_semantics = [#tpu.dimension_semantics<parallel>], iteration_bounds = array<i64: 1>, scalar_prefetch = 0 : i64, scratch_operands = 0 : i64, tpu.core_type = #tpu.core_type<tc>, window_params = [{transform_indices = @transform_0, window_bounds = array<i64: 128, 8>}, {pipeline_mode = #tpu.pipeline_mode<synchronous>, transform_indices = @transform_1, window_bounds = array<i64: 8, 128>}, {transform_indices = @transform_2, window_bounds = array<i64: 128, 128>}, {transform_indices = @transform_3, window_bounds = array<i64: 1, 8, 128>}]} {
    %c0 = arith.constant 0 : index
    %c0_0 = arith.constant 0 : index
    %0 = vector.load %arg1[%c0, %c0_0] : memref<128x8xbf16, #tpu.memory_space<vmem>>, vector<128x8xbf16>
    %c0_1 = arith.constant 0 : index
    %c0_2 = arith.constant 0 : index
    %1 = vector.load %arg2[%c0_1, %c0_2] : memref<8x128xbf16, #tpu.memory_space<vmem>>, vector<8x128xbf16>
    %cst = arith.constant dense<0.000000e+00> : vector<128x128xf32>
    %2 = tpu.matmul %0, %1, %cst {dimension_numbers = #tpu.dot_dimension_numbers<[1], [0], [0], [1], [0, 0, 1, 1], [], []>} : vector<128x8xbf16>, vector<8x128xbf16>, vector<128x128xf32> -> vector<128x128xf32>
    %c0_3 = arith.constant 0 : index
    %c0_4 = arith.constant 0 : index
    %3 = vector.load %arg3[%c0_3, %c0_4] : memref<128x128xf32, #tpu.memory_space<vmem>>, vector<128x128xf32>
    tpu.vector_store %arg3[%c0_3, %c0_4], %2 {strides = array<i32>} : memref<128x128xf32, #tpu.memory_space<vmem>>, vector<128x128xf32>,
    %c128_i32 = arith.constant 128 : i32
    %4 = arith.muli %arg0, %c128_i32 : i32
    %5 = tpu.iota {dimensions = array<i32: 0>} : vector<128x128xi32>
    %6 = vector.broadcast %4 : i32 to vector<128x128xi32>
    %7 = arith.addi %5, %6 : vector<128x128xi32>
    %c128_i32_5 = arith.constant 128 : i32
    %8 = vector.broadcast %c128_i32_5 : i32 to vector<128x128xi32>
    %9 = arith.cmpi slt, %7, %8 : vector<128x128xi32>
    %c128_i32_6 = arith.constant 128 : i32
    %10 = arith.subi %c128_i32_6, %4 : i32
    %c128_i32_7 = arith.constant 128 : i32
    %11 = arith.minsi %10, %c128_i32_7 : i32
    %c1_i32 = arith.constant 1 : i32
    %12 = arith.maxsi %11, %c1_i32 : i32
    %13 = arith.sitofp %12 : i32 to f32
    %cst_8 = arith.constant 0.000000e+00 : f32
    %14 = vector.broadcast %cst_8 : f32 to vector<128x128xf32>
    %15 = arith.select %9, %2, %14 : vector<128x128xi1>, vector<128x128xf32>
    %cst_9 = arith.constant dense<0.000000e+00> : vector<128xf32>
    %16 = vector.multi_reduction <add>, %15, %cst_9 [0] : vector<128x128xf32> to vector<128xf32>
    %17 = vector.shape_cast %16 : vector<128xf32> to vector<1x128xf32>
    %18 = vector.broadcast %13 : f32 to vector<1x128xf32>
    %19 = arith.divf %17, %18 : vector<1x128xf32>
    %20 = vector.broadcast %19 : vector<1x128xf32> to vector<128x128xf32>
    %21 = arith.subf %2, %20 : vector<128x128xf32>
    %cst_10 = arith.constant 0.000000e+00 : f32
    %22 = vector.broadcast %cst_10 : f32 to vector<128x128xf32>
    %23 = arith.select %9, %21, %22 : vector<128x128xi1>, vector<128x128xf32>
    %24 = arith.mulf %23, %23 : vector<128x128xf32>
    %cst_11 = arith.constant dense<0.000000e+00> : vector<128xf32>
    %25 = vector.multi_reduction <add>, %24, %cst_11 [0] : vector<128x128xf32> to vector<128xf32>
    %26 = vector.shape_cast %25 : vector<128xf32> to vector<1x128xf32>
    %cst_12 = arith.constant 0.000000e+00 : f32
    %27 = vector.broadcast %cst_12 : f32 to vector<6x128xf32>
    %28 = tpu.concatenate %17, %26, %27 in 0 : vector<1x128xf32>, vector<1x128xf32>, vector<6x128xf32> -> vector<8x128xf32>
    %c0_13 = arith.constant 0 : index
    %c0_14 = arith.constant 0 : index
    %c0_15 = arith.constant 0 : index
    %29 = vector.load %arg4[%c0_13, %c0_14, %c0_15] : memref<1x8x128xf32, #tpu.memory_space<vmem>>, vector<1x8x128xf32>
    %30 = vector.shape_cast %29 : vector<1x8x128xf32> to vector<8x128xf32>
    %31 = vector.shape_cast %28 : vector<8x128xf32> to vector<1x8x128xf32>
    tpu.vector_store %arg4[%c0_13, %c0_14, %c0_15], %31 {strides = array<i32>} : memref<1x8x128xf32, #tpu.memory_space<vmem>>, vector<1x8x128xf32>,
    return
  }
  func.func @transform_0(%arg0: i32) -> (i32, i32) {
    %c0_i32 = arith.constant 0 : i32
    %c0_i32_0 = arith.constant 0 : i32
    return %arg0, %c0_i32 : i32, i32
  }
  func.func @transform_1(%arg0: i32) -> (i32, i32) {
    %c0_i32 = arith.constant 0 : i32
    %c0_i32_0 = arith.constant 0 : i32
    %c0_i32_1 = arith.constant 0 : i32
    return %c0_i32, %c0_i32_0 : i32, i32
  }
  func.func @transform_2(%arg0: i32) -> (i32, i32) {
    %c0_i32 = arith.constant 0 : i32
    %c0_i32_0 = arith.constant 0 : i32
    return %arg0, %c0_i32 : i32, i32
  }
  func.func @transform_3(%arg0: i32) -> (i32, i32, i32) {
    %c0_i32 = arith.constant 0 : i32
    %c0_i32_0 = arith.constant 0 : i32
    %c0_i32_1 = arith.constant 0 : i32
    return %arg0, %c0_i32, %c0_i32_0 : i32, i32, i32
  }
}

module attributes {stable_mosaic.version = 11 : i64} {
  func.func @_bn_add_relu_kernel(%arg0: i32, %arg1: memref<128x128xf32, #tpu.memory_space<vmem>>, %arg2: memref<128x128xf32, #tpu.memory_space<vmem>>, %arg3: memref<1x128xf32, #tpu.memory_space<vmem>>, %arg4: memref<1x128xf32, #tpu.memory_space<vmem>>, %arg5: memref<128x128xf32, #tpu.memory_space<vmem>>) attributes {dimension_semantics = [#tpu.dimension_semantics<parallel>], iteration_bounds = array<i64: 1>, scalar_prefetch = 0 : i64, scratch_operands = 0 : i64, tpu.core_type = #tpu.core_type<tc>, window_params = [{transform_indices = @transform_0, window_bounds = array<i64: 128, 128>}, {transform_indices = @transform_1, window_bounds = array<i64: 128, 128>}, {pipeline_mode = #tpu.pipeline_mode<synchronous>, transform_indices = @transform_2, window_bounds = array<i64: 1, 128>}, {pipeline_mode = #tpu.pipeline_mode<synchronous>, transform_indices = @transform_3, window_bounds = array<i64: 1, 128>}, {transform_indices = @transform_4, window_bounds = array<i64: 128, 128>}]} {
    %c0 = arith.constant 0 : index
    %c0_0 = arith.constant 0 : index
    %0 = vector.load %arg1[%c0, %c0_0] : memref<128x128xf32, #tpu.memory_space<vmem>>, vector<128x128xf32>
    %c0_1 = arith.constant 0 : index
    %c0_2 = arith.constant 0 : index
    %1 = vector.load %arg3[%c0_1, %c0_2] : memref<1x128xf32, #tpu.memory_space<vmem>>, vector<1x128xf32>
    %2 = vector.broadcast %1 : vector<1x128xf32> to vector<128x128xf32>
    %3 = arith.mulf %0, %2 : vector<128x128xf32>
    %c0_3 = arith.constant 0 : index
    %c0_4 = arith.constant 0 : index
    %4 = vector.load %arg4[%c0_3, %c0_4] : memref<1x128xf32, #tpu.memory_space<vmem>>, vector<1x128xf32>
    %5 = vector.broadcast %4 : vector<1x128xf32> to vector<128x128xf32>
    %6 = arith.addf %3, %5 : vector<128x128xf32>
    %c0_5 = arith.constant 0 : index
    %c0_6 = arith.constant 0 : index
    %7 = vector.load %arg2[%c0_5, %c0_6] : memref<128x128xf32, #tpu.memory_space<vmem>>, vector<128x128xf32>
    %8 = arith.addf %6, %7 : vector<128x128xf32>
    %cst = arith.constant 0.000000e+00 : f32
    %9 = vector.broadcast %cst : f32 to vector<128x128xf32>
    %10 = arith.maximumf %8, %9 : vector<128x128xf32>
    %c0_7 = arith.constant 0 : index
    %c0_8 = arith.constant 0 : index
    %11 = vector.load %arg5[%c0_7, %c0_8] : memref<128x128xf32, #tpu.memory_space<vmem>>, vector<128x128xf32>
    tpu.vector_store %arg5[%c0_7, %c0_8], %10 {strides = array<i32>} : memref<128x128xf32, #tpu.memory_space<vmem>>, vector<128x128xf32>,
    return
  }
  func.func @transform_0(%arg0: i32) -> (i32, i32) {
    %c0_i32 = arith.constant 0 : i32
    %c0_i32_0 = arith.constant 0 : i32
    return %arg0, %c0_i32 : i32, i32
  }
  func.func @transform_1(%arg0: i32) -> (i32, i32) {
    %c0_i32 = arith.constant 0 : i32
    %c0_i32_0 = arith.constant 0 : i32
    return %arg0, %c0_i32 : i32, i32
  }
  func.func @transform_2(%arg0: i32) -> (i32, i32) {
    %c0_i32 = arith.constant 0 : i32
    %c0_i32_0 = arith.constant 0 : i32
    %c0_i32_1 = arith.constant 0 : i32
    return %c0_i32, %c0_i32_0 : i32, i32
  }
  func.func @transform_3(%arg0: i32) -> (i32, i32) {
    %c0_i32 = arith.constant 0 : i32
    %c0_i32_0 = arith.constant 0 : i32
    %c0_i32_1 = arith.constant 0 : i32
    return %c0_i32, %c0_i32_0 : i32, i32
  }
  func.func @transform_4(%arg0: i32) -> (i32, i32) {
    %c0_i32 = arith.constant 0 : i32
    %c0_i32_0 = arith.constant 0 : i32
    return %arg0, %c0_i32 : i32, i32
  }
}

module attributes {stable_mosaic.version = 11 : i64} {
  func.func @_bn_act_kernel(%arg0: i32, %arg1: memref<128x128xf32, #tpu.memory_space<vmem>>, %arg2: memref<1x128xf32, #tpu.memory_space<vmem>>, %arg3: memref<1x128xf32, #tpu.memory_space<vmem>>, %arg4: memref<128x128xf32, #tpu.memory_space<vmem>>) attributes {dimension_semantics = [#tpu.dimension_semantics<parallel>], iteration_bounds = array<i64: 1>, scalar_prefetch = 0 : i64, scratch_operands = 0 : i64, tpu.core_type = #tpu.core_type<tc>, window_params = [{transform_indices = @transform_0, window_bounds = array<i64: 128, 128>}, {pipeline_mode = #tpu.pipeline_mode<synchronous>, transform_indices = @transform_1, window_bounds = array<i64: 1, 128>}, {pipeline_mode = #tpu.pipeline_mode<synchronous>, transform_indices = @transform_2, window_bounds = array<i64: 1, 128>}, {transform_indices = @transform_3, window_bounds = array<i64: 128, 128>}]} {
    %c0 = arith.constant 0 : index
    %c0_0 = arith.constant 0 : index
    %0 = vector.load %arg1[%c0, %c0_0] : memref<128x128xf32, #tpu.memory_space<vmem>>, vector<128x128xf32>
    %c0_1 = arith.constant 0 : index
    %c0_2 = arith.constant 0 : index
    %1 = vector.load %arg2[%c0_1, %c0_2] : memref<1x128xf32, #tpu.memory_space<vmem>>, vector<1x128xf32>
    %2 = vector.broadcast %1 : vector<1x128xf32> to vector<128x128xf32>
    %3 = arith.mulf %0, %2 : vector<128x128xf32>
    %c0_3 = arith.constant 0 : index
    %c0_4 = arith.constant 0 : index
    %4 = vector.load %arg3[%c0_3, %c0_4] : memref<1x128xf32, #tpu.memory_space<vmem>>, vector<1x128xf32>
    %5 = vector.broadcast %4 : vector<1x128xf32> to vector<128x128xf32>
    %6 = arith.addf %3, %5 : vector<128x128xf32>
    %c0_5 = arith.constant 0 : index
    %c0_6 = arith.constant 0 : index
    %7 = vector.load %arg4[%c0_5, %c0_6] : memref<128x128xf32, #tpu.memory_space<vmem>>, vector<128x128xf32>
    tpu.vector_store %arg4[%c0_5, %c0_6], %6 {strides = array<i32>} : memref<128x128xf32, #tpu.memory_space<vmem>>, vector<128x128xf32>,
    return
  }
  func.func @transform_0(%arg0: i32) -> (i32, i32) {
    %c0_i32 = arith.constant 0 : i32
    %c0_i32_0 = arith.constant 0 : i32
    return %arg0, %c0_i32 : i32, i32
  }
  func.func @transform_1(%arg0: i32) -> (i32, i32) {
    %c0_i32 = arith.constant 0 : i32
    %c0_i32_0 = arith.constant 0 : i32
    %c0_i32_1 = arith.constant 0 : i32
    return %c0_i32, %c0_i32_0 : i32, i32
  }
  func.func @transform_2(%arg0: i32) -> (i32, i32) {
    %c0_i32 = arith.constant 0 : i32
    %c0_i32_0 = arith.constant 0 : i32
    %c0_i32_1 = arith.constant 0 : i32
    return %c0_i32, %c0_i32_0 : i32, i32
  }
  func.func @transform_3(%arg0: i32) -> (i32, i32) {
    %c0_i32 = arith.constant 0 : i32
    %c0_i32_0 = arith.constant 0 : i32
    return %arg0, %c0_i32 : i32, i32
  }
}

</mosaic_0001>

<llo_original>
// kernel: ph_bottleneck_forward.9
$region0: #{ph_bottleneck_forward.9}
  #allocation0 [shape = 'u32[]', space=smem, size = 0x4, offset = 0x4, fixed_abs, tag = 'smem constant byte address 0x4 - core index']
  #allocation1 [shape = 'u32[144,128]{1,0:T(1,128)}', space=vmem, size = 0x12000, scoped, tag = 'internal scratch']
  %s0 = inlined_call_operand.vmem [shape: f32[512,128], index: 0, kind: input, shape index: {}]
  %s1 = inlined_call_operand.vmem [shape: f32[1,128], index: 1, kind: input, shape index: {}]
  %s2 = inlined_call_operand.vmem [shape: f32[1,128], index: 2, kind: input, shape index: {}]
  %s3 = inlined_call_operand.vmem [shape: f32[512,128], index: 3, kind: output, shape index: {}]
  %s4 = sld [smem:[#allocation0]]
  $region45: #{ph_bottleneck_forward.9} parent=0
    _
  %s6 = ssub.s32 1, %s4
  %s7 = scalar_select 0, %s6, %s4
  loop: start=0, step=1, limit=6
  $region2: #{ph_bottleneck_forward.9} parent=0 // loop_pre_header
    _
  $region3: #{ph_bottleneck_forward.9} parent=0 // loop_header
    %s9 = sphi 0, %s13
    %p10 = scmp.ge.s32.totalorder %s9, 6
    %s19 = sphi 0, %s21
    %s22 = sphi 0, %s19
    %s23 = sphi 0, %s22
    %s39 = sphi 0, %s23
    %s43 = sphi 0, %s43
    %s45 = sphi 0, %s43
    %s46 = sphi 0, %s45
    %s60 = sphi 0, %s46
    %s64 = sphi 0, %s64
    %s66 = sphi 0, %s64
    %s67 = sphi 0, %s66
    %s81 = sphi 0, %s67
    %s87 = sphi 0, %s89
    %s90 = sphi 0, %s87
    %s91 = sphi 0, %s90
    %s107 = sphi 0, %s91
  $region4: #{ph_bottleneck_forward.9} parent=0 // loop_header_branch
    %12 = sbr.rel (%p10) target = $region8
  $region5: #{ph_bottleneck_forward.9} parent=0 // loop_body
    %s14 = ssub.s32 %s9, 1
    %s15 = ssub.s32 %s9, 2
    %s16 = sadd.s32 %s9, 1
    %s17 = ssub.s32 %s9, %s16
    %p18 = scmp.eq.s32.totalorder %s17, 0
    %s20 = sadd.s32 %s19, 1
    %s21 = scalar_select %p18, %s19, %s20
    %p24 = pneg %p18
    %p25 = scmp.eq.s32.totalorder %s9, 3
    %p26 = por %p24, %p25
    %p27 = scmp.ne.s32.totalorder %s19, %s22
    %p28 = scmp.eq.s32.totalorder %s9, 0
    %p29 = por %p27, %p28
    %p30 = scmp.ne.s32.totalorder %s19, %s22
    %p31 = scmp.eq.s32.totalorder %s14, 3
    %p32 = por %p30, %p31
    %p33 = scmp.ne.s32.totalorder %s22, %s23
    %p34 = scmp.eq.s32.totalorder %s14, 0
    %p35 = por %p33, %p34
    %p36 = scmp.ne.s32.totalorder %s22, %s23
    %p37 = scmp.eq.s32.totalorder %s15, 3
    %p38 = por %p36, %p37
    %p40 = scmp.ne.s32.totalorder %s23, %s39
    %p41 = scmp.eq.s32.totalorder %s15, 0
    %p42 = por %p40, %p41
    %s44 = sadd.s32 %s43, 1
    %p47 = scmp.eq.s32.totalorder %s9, 3
    %p48 = scmp.ne.s32.totalorder %s43, %s45
    %p49 = scmp.eq.s32.totalorder %s9, 0
    %p50 = por %p48, %p49
    %p51 = scmp.ne.s32.totalorder %s43, %s45
    %p52 = scmp.eq.s32.totalorder %s14, 3
    %p53 = por %p51, %p52
    %p54 = scmp.ne.s32.totalorder %s45, %s46
    %p55 = scmp.eq.s32.totalorder %s14, 0
    %p56 = por %p54, %p55
    %p57 = scmp.ne.s32.totalorder %s45, %s46
    %p58 = scmp.eq.s32.totalorder %s15, 3
    %p59 = por %p57, %p58
    %p61 = scmp.ne.s32.totalorder %s46, %s60
    %p62 = scmp.eq.s32.totalorder %s15, 0
    %p63 = por %p61, %p62
    %s65 = sadd.s32 %s64, 1
    %p68 = scmp.eq.s32.totalorder %s9, 3
    %p69 = scmp.ne.s32.totalorder %s64, %s66
    %p70 = scmp.eq.s32.totalorder %s9, 0
    %p71 = por %p69, %p70
    %p72 = scmp.ne.s32.totalorder %s64, %s66
    %p73 = scmp.eq.s32.totalorder %s14, 3
    %p74 = por %p72, %p73
    %p75 = scmp.ne.s32.totalorder %s66, %s67
    %p76 = scmp.eq.s32.totalorder %s14, 0
    %p77 = por %p75, %p76
    %p78 = scmp.ne.s32.totalorder %s66, %s67
    %p79 = scmp.eq.s32.totalorder %s15, 3
    %p80 = por %p78, %p79
    %p82 = scmp.ne.s32.totalorder %s67, %s81
    %p83 = scmp.eq.s32.totalorder %s15, 0
    %p84 = por %p82, %p83
    %s85 = ssub.s32 %s9, %s16
    %p86 = scmp.eq.s32.totalorder %s85, 0
    %s88 = sadd.s32 %s87, 1
    %s89 = scalar_select %p86, %s87, %s88
    %p92 = pneg %p86
    %p93 = scmp.eq.s32.totalorder %s9, 3
    %p94 = por %p92, %p93
    %p95 = scmp.ne.s32.totalorder %s87, %s90
    %p96 = scmp.eq.s32.totalorder %s9, 0
    %p97 = por %p95, %p96
    %p98 = scmp.ne.s32.totalorder %s87, %s90
    %p99 = scmp.eq.s32.totalorder %s14, 3
    %p100 = por %p98, %p99
    %p101 = scmp.ne.s32.totalorder %s90, %s91
    %p102 = scmp.eq.s32.totalorder %s14, 0
    %p103 = por %p101, %p102
    %p104 = scmp.ne.s32.totalorder %s90, %s91
    %p105 = scmp.eq.s32.totalorder %s15, 3
    %p106 = por %p104, %p105
    %p108 = scmp.ne.s32.totalorder %s91, %s107
    %p109 = scmp.eq.s32.totalorder %s15, 0
    %p110 = por %p108, %p109
    %p111 = scmp.le.s32.totalorder 1, %s9
    %p112 = scmp.lt.s32.totalorder %s9, 5
    %p113 = pnand %p111, %p112
    %p114 = pneg %p113
    // Predicated region
    $region9: #{ph_bottleneck_forward.9} parent=5 // pred_check
      _
    $region10: #{ph_bottleneck_forward.9} parent=5 // pred_check_branch
      %116 = sbr.rel (%p113) target = $region12
    $region11: #{ph_bottleneck_forward.9} parent=5 // pred_region
      %s117 = ssub.s32 %s9, 1
      // Predicated region
      $region13: #{ph_bottleneck_forward.9} parent=11 // pred_check
        %p118 = pneg %p56
      $region14: #{ph_bottleneck_forward.9} parent=11 // pred_check_branch
        %120 = sbr.rel (%p118) target = $region16
      $region15: #{ph_bottleneck_forward.9} parent=11 // pred_region
        _
      $region16: #{ph_bottleneck_forward.9} parent=11 // pred_fallthru
        _
      // Predicated region
      $region17: #{ph_bottleneck_forward.9} parent=11 // pred_check
        %p121 = pneg %p77
      $region18: #{ph_bottleneck_forward.9} parent=11 // pred_check_branch
        %123 = sbr.rel (%p121) target = $region20
      $region19: #{ph_bottleneck_forward.9} parent=11 // pred_region
        _
      $region20: #{ph_bottleneck_forward.9} parent=11 // pred_fallthru
        _
    $region12: #{ph_bottleneck_forward.9} parent=5 // pred_fallthru
      _
    %p124 = scmp.lt.s32.totalorder %s9, 4
    // Predicated region
    $region21: #{ph_bottleneck_forward.9} parent=5 // pred_check
      %p125 = pneg %p124
    $region22: #{ph_bottleneck_forward.9} parent=5 // pred_check_branch
      %127 = sbr.rel (%p125) target = $region24
    $region23: #{ph_bottleneck_forward.9} parent=5 // pred_region
      // Predicated region
      $region25: #{ph_bottleneck_forward.9} parent=23 // pred_check
        %p128 = pneg %p29
      $region26: #{ph_bottleneck_forward.9} parent=23 // pred_check_branch
        %130 = sbr.rel (%p128) target = $region28
      $region27: #{ph_bottleneck_forward.9} parent=23 // pred_region
        %s131 = smul.u32 16, %s9
        %p132 = scmp.lt.s32.totalorder %s131, 63
        %s133 = scalar_select %p132, %s131, 63
        %s134 = smul.addr %s133, 8
        %s135 = scalar_lea.vmem %s0, %s134
        %s136 = smul.u32 16, %s9
      $region28: #{ph_bottleneck_forward.9} parent=23 // pred_fallthru
        _
    $region24: #{ph_bottleneck_forward.9} parent=5 // pred_fallthru
      _
    %p137 = scmp.le.s32.totalorder 1, %s9
    %p138 = scmp.lt.s32.totalorder %s9, 5
    %p139 = pnand %p137, %p138
    %p140 = pneg %p139
    // Predicated region
    $region29: #{ph_bottleneck_forward.9} parent=5 // pred_check
      _
    $region30: #{ph_bottleneck_forward.9} parent=5 // pred_check_branch
      %142 = sbr.rel (%p139) target = $region32
    $region31: #{ph_bottleneck_forward.9} parent=5 // pred_region
      %s143 = ssub.s32 %s9, 1
      %s144 = smul.u32 16, %s14
      %p145 = scmp.lt.s32.totalorder %s144, 63
      %s146 = scalar_select %p145, %s144, 63
      %s147 = smul.addr %s146, 8
      %s148 = scalar_lea.vmem %s0, %s147
      %p149 = pneg %p35
      %p150 = pneg %p32
      %p151 = pneg %p56
      %p152 = pneg %p53
      %p153 = pneg %p77
      %p154 = pneg %p74
      %p155 = pneg %p103
      %p156 = pneg %p100
      %s157 = smul.u32 16, %s14
      %p158 = scmp.lt.s32.totalorder %s157, 63
      %s159 = scalar_select %p158, %s157, 63
      %s160 = smul.addr %s159, 8
      %s161 = scalar_lea.vmem %s3, %s160
      %s162 = smul.u32 16, %s14
      %p163 = scmp.lt.s32.totalorder %s162, 63
      %s164 = scalar_select %p163, %s162, 63
      %s165 = smul.addr %s164, 8
      %s166 = scalar_lea.vmem %s0, %s165
      %s167 = smul.u32 16, %s14
      %s168 = smul.u32 16, %s14
      %p169 = scmp.lt.s32.totalorder %s168, 63
      %s170 = scalar_select %p169, %s168, 63
      %s171 = smul.addr %s170, 8
      %s172 = scalar_lea.vmem %s3, %s171
      %s173 = smul.u32 16, %s14
      %v174 = vld [vmem:[%s166] sm:$0xff]
      %v175 = vld [vmem:[%s166 + $0x8] sm:$0xff]
      %v176 = vld [vmem:[%s166 + $0x10] sm:$0xff]
      %v177 = vld [vmem:[%s166 + $0x18] sm:$0xff]
      %v178 = vld [vmem:[%s166 + $0x20] sm:$0xff]
      %v179 = vld [vmem:[%s166 + $0x28] sm:$0xff]
      %v180 = vld [vmem:[%s166 + $0x30] sm:$0xff]
      %v181 = vld [vmem:[%s166 + $0x38] sm:$0xff]
      %v182 = vld [vmem:[%s166 + $0x40] sm:$0xff]
      %v183 = vld [vmem:[%s166 + $0x48] sm:$0xff]
      %v184 = vld [vmem:[%s166 + $0x50] sm:$0xff]
      %v185 = vld [vmem:[%s166 + $0x58] sm:$0xff]
      %v186 = vld [vmem:[%s166 + $0x60] sm:$0xff]
      %v187 = vld [vmem:[%s166 + $0x68] sm:$0xff]
      %v188 = vld [vmem:[%s166 + $0x70] sm:$0xff]
      %v189 = vld [vmem:[%s166 + $0x78] sm:$0xff]
      %v190 = vld [vmem:[%s1] sm:$0x1]
      %v192 = vlaneseq
      %v193 = vshrl.u32 %v192, 7
      %v194 = vsub.s32 0, %v193
      %v195 = vrot.slane %v190, %v194
      %v197 = vmul.f32 %v174, %v195
      %v198 = vmul.f32 %v175, %v195
      %v199 = vmul.f32 %v176, %v195
      %v200 = vmul.f32 %v177, %v195
      %v201 = vmul.f32 %v178, %v195
      %v202 = vmul.f32 %v179, %v195
      %v203 = vmul.f32 %v180, %v195
      %v204 = vmul.f32 %v181, %v195
      %v205 = vmul.f32 %v182, %v195
      %v206 = vmul.f32 %v183, %v195
      %v207 = vmul.f32 %v184, %v195
      %v208 = vmul.f32 %v185, %v195
      %v209 = vmul.f32 %v186, %v195
      %v210 = vmul.f32 %v187, %v195
      %v211 = vmul.f32 %v188, %v195
      %v212 = vmul.f32 %v189, %v195
      %v213 = vld [vmem:[%s2] sm:$0x1]
      %v215 = vlaneseq
      %v216 = vshrl.u32 %v215, 7
      %v217 = vsub.s32 0, %v216
      %v218 = vrot.slane %v213, %v217
      %v220 = vadd.f32 %v197, %v218
      %v221 = vadd.f32 %v198, %v218
      %v222 = vadd.f32 %v199, %v218
      %v223 = vadd.f32 %v200, %v218
      %v224 = vadd.f32 %v201, %v218
      %v225 = vadd.f32 %v202, %v218
      %v226 = vadd.f32 %v203, %v218
      %v227 = vadd.f32 %v204, %v218
      %v228 = vadd.f32 %v205, %v218
      %v229 = vadd.f32 %v206, %v218
      %v230 = vadd.f32 %v207, %v218
      %v231 = vadd.f32 %v208, %v218
      %v232 = vadd.f32 %v209, %v218
      %v233 = vadd.f32 %v210, %v218
      %v234 = vadd.f32 %v211, %v218
      %v235 = vadd.f32 %v212, %v218
      %v236 = vmax.f32 %v220, 0.0
      %v237 = vmax.f32 %v221, 0.0
      %v238 = vmax.f32 %v222, 0.0
      %v239 = vmax.f32 %v223, 0.0
      %v240 = vmax.f32 %v224, 0.0
      %v241 = vmax.f32 %v225, 0.0
      %v242 = vmax.f32 %v226, 0.0
      %v243 = vmax.f32 %v227, 0.0
      %v244 = vmax.f32 %v228, 0.0
      %v245 = vmax.f32 %v229, 0.0
      %v246 = vmax.f32 %v230, 0.0
      %v247 = vmax.f32 %v231, 0.0
      %v248 = vmax.f32 %v232, 0.0
      %v249 = vmax.f32 %v233, 0.0
      %v250 = vmax.f32 %v234, 0.0
      %v251 = vmax.f32 %v235, 0.0
      %252 = vst [vmem:[%s172] sm:$0xff] %v236
      %253 = vst [vmem:[%s172 + $0x8] sm:$0xff] %v237
      %254 = vst [vmem:[%s172 + $0x10] sm:$0xff] %v238
      %255 = vst [vmem:[%s172 + $0x18] sm:$0xff] %v239
      %256 = vst [vmem:[%s172 + $0x20] sm:$0xff] %v240
      %257 = vst [vmem:[%s172 + $0x28] sm:$0xff] %v241
      %258 = vst [vmem:[%s172 + $0x30] sm:$0xff] %v242
      %259 = vst [vmem:[%s172 + $0x38] sm:$0xff] %v243
      %260 = vst [vmem:[%s172 + $0x40] sm:$0xff] %v244
      %261 = vst [vmem:[%s172 + $0x48] sm:$0xff] %v245
      %262 = vst [vmem:[%s172 + $0x50] sm:$0xff] %v246
      %263 = vst [vmem:[%s172 + $0x58] sm:$0xff] %v247
      %264 = vst [vmem:[%s172 + $0x60] sm:$0xff] %v248
      %265 = vst [vmem:[%s172 + $0x68] sm:$0xff] %v249
      %266 = vst [vmem:[%s172 + $0x70] sm:$0xff] %v250
      %267 = vst [vmem:[%s172 + $0x78] sm:$0xff] %v251
      %s268 = smul.u32 16, %s14
      %p269 = scmp.lt.s32.totalorder %s268, 63
      %s270 = scalar_select %p269, %s268, 63
      %s271 = smul.addr %s270, 8
      %s272 = scalar_lea.vmem %s3, %s271
      // Predicated region
      $region33: #{ph_bottleneck_forward.9} parent=31 // pred_check
        %p273 = pneg %p100
      $region34: #{ph_bottleneck_forward.9} parent=31 // pred_check_branch
        %275 = sbr.rel (%p273) target = $region36
      $region35: #{ph_bottleneck_forward.9} parent=31 // pred_region
        %s276 = smul.u32 16, %s14
      $region36: #{ph_bottleneck_forward.9} parent=31 // pred_fallthru
        _
    $region32: #{ph_bottleneck_forward.9} parent=5 // pred_fallthru
      _
    %p277 = scmp.le.s32.totalorder 2, %s9
    // Predicated region
    $region37: #{ph_bottleneck_forward.9} parent=5 // pred_check
      %p278 = pneg %p277
    $region38: #{ph_bottleneck_forward.9} parent=5 // pred_check_branch
      %280 = sbr.rel (%p278) target = $region40
    $region39: #{ph_bottleneck_forward.9} parent=5 // pred_region
      %s281 = ssub.s32 %s9, 2
      // Predicated region
      $region41: #{ph_bottleneck_forward.9} parent=39 // pred_check
        %p282 = pneg %p106
      $region42: #{ph_bottleneck_forward.9} parent=39 // pred_check_branch
        %284 = sbr.rel (%p282) target = $region44
      $region43: #{ph_bottleneck_forward.9} parent=39 // pred_region
        %s285 = smul.u32 16, %s15
        %p286 = scmp.lt.s32.totalorder %s285, 63
        %s287 = scalar_select %p286, %s285, 63
        %s288 = smul.addr %s287, 8
        %s289 = scalar_lea.vmem %s3, %s288
      $region44: #{ph_bottleneck_forward.9} parent=39 // pred_fallthru
        _
    $region40: #{ph_bottleneck_forward.9} parent=5 // pred_fallthru
      _
  $region6: #{ph_bottleneck_forward.9} parent=0 // loop_footer
    %s13 = sadd.s32 1, %s9
  $region7: #{ph_bottleneck_forward.9} parent=0 // loop_footer_branch
    %8 = sbr.rel target = $region3
  $region8: #{ph_bottleneck_forward.9} parent=0 // loop_exit
    _

// kernel: ph_bottleneck_forward.8
$region0: #{ph_bottleneck_forward.8}
  #allocation0 [shape = 'u32[]', space=smem, size = 0x4, offset = 0x4, fixed_abs, tag = 'smem constant byte address 0x4 - core index']
  #allocation1 [shape = 'u32[144,128]{1,0:T(1,128)}', space=vmem, size = 0x12000, scoped, tag = 'internal scratch']
  %s0 = inlined_call_operand.vmem [shape: bf16[512,8], index: 0, kind: input, shape index: {}]
  %s1 = inlined_call_operand.vmem [shape: bf16[8,128], index: 1, kind: input, shape index: {}]
  %s2 = inlined_call_operand.vmem [shape: f32[512,128], index: 2, kind: output, shape index: {0}]
  %s3 = inlined_call_operand.vmem [shape: f32[4,8,128], index: 3, kind: output, shape index: {1}]
  %4 = xla_tuple %s2, %s3
  %s5 = sld [smem:[#allocation0]]
  $region49: #{ph_bottleneck_forward.8} parent=0
    _
  %s7 = ssub.s32 1, %s5
  %s8 = scalar_select 0, %s7, %s5
  loop: start=0, step=1, limit=6
  $region2: #{ph_bottleneck_forward.8} parent=0 // loop_pre_header
    _
  $region3: #{ph_bottleneck_forward.8} parent=0 // loop_header
    %s10 = sphi 0, %s14
    %p11 = scmp.ge.s32.totalorder %s10, 6
    %s20 = sphi 0, %s22
    %s23 = sphi 0, %s20
    %s24 = sphi 0, %s23
    %s40 = sphi 0, %s24
    %s44 = sphi 0, %s44
    %s46 = sphi 0, %s44
    %s47 = sphi 0, %s46
    %s61 = sphi 0, %s47
    %s67 = sphi 0, %s69
    %s70 = sphi 0, %s67
    %s71 = sphi 0, %s70
    %s87 = sphi 0, %s71
    %s93 = sphi 0, %s95
    %s96 = sphi 0, %s93
    %s97 = sphi 0, %s96
    %s113 = sphi 0, %s97
  $region4: #{ph_bottleneck_forward.8} parent=0 // loop_header_branch
    %13 = sbr.rel (%p11) target = $region8
  $region5: #{ph_bottleneck_forward.8} parent=0 // loop_body
    %s15 = ssub.s32 %s10, 1
    %s16 = ssub.s32 %s10, 2
    %s17 = sadd.s32 %s10, 1
    %s18 = ssub.s32 %s10, %s17
    %p19 = scmp.eq.s32.totalorder %s18, 0
    %s21 = sadd.s32 %s20, 1
    %s22 = scalar_select %p19, %s20, %s21
    %p25 = pneg %p19
    %p26 = scmp.eq.s32.totalorder %s10, 3
    %p27 = por %p25, %p26
    %p28 = scmp.ne.s32.totalorder %s20, %s23
    %p29 = scmp.eq.s32.totalorder %s10, 0
    %p30 = por %p28, %p29
    %p31 = scmp.ne.s32.totalorder %s20, %s23
    %p32 = scmp.eq.s32.totalorder %s15, 3
    %p33 = por %p31, %p32
    %p34 = scmp.ne.s32.totalorder %s23, %s24
    %p35 = scmp.eq.s32.totalorder %s15, 0
    %p36 = por %p34, %p35
    %p37 = scmp.ne.s32.totalorder %s23, %s24
    %p38 = scmp.eq.s32.totalorder %s16, 3
    %p39 = por %p37, %p38
    %p41 = scmp.ne.s32.totalorder %s24, %s40
    %p42 = scmp.eq.s32.totalorder %s16, 0
    %p43 = por %p41, %p42
    %s45 = sadd.s32 %s44, 1
    %p48 = scmp.eq.s32.totalorder %s10, 3
    %p49 = scmp.ne.s32.totalorder %s44, %s46
    %p50 = scmp.eq.s32.totalorder %s10, 0
    %p51 = por %p49, %p50
    %p52 = scmp.ne.s32.totalorder %s44, %s46
    %p53 = scmp.eq.s32.totalorder %s15, 3
    %p54 = por %p52, %p53
    %p55 = scmp.ne.s32.totalorder %s46, %s47
    %p56 = scmp.eq.s32.totalorder %s15, 0
    %p57 = por %p55, %p56
    %p58 = scmp.ne.s32.totalorder %s46, %s47
    %p59 = scmp.eq.s32.totalorder %s16, 3
    %p60 = por %p58, %p59
    %p62 = scmp.ne.s32.totalorder %s47, %s61
    %p63 = scmp.eq.s32.totalorder %s16, 0
    %p64 = por %p62, %p63
    %s65 = ssub.s32 %s10, %s17
    %p66 = scmp.eq.s32.totalorder %s65, 0
    %s68 = sadd.s32 %s67, 1
    %s69 = scalar_select %p66, %s67, %s68
    %p72 = pneg %p66
    %p73 = scmp.eq.s32.totalorder %s10, 3
    %p74 = por %p72, %p73
    %p75 = scmp.ne.s32.totalorder %s67, %s70
    %p76 = scmp.eq.s32.totalorder %s10, 0
    %p77 = por %p75, %p76
    %p78 = scmp.ne.s32.totalorder %s67, %s70
    %p79 = scmp.eq.s32.totalorder %s15, 3
    %p80 = por %p78, %p79
    %p81 = scmp.ne.s32.totalorder %s70, %s71
    %p82 = scmp.eq.s32.totalorder %s15, 0
    %p83 = por %p81, %p82
    %p84 = scmp.ne.s32.totalorder %s70, %s71
    %p85 = scmp.eq.s32.totalorder %s16, 3
    %p86 = por %p84, %p85
    %p88 = scmp.ne.s32.totalorder %s71, %s87
    %p89 = scmp.eq.s32.totalorder %s16, 0
    %p90 = por %p88, %p89
    %s91 = ssub.s32 %s10, %s17
    %p92 = scmp.eq.s32.totalorder %s91, 0
    %s94 = sadd.s32 %s93, 1
    %s95 = scalar_select %p92, %s93, %s94
    %p98 = pneg %p92
    %p99 = scmp.eq.s32.totalorder %s10, 3
    %p100 = por %p98, %p99
    %p101 = scmp.ne.s32.totalorder %s93, %s96
    %p102 = scmp.eq.s32.totalorder %s10, 0
    %p103 = por %p101, %p102
    %p104 = scmp.ne.s32.totalorder %s93, %s96
    %p105 = scmp.eq.s32.totalorder %s15, 3
    %p106 = por %p104, %p105
    %p107 = scmp.ne.s32.totalorder %s96, %s97
    %p108 = scmp.eq.s32.totalorder %s15, 0
    %p109 = por %p107, %p108
    %p110 = scmp.ne.s32.totalorder %s96, %s97
    %p111 = scmp.eq.s32.totalorder %s16, 3
    %p112 = por %p110, %p111
    %p114 = scmp.ne.s32.totalorder %s97, %s113
    %p115 = scmp.eq.s32.totalorder %s16, 0
    %p116 = por %p114, %p115
    %p117 = scmp.le.s32.totalorder 1, %s10
    %p118 = scmp.lt.s32.totalorder %s10, 5
    %p119 = pnand %p117, %p118
    %p120 = pneg %p119
    // Predicated region
    $region9: #{ph_bottleneck_forward.8} parent=5 // pred_check
      _
    $region10: #{ph_bottleneck_forward.8} parent=5 // pred_check_branch
      %122 = sbr.rel (%p119) target = $region12
    $region11: #{ph_bottleneck_forward.8} parent=5 // pred_region
      %s123 = ssub.s32 %s10, 1
      // Predicated region
      $region13: #{ph_bottleneck_forward.8} parent=11 // pred_check
        %p124 = pneg %p57
      $region14: #{ph_bottleneck_forward.8} parent=11 // pred_check_branch
        %126 = sbr.rel (%p124) target = $region16
      $region15: #{ph_bottleneck_forward.8} parent=11 // pred_region
        _
      $region16: #{ph_bottleneck_forward.8} parent=11 // pred_fallthru
        _
    $region12: #{ph_bottleneck_forward.8} parent=5 // pred_fallthru
      _
    %p127 = scmp.lt.s32.totalorder %s10, 4
    // Predicated region
    $region17: #{ph_bottleneck_forward.8} parent=5 // pred_check
      %p128 = pneg %p127
    $region18: #{ph_bottleneck_forward.8} parent=5 // pred_check_branch
      %130 = sbr.rel (%p128) target = $region20
    $region19: #{ph_bottleneck_forward.8} parent=5 // pred_region
      // Predicated region
      $region21: #{ph_bottleneck_forward.8} parent=19 // pred_check
        %p131 = pneg %p30
      $region22: #{ph_bottleneck_forward.8} parent=19 // pred_check_branch
        %133 = sbr.rel (%p131) target = $region24
      $region23: #{ph_bottleneck_forward.8} parent=19 // pred_region
        %s134 = smul.u32 16, %s10
        %p135 = scmp.lt.s32.totalorder %s134, 63
        %s136 = scalar_select %p135, %s134, 63
        %s137 = smul.addr %s136, 4
        %s138 = scalar_lea.vmem %s0, %s137
        %s139 = smul.u32 16, %s10
      $region24: #{ph_bottleneck_forward.8} parent=19 // pred_fallthru
        _
    $region20: #{ph_bottleneck_forward.8} parent=5 // pred_fallthru
      _
    %p140 = scmp.le.s32.totalorder 1, %s10
    %p141 = scmp.lt.s32.totalorder %s10, 5
    %p142 = pnand %p140, %p141
    %p143 = pneg %p142
    // Predicated region
    $region25: #{ph_bottleneck_forward.8} parent=5 // pred_check
      _
    $region26: #{ph_bottleneck_forward.8} parent=5 // pred_check_branch
      %145 = sbr.rel (%p142) target = $region28
    $region27: #{ph_bottleneck_forward.8} parent=5 // pred_region
      %s146 = ssub.s32 %s10, 1
      %s147 = smul.u32 16, %s15
      %p148 = scmp.lt.s32.totalorder %s147, 63
      %s149 = scalar_select %p148, %s147, 63
      %s150 = smul.addr %s149, 4
      %s151 = scalar_lea.vmem %s0, %s150
      %p152 = pneg %p36
      %p153 = pneg %p33
      %p154 = pneg %p57
      %p155 = pneg %p54
      %p156 = pneg %p83
      %p157 = pneg %p80
      %s158 = smul.u32 16, %s15
      %p159 = scmp.lt.s32.totalorder %s158, 63
      %s160 = scalar_select %p159, %s158, 63
      %s161 = smul.addr %s160, 8
      %s162 = scalar_lea.vmem %s2, %s161
      %p163 = pneg %p109
      %p164 = pneg %p106
      %p165 = scmp.lt.s32.totalorder %s15, 3
      %s166 = scalar_select %p165, %s15, 3
      %s167 = smul.addr %s166, 8
      %s168 = scalar_lea.vmem %s3, %s167
      %s169 = smul.u32 16, %s15
      %p170 = scmp.lt.s32.totalorder %s169, 63
      %s171 = scalar_select %p170, %s169, 63
      %s172 = smul.addr %s171, 4
      %s173 = scalar_lea.vmem %s0, %s172
      %s174 = smul.u32 16, %s15
      %s175 = smul.u32 16, %s15
      %p176 = scmp.lt.s32.totalorder %s175, 63
      %s177 = scalar_select %p176, %s175, 63
      %s178 = smul.addr %s177, 8
      %s179 = scalar_lea.vmem %s2, %s178
      %s180 = smul.u32 16, %s15
      %p181 = scmp.lt.s32.totalorder %s15, 3
      %s182 = scalar_select %p181, %s15, 3
      %s183 = smul.addr %s182, 8
      %s184 = scalar_lea.vmem %s3, %s183
      %v186 = vld [vmem:[%s173] sm:$0xf]
      %v187 = vld [vmem:[%s173 + $0x4] sm:$0xf]
      %v188 = vld [vmem:[%s173 + $0x8] sm:$0xf]
      %v189 = vld [vmem:[%s173 + $0xc] sm:$0xf]
      %v190 = vld [vmem:[%s173 + $0x10] sm:$0xf]
      %v191 = vld [vmem:[%s173 + $0x14] sm:$0xf]
      %v192 = vld [vmem:[%s173 + $0x18] sm:$0xf]
      %v193 = vld [vmem:[%s173 + $0x1c] sm:$0xf]
      %v194 = vld [vmem:[%s173 + $0x20] sm:$0xf]
      %v195 = vld [vmem:[%s173 + $0x24] sm:$0xf]
      %v196 = vld [vmem:[%s173 + $0x28] sm:$0xf]
      %v197 = vld [vmem:[%s173 + $0x2c] sm:$0xf]
      %v198 = vld [vmem:[%s173 + $0x30] sm:$0xf]
      %v199 = vld [vmem:[%s173 + $0x34] sm:$0xf]
      %v200 = vld [vmem:[%s173 + $0x38] sm:$0xf]
      %v201 = vld [vmem:[%s173 + $0x3c] sm:$0xf]
      %v202 = vld [vmem:[%s1] sm:$0xf]
      %v219 = vunpack.c.l.b16 %v186
      %v220 = vunpack.c.l.b16 %v187
      %v221 = vunpack.c.l.b16 %v188
      %v222 = vunpack.c.l.b16 %v189
      %v223 = vunpack.c.l.b16 %v190
      %v224 = vunpack.c.l.b16 %v191
      %v225 = vunpack.c.l.b16 %v192
      %v226 = vunpack.c.l.b16 %v193
      %v227 = vunpack.c.l.b16 %v194
      %v228 = vunpack.c.l.b16 %v195
      %v229 = vunpack.c.l.b16 %v196
      %v230 = vunpack.c.l.b16 %v197
      %v231 = vunpack.c.l.b16 %v198
      %v232 = vunpack.c.l.b16 %v199
      %v233 = vunpack.c.l.b16 %v200
      %v234 = vunpack.c.l.b16 %v201
      %v235 = vpack.c.b16 %v220, %v219
      %v236 = vpack.c.b16 %v222, %v221
      %v237 = vpack.c.b16 %v224, %v223
      %v238 = vpack.c.b16 %v226, %v225
      %v239 = vpack.c.b16 %v228, %v227
      %v240 = vpack.c.b16 %v230, %v229
      %v241 = vpack.c.b16 %v232, %v231
      %v242 = vpack.c.b16 %v234, %v233
      %vm243 = vcmask 64512
      %v245 = vsel %vm243, %v235, 0
      %v248 = vsel %vm243, %v236, 0
      %v251 = vsel %vm243, %v237, 0
      %v254 = vsel %vm243, %v238, 0
      %v257 = vsel %vm243, %v239, 0
      %v260 = vsel %vm243, %v240, 0
      %v263 = vsel %vm243, %v241, 0
      %v266 = vsel %vm243, %v242, 0
      %vm268 = vcmask 1043456
      %v270 = vsel %vm268, %v202, 0
      %272 = vmatprep.subr.bf16.mxu0 0
      %273 = vmatpush1.bf16.msra.mxu0 0
      %274 = vmatprep.subr.bf16.mxu0 0
      %275 = vmatpush1.bf16.msra.mxu0 0
      %276 = vmatprep.subr.bf16.mxu0 0
      %277 = vmatpush1.bf16.msra.mxu0 0
      %278 = vmatprep.subr.bf16.mxu0 0
      %279 = vmatpush1.bf16.msra.mxu0 0
      %280 = vmatprep.subr.bf16.mxu0 0
      %281 = vmatpush1.bf16.msra.mxu0 0
      %282 = vmatprep.subr.bf16.mxu0 0
      %283 = vmatpush1.bf16.msra.mxu0 0
      %284 = vmatprep.subr.bf16.mxu0 0
      %285 = vmatpush1.bf16.msra.mxu0 0
      %286 = vmatprep.subr.bf16.mxu0 0
      %287 = vmatpush1.bf16.msra.mxu0 %v270
      %288 = vmatprep.subr.bf16.mxu0 0
      %289 = vmatpush2.bf16.msra.mxu0 0
      %290 = vmatprep.subr.bf16.mxu0 0
      %291 = vmatpush2.bf16.msra.mxu0 0
      %292 = vmatprep.subr.bf16.mxu0 0
      %293 = vmatpush2.bf16.msra.mxu0 0
      %294 = vmatprep.subr.bf16.mxu0 0
      %295 = vmatpush2.bf16.msra.mxu0 0
      %296 = vmatprep.subr.bf16.mxu0 0
      %297 = vmatpush2.bf16.msra.mxu0 0
      %298 = vmatprep.subr.bf16.mxu0 0
      %299 = vmatpush2.bf16.msra.mxu0 0
      %300 = vmatprep.subr.bf16.mxu0 0
      %301 = vmatpush2.bf16.msra.mxu0 0
      %302 = vmatprep.subr.bf16.mxu0 0
      %303 = vmatpush2.bf16.msra.mxu0 0
      %304 = vmatprep.mubr.bf16.mxu0 0
      %305 = vmatmul.mubr.bf16.gmra.mxu0 %v245
      %v306 = vpop.f32.mrf.mxu0
      %v307 = vadd.f32 0.0, %v306
      %v308 = vpop.f32.mrf.mxu0
      %v309 = vpop.f32.mrf.mxu0
      %v310 = vadd.f32 0.0, %v309
      %v311 = vpop.f32.mrf.mxu0
      %312 = vmatprep.mubr.bf16.mxu0 0
      %313 = vmatmul.mubr.bf16.gmra.mxu0 %v248
      %v314 = vpop.f32.mrf.mxu0
      %v315 = vadd.f32 0.0, %v314
      %v316 = vpop.f32.mrf.mxu0
      %v317 = vpop.f32.mrf.mxu0
      %v318 = vadd.f32 0.0, %v317
      %v319 = vpop.f32.mrf.mxu0
      %320 = vmatprep.mubr.bf16.mxu0 0
      %321 = vmatmul.mubr.bf16.gmra.mxu0 %v251
      %v322 = vpop.f32.mrf.mxu0
      %v323 = vadd.f32 0.0, %v322
      %v324 = vpop.f32.mrf.mxu0
      %v325 = vpop.f32.mrf.mxu0
      %v326 = vadd.f32 0.0, %v325
      %v327 = vpop.f32.mrf.mxu0
      %328 = vmatprep.mubr.bf16.mxu0 0
      %329 = vmatmul.mubr.bf16.gmra.mxu0 %v254
      %v330 = vpop.f32.mrf.mxu0
      %v331 = vadd.f32 0.0, %v330
      %v332 = vpop.f32.mrf.mxu0
      %v333 = vpop.f32.mrf.mxu0
      %v334 = vadd.f32 0.0, %v333
      %v335 = vpop.f32.mrf.mxu0
      %336 = vmatprep.mubr.bf16.mxu0 0
      %337 = vmatmul.mubr.bf16.gmra.mxu0 %v257
      %v338 = vpop.f32.mrf.mxu0
      %v339 = vadd.f32 0.0, %v338
      %v340 = vpop.f32.mrf.mxu0
      %v341 = vpop.f32.mrf.mxu0
      %v342 = vadd.f32 0.0, %v341
      %v343 = vpop.f32.mrf.mxu0
      %344 = vmatprep.mubr.bf16.mxu0 0
      %345 = vmatmul.mubr.bf16.gmra.mxu0 %v260
      %v346 = vpop.f32.mrf.mxu0
      %v347 = vadd.f32 0.0, %v346
      %v348 = vpop.f32.mrf.mxu0
      %v349 = vpop.f32.mrf.mxu0
      %v350 = vadd.f32 0.0, %v349
      %v351 = vpop.f32.mrf.mxu0
      %352 = vmatprep.mubr.bf16.mxu0 0
      %353 = vmatmul.mubr.bf16.gmra.mxu0 %v263
      %v354 = vpop.f32.mrf.mxu0
      %v355 = vadd.f32 0.0, %v354
      %v356 = vpop.f32.mrf.mxu0
      %v357 = vpop.f32.mrf.mxu0
      %v358 = vadd.f32 0.0, %v357
      %v359 = vpop.f32.mrf.mxu0
      %360 = vmatprep.mubr.bf16.mxu0 0
      %361 = vmatmul.mubr.bf16.gmra.mxu0 %v266
      %v362 = vpop.f32.mrf.mxu0
      %v363 = vadd.f32 0.0, %v362
      %v364 = vpop.f32.mrf.mxu0
      %v365 = vpop.f32.mrf.mxu0
      %v366 = vadd.f32 0.0, %v365
      %v367 = vpop.f32.mrf.mxu0
      %368 = vdwg.mxu0
      %369 = vst [vmem:[%s179] sm:$0xff] %v307
      %370 = vst [vmem:[%s179 + $0x8] sm:$0xff] %v310
      %371 = vst [vmem:[%s179 + $0x10] sm:$0xff] %v315
      %372 = vst [vmem:[%s179 + $0x18] sm:$0xff] %v318
      %373 = vst [vmem:[%s179 + $0x20] sm:$0xff] %v323
      %374 = vst [vmem:[%s179 + $0x28] sm:$0xff] %v326
      %375 = vst [vmem:[%s179 + $0x30] sm:$0xff] %v331
      %376 = vst [vmem:[%s179 + $0x38] sm:$0xff] %v334
      %377 = vst [vmem:[%s179 + $0x40] sm:$0xff] %v339
      %378 = vst [vmem:[%s179 + $0x48] sm:$0xff] %v342
      %379 = vst [vmem:[%s179 + $0x50] sm:$0xff] %v347
      %380 = vst [vmem:[%s179 + $0x58] sm:$0xff] %v350
      %381 = vst [vmem:[%s179 + $0x60] sm:$0xff] %v355
      %382 = vst [vmem:[%s179 + $0x68] sm:$0xff] %v358
      %383 = vst [vmem:[%s179 + $0x70] sm:$0xff] %v363
      %384 = vst [vmem:[%s179 + $0x78] sm:$0xff] %v366
      %s385 = smul.u32 %s15, 128
      %v386 = vlaneseq
      %v387 = vshrl.u32 %v386, 7
      %v388 = vadd.s32 %v387, 8
      %v389 = vadd.s32 %v387, 16
      %v390 = vadd.s32 %v387, 24
      %v391 = vadd.s32 %v387, 32
      %v392 = vadd.s32 %v387, 40
      %v393 = vadd.s32 %v387, 48
      %v394 = vadd.s32 %v387, 56
      %v395 = vadd.s32 %v387, 64
      %v396 = vadd.s32 %v387, 72
      %v397 = vadd.s32 %v387, 80
      %v398 = vadd.s32 %v387, 88
      %v399 = vadd.s32 %v387, 96
      %v400 = vadd.s32 %v387, 104
      %v401 = vadd.s32 %v387, 112
      %v402 = vadd.s32 %v387, 120
      %v403 = vstv %s385
      %v404 = vadd.s32 %v387, %v403
      %v405 = vadd.s32 %v388, %v403
      %v406 = vadd.s32 %v389, %v403
      %v407 = vadd.s32 %v390, %v403
      %v408 = vadd.s32 %v391, %v403
      %v409 = vadd.s32 %v392, %v403
      %v410 = vadd.s32 %v393, %v403
      %v411 = vadd.s32 %v394, %v403
      %v412 = vadd.s32 %v395, %v403
      %v413 = vadd.s32 %v396, %v403
      %v414 = vadd.s32 %v397, %v403
      %v415 = vadd.s32 %v398, %v403
      %v416 = vadd.s32 %v399, %v403
      %v417 = vadd.s32 %v400, %v403
      %v418 = vadd.s32 %v401, %v403
      %v419 = vadd.s32 %v402, %v403
      %vm420 = vcmp.lt.s32.totalorder %v404, 512
      %vm421 = vcmp.lt.s32.totalorder %v405, 512
      %vm422 = vcmp.lt.s32.totalorder %v406, 512
      %vm423 = vcmp.lt.s32.totalorder %v407, 512
      %vm424 = vcmp.lt.s32.totalorder %v408, 512
      %vm425 = vcmp.lt.s32.totalorder %v409, 512
      %vm426 = vcmp.lt.s32.totalorder %v410, 512
      %vm427 = vcmp.lt.s32.totalorder %v411, 512
      %vm428 = vcmp.lt.s32.totalorder %v412, 512
      %vm429 = vcmp.lt.s32.totalorder %v413, 512
      %vm430 = vcmp.lt.s32.totalorder %v414, 512
      %vm431 = vcmp.lt.s32.totalorder %v415, 512
      %vm432 = vcmp.lt.s32.totalorder %v416, 512
      %vm433 = vcmp.lt.s32.totalorder %v417, 512
      %vm434 = vcmp.lt.s32.totalorder %v418, 512
      %vm435 = vcmp.lt.s32.totalorder %v419, 512
      %s436 = ssub.s32 512, %s385
      %p437 = scmp.lt.s32.totalorder %s436, 128
      %s438 = scalar_select %p437, %s436, 128
      %p439 = scmp.gt.s32.totalorder %s438, 1
      %s440 = scalar_select %p439, %s438, 1
      %s441 = scvt.s32.f32 %s440
      %v442 = vsel %vm420, %v307, 0.0
      %v443 = vsel %vm421, %v310, 0.0
      %v444 = vsel %vm422, %v315, 0.0
      %v445 = vsel %vm423, %v318, 0.0
      %v446 = vsel %vm424, %v323, 0.0
      %v447 = vsel %vm425, %v326, 0.0
      %v448 = vsel %vm426, %v331, 0.0
      %v449 = vsel %vm427, %v334, 0.0
      %v450 = vsel %vm428, %v339, 0.0
      %v451 = vsel %vm429, %v342, 0.0
      %v452 = vsel %vm430, %v347, 0.0
      %v453 = vsel %vm431, %v350, 0.0
      %v454 = vsel %vm432, %v355, 0.0
      %v455 = vsel %vm433, %v358, 0.0
      %v456 = vsel %vm434, %v363, 0.0
      %v457 = vsel %vm435, %v366, 0.0
      %v458 = vadd.f32 %v442, %v443
      %v459 = vadd.f32 %v458, %v444
      %v460 = vadd.f32 %v459, %v445
      %v461 = vadd.f32 %v460, %v446
      %v462 = vadd.f32 %v461, %v447
      %v463 = vadd.f32 %v462, %v448
      %v464 = vadd.f32 %v463, %v449
      %v465 = vadd.f32 %v464, %v450
      %v466 = vadd.f32 %v465, %v451
      %v467 = vadd.f32 %v466, %v452
      %v468 = vadd.f32 %v467, %v453
      %v469 = vadd.f32 %v468, %v454
      %v470 = vadd.f32 %v469, %v455
      %v471 = vadd.f32 %v470, %v456
      %v472 = vadd.f32 %v471, %v457
      %v473 = vrot.slane %v472, 4
      %v474 = vadd.f32 %v472, %v473
      %v475 = vrot.slane %v474, 2
      %v476 = vadd.f32 %v474, %v475
      %v477 = vrot.slane %v476, 1
      %v478 = vadd.f32 %v476, %v477
      %v479 = vstv %s441
      %v480 = vrcp.pop %v479
      %v481 = vmul.f32 %v478, %v480
      %v482 = vsub.f32 %v307, %v481
      %v483 = vsub.f32 %v310, %v481
      %v484 = vsub.f32 %v315, %v481
      %v485 = vsub.f32 %v318, %v481
      %v486 = vsub.f32 %v323, %v481
      %v487 = vsub.f32 %v326, %v481
      %v488 = vsub.f32 %v331, %v481
      %v489 = vsub.f32 %v334, %v481
      %v490 = vsub.f32 %v339, %v481
      %v491 = vsub.f32 %v342, %v481
      %v492 = vsub.f32 %v347, %v481
      %v493 = vsub.f32 %v350, %v481
      %v494 = vsub.f32 %v355, %v481
      %v495 = vsub.f32 %v358, %v481
      %v496 = vsub.f32 %v363, %v481
      %v497 = vsub.f32 %v366, %v481
      %v498 = vsel %vm420, %v482, 0.0
      %v499 = vsel %vm421, %v483, 0.0
      %v500 = vsel %vm422, %v484, 0.0
      %v501 = vsel %vm423, %v485, 0.0
      %v502 = vsel %vm424, %v486, 0.0
      %v503 = vsel %vm425, %v487, 0.0
      %v504 = vsel %vm426, %v488, 0.0
      %v505 = vsel %vm427, %v489, 0.0
      %v506 = vsel %vm428, %v490, 0.0
      %v507 = vsel %vm429, %v491, 0.0
      %v508 = vsel %vm430, %v492, 0.0
      %v509 = vsel %vm431, %v493, 0.0
      %v510 = vsel %vm432, %v494, 0.0
      %v511 = vsel %vm433, %v495, 0.0
      %v512 = vsel %vm434, %v496, 0.0
      %v513 = vsel %vm435, %v497, 0.0
      %v514 = vmul.f32 %v498, %v498
      %v515 = vmul.f32 %v499, %v499
      %v516 = vmul.f32 %v500, %v500
      %v517 = vmul.f32 %v501, %v501
      %v518 = vmul.f32 %v502, %v502
      %v519 = vmul.f32 %v503, %v503
      %v520 = vmul.f32 %v504, %v504
      %v521 = vmul.f32 %v505, %v505
      %v522 = vmul.f32 %v506, %v506
      %v523 = vmul.f32 %v507, %v507
      %v524 = vmul.f32 %v508, %v508
      %v525 = vmul.f32 %v509, %v509
      %v526 = vmul.f32 %v510, %v510
      %v527 = vmul.f32 %v511, %v511
      %v528 = vmul.f32 %v512, %v512
      %v529 = vmul.f32 %v513, %v513
      %v530 = vadd.f32 %v514, %v515
      %v531 = vadd.f32 %v530, %v516
      %v532 = vadd.f32 %v531, %v517
      %v533 = vadd.f32 %v532, %v518
      %v534 = vadd.f32 %v533, %v519
      %v535 = vadd.f32 %v534, %v520
      %v536 = vadd.f32 %v535, %v521
      %v537 = vadd.f32 %v536, %v522
      %v538 = vadd.f32 %v537, %v523
      %v539 = vadd.f32 %v538, %v524
      %v540 = vadd.f32 %v539, %v525
      %v541 = vadd.f32 %v540, %v526
      %v542 = vadd.f32 %v541, %v527
      %v543 = vadd.f32 %v542, %v528
      %v544 = vadd.f32 %v543, %v529
      %v545 = vrot.slane %v544, 4
      %v546 = vadd.f32 %v544, %v545
      %v547 = vrot.slane %v546, 2
      %v548 = vadd.f32 %v546, %v547
      %v549 = vrot.slane %v548, 1
      %v550 = vadd.f32 %v548, %v549
      %vm551 = vcmask 1040384
      %v552 = vsel %vm551, %v478, %v550
      %vm553 = vcmask 1041408
      %v554 = vsel %vm553, %v552, 0.0
      %555 = vst [vmem:[%s184] sm:$0xff] %v554
      %s556 = smul.u32 16, %s15
      %p557 = scmp.lt.s32.totalorder %s556, 63
      %s558 = scalar_select %p557, %s556, 63
      %s559 = smul.addr %s558, 8
      %s560 = scalar_lea.vmem %s2, %s559
      %p561 = scmp.lt.s32.totalorder %s15, 3
      %s562 = scalar_select %p561, %s15, 3
      %s563 = smul.addr %s562, 8
      %s564 = scalar_lea.vmem %s3, %s563
      // Predicated region
      $region29: #{ph_bottleneck_forward.8} parent=27 // pred_check
        %p565 = pneg %p80
      $region30: #{ph_bottleneck_forward.8} parent=27 // pred_check_branch
        %567 = sbr.rel (%p565) target = $region32
      $region31: #{ph_bottleneck_forward.8} parent=27 // pred_region
        %s568 = smul.u32 16, %s15
      $region32: #{ph_bottleneck_forward.8} parent=27 // pred_fallthru
        _
      // Predicated region
      $region33: #{ph_bottleneck_forward.8} parent=27 // pred_check
        %p569 = pneg %p106
      $region34: #{ph_bottleneck_forward.8} parent=27 // pred_check_branch
        %571 = sbr.rel (%p569) target = $region36
      $region35: #{ph_bottleneck_forward.8} parent=27 // pred_region
        _
      $region36: #{ph_bottleneck_forward.8} parent=27 // pred_fallthru
        _
    $region28: #{ph_bottleneck_forward.8} parent=5 // pred_fallthru
      _
    %p572 = scmp.le.s32.totalorder 2, %s10
    // Predicated region
    $region37: #{ph_bottleneck_forward.8} parent=5 // pred_check
      %p573 = pneg %p572
    $region38: #{ph_bottleneck_forward.8} parent=5 // pred_check_branch
      %575 = sbr.rel (%p573) target = $region40
    $region39: #{ph_bottleneck_forward.8} parent=5 // pred_region
      %s576 = ssub.s32 %s10, 2
      // Predicated region
      $region41: #{ph_bottleneck_forward.8} parent=39 // pred_check
        %p577 = pneg %p86
      $region42: #{ph_bottleneck_forward.8} parent=39 // pred_check_branch
        %579 = sbr.rel (%p577) target = $region44
      $region43: #{ph_bottleneck_forward.8} parent=39 // pred_region
        %s580 = smul.u32 16, %s16
        %p581 = scmp.lt.s32.totalorder %s580, 63
        %s582 = scalar_select %p581, %s580, 63
        %s583 = smul.addr %s582, 8
        %s584 = scalar_lea.vmem %s2, %s583
      $region44: #{ph_bottleneck_forward.8} parent=39 // pred_fallthru
        _
      // Predicated region
      $region45: #{ph_bottleneck_forward.8} parent=39 // pred_check
        %p585 = pneg %p112
      $region46: #{ph_bottleneck_forward.8} parent=39 // pred_check_branch
        %587 = sbr.rel (%p585) target = $region48
      $region47: #{ph_bottleneck_forward.8} parent=39 // pred_region
        %p588 = scmp.lt.s32.totalorder %s16, 3
        %s589 = scalar_select %p588, %s16, 3
        %s590 = smul.addr %s589, 8
        %s591 = scalar_lea.vmem %s3, %s590
      $region48: #{ph_bottleneck_forward.8} parent=39 // pred_fallthru
        _
    $region40: #{ph_bottleneck_forward.8} parent=5 // pred_fallthru
      _
  $region6: #{ph_bottleneck_forward.8} parent=0 // loop_footer
    %s14 = sadd.s32 1, %s10
  $region7: #{ph_bottleneck_forward.8} parent=0 // loop_footer_branch
    %9 = sbr.rel target = $region3
  $region8: #{ph_bottleneck_forward.8} parent=0 // loop_exit
    _

// kernel: ph_bottleneck_forward.11
$region0: #{ph_bottleneck_forward.11}
  #allocation0 [shape = 'u32[]', space=smem, size = 0x4, offset = 0x4, fixed_abs, tag = 'smem constant byte address 0x4 - core index']
  #allocation1 [shape = 'u32[144,128]{1,0:T(1,128)}', space=vmem, size = 0x12000, scoped, tag = 'internal scratch']
  %s0 = inlined_call_operand.vmem [shape: f32[128,128], index: 0, kind: input, shape index: {}]
  %s1 = inlined_call_operand.vmem [shape: f32[1,128], index: 1, kind: input, shape index: {}]
  %s2 = inlined_call_operand.vmem [shape: f32[1,128], index: 2, kind: input, shape index: {}]
  %s3 = inlined_call_operand.vmem [shape: f32[128,128], index: 3, kind: output, shape index: {}]
  %s4 = sld [smem:[#allocation0]]
  $region22: #{ph_bottleneck_forward.11} parent=0
    _
  %s6 = ssub.s32 1, %s4
  %s7 = scalar_select 0, %s6, %s4
  // Predicated region
  $region2: #{ph_bottleneck_forward.11} parent=0 // pred_check
    _
  $region3: #{ph_bottleneck_forward.11} parent=0 // pred_check_branch
    %9 = sbr.rel (0) target = $region5
  $region4: #{ph_bottleneck_forward.11} parent=0 // pred_region
    _
  $region5: #{ph_bottleneck_forward.11} parent=0 // pred_fallthru
    _
  // Predicated region
  $region6: #{ph_bottleneck_forward.11} parent=0 // pred_check
    _
  $region7: #{ph_bottleneck_forward.11} parent=0 // pred_check_branch
    %11 = sbr.rel (0) target = $region9
  $region8: #{ph_bottleneck_forward.11} parent=0 // pred_region
    _
  $region9: #{ph_bottleneck_forward.11} parent=0 // pred_fallthru
    _
  // Predicated region
  $region10: #{ph_bottleneck_forward.11} parent=0 // pred_check
    _
  $region11: #{ph_bottleneck_forward.11} parent=0 // pred_check_branch
    %13 = sbr.rel (0) target = $region13
  $region12: #{ph_bottleneck_forward.11} parent=0 // pred_region
    _
  $region13: #{ph_bottleneck_forward.11} parent=0 // pred_fallthru
    _
  %v14 = vld [vmem:[%s0] sm:$0xff]
  %v15 = vld [vmem:[%s0 + $0x8] sm:$0xff]
  %v16 = vld [vmem:[%s0 + $0x10] sm:$0xff]
  %v17 = vld [vmem:[%s0 + $0x18] sm:$0xff]
  %v18 = vld [vmem:[%s0 + $0x20] sm:$0xff]
  %v19 = vld [vmem:[%s0 + $0x28] sm:$0xff]
  %v20 = vld [vmem:[%s0 + $0x30] sm:$0xff]
  %v21 = vld [vmem:[%s0 + $0x38] sm:$0xff]
  %v22 = vld [vmem:[%s0 + $0x40] sm:$0xff]
  %v23 = vld [vmem:[%s0 + $0x48] sm:$0xff]
  %v24 = vld [vmem:[%s0 + $0x50] sm:$0xff]
  %v25 = vld [vmem:[%s0 + $0x58] sm:$0xff]
  %v26 = vld [vmem:[%s0 + $0x60] sm:$0xff]
  %v27 = vld [vmem:[%s0 + $0x68] sm:$0xff]
  %v28 = vld [vmem:[%s0 + $0x70] sm:$0xff]
  %v29 = vld [vmem:[%s0 + $0x78] sm:$0xff]
  %v30 = vld [vmem:[%s1] sm:$0x1]
  %v32 = vlaneseq
  %v33 = vshrl.u32 %v32, 7
  %v34 = vsub.s32 0, %v33
  %v35 = vrot.slane %v30, %v34
  %v37 = vmul.f32 %v14, %v35
  %v38 = vmul.f32 %v15, %v35
  %v39 = vmul.f32 %v16, %v35
  %v40 = vmul.f32 %v17, %v35
  %v41 = vmul.f32 %v18, %v35
  %v42 = vmul.f32 %v19, %v35
  %v43 = vmul.f32 %v20, %v35
  %v44 = vmul.f32 %v21, %v35
  %v45 = vmul.f32 %v22, %v35
  %v46 = vmul.f32 %v23, %v35
  %v47 = vmul.f32 %v24, %v35
  %v48 = vmul.f32 %v25, %v35
  %v49 = vmul.f32 %v26, %v35
  %v50 = vmul.f32 %v27, %v35
  %v51 = vmul.f32 %v28, %v35
  %v52 = vmul.f32 %v29, %v35
  %v53 = vld [vmem:[%s2] sm:$0x1]
  %v55 = vlaneseq
  %v56 = vshrl.u32 %v55, 7
  %v57 = vsub.s32 0, %v56
  %v58 = vrot.slane %v53, %v57
  %v60 = vadd.f32 %v37, %v58
  %v61 = vadd.f32 %v38, %v58
  %v62 = vadd.f32 %v39, %v58
  %v63 = vadd.f32 %v40, %v58
  %v64 = vadd.f32 %v41, %v58
  %v65 = vadd.f32 %v42, %v58
  %v66 = vadd.f32 %v43, %v58
  %v67 = vadd.f32 %v44, %v58
  %v68 = vadd.f32 %v45, %v58
  %v69 = vadd.f32 %v46, %v58
  %v70 = vadd.f32 %v47, %v58
  %v71 = vadd.f32 %v48, %v58
  %v72 = vadd.f32 %v49, %v58
  %v73 = vadd.f32 %v50, %v58
  %v74 = vadd.f32 %v51, %v58
  %v75 = vadd.f32 %v52, %v58
  %v76 = vmax.f32 %v60, 0.0
  %v77 = vmax.f32 %v61, 0.0
  %v78 = vmax.f32 %v62, 0.0
  %v79 = vmax.f32 %v63, 0.0
  %v80 = vmax.f32 %v64, 0.0
  %v81 = vmax.f32 %v65, 0.0
  %v82 = vmax.f32 %v66, 0.0
  %v83 = vmax.f32 %v67, 0.0
  %v84 = vmax.f32 %v68, 0.0
  %v85 = vmax.f32 %v69, 0.0
  %v86 = vmax.f32 %v70, 0.0
  %v87 = vmax.f32 %v71, 0.0
  %v88 = vmax.f32 %v72, 0.0
  %v89 = vmax.f32 %v73, 0.0
  %v90 = vmax.f32 %v74, 0.0
  %v91 = vmax.f32 %v75, 0.0
  %92 = vst [vmem:[%s3] sm:$0xff] %v76
  %93 = vst [vmem:[%s3 + $0x8] sm:$0xff] %v77
  %94 = vst [vmem:[%s3 + $0x10] sm:$0xff] %v78
  %95 = vst [vmem:[%s3 + $0x18] sm:$0xff] %v79
  %96 = vst [vmem:[%s3 + $0x20] sm:$0xff] %v80
  %97 = vst [vmem:[%s3 + $0x28] sm:$0xff] %v81
  %98 = vst [vmem:[%s3 + $0x30] sm:$0xff] %v82
  %99 = vst [vmem:[%s3 + $0x38] sm:$0xff] %v83
  %100 = vst [vmem:[%s3 + $0x40] sm:$0xff] %v84
  %101 = vst [vmem:[%s3 + $0x48] sm:$0xff] %v85
  %102 = vst [vmem:[%s3 + $0x50] sm:$0xff] %v86
  %103 = vst [vmem:[%s3 + $0x58] sm:$0xff] %v87
  %104 = vst [vmem:[%s3 + $0x60] sm:$0xff] %v88
  %105 = vst [vmem:[%s3 + $0x68] sm:$0xff] %v89
  %106 = vst [vmem:[%s3 + $0x70] sm:$0xff] %v90
  %107 = vst [vmem:[%s3 + $0x78] sm:$0xff] %v91
  // Predicated region
  $region14: #{ph_bottleneck_forward.11} parent=0 // pred_check
    _
  $region15: #{ph_bottleneck_forward.11} parent=0 // pred_check_branch
    %109 = sbr.rel (0) target = $region17
  $region16: #{ph_bottleneck_forward.11} parent=0 // pred_region
    _
  $region17: #{ph_bottleneck_forward.11} parent=0 // pred_fallthru
    _
  // Predicated region
  $region18: #{ph_bottleneck_forward.11} parent=0 // pred_check
    _
  $region19: #{ph_bottleneck_forward.11} parent=0 // pred_check_branch
    %111 = sbr.rel (0) target = $region21
  $region20: #{ph_bottleneck_forward.11} parent=0 // pred_region
    _
  $region21: #{ph_bottleneck_forward.11} parent=0 // pred_fallthru
    _

// kernel: ph_bottleneck_forward.12
$region0: #{ph_bottleneck_forward.12}
  #allocation0 [shape = 'u32[]', space=smem, size = 0x4, offset = 0x4, fixed_abs, tag = 'smem constant byte address 0x4 - core index']
  #allocation1 [shape = 'u32[144,128]{1,0:T(1,128)}', space=vmem, size = 0x12000, scoped, tag = 'internal scratch']
  %s0 = inlined_call_operand.vmem [shape: bf16[128,8], index: 0, kind: input, shape index: {}]
  %s1 = inlined_call_operand.vmem [shape: bf16[8,128], index: 1, kind: input, shape index: {}]
  %s2 = inlined_call_operand.vmem [shape: f32[128,128], index: 2, kind: output, shape index: {0}]
  %s3 = inlined_call_operand.vmem [shape: f32[1,8,128], index: 3, kind: output, shape index: {1}]
  %4 = xla_tuple %s2, %s3
  %s5 = sld [smem:[#allocation0]]
  $region26: #{ph_bottleneck_forward.12} parent=0
    _
  %s7 = ssub.s32 1, %s5
  %s8 = scalar_select 0, %s7, %s5
  // Predicated region
  $region2: #{ph_bottleneck_forward.12} parent=0 // pred_check
    _
  $region3: #{ph_bottleneck_forward.12} parent=0 // pred_check_branch
    %10 = sbr.rel (0) target = $region5
  $region4: #{ph_bottleneck_forward.12} parent=0 // pred_region
    _
  $region5: #{ph_bottleneck_forward.12} parent=0 // pred_fallthru
    _
  // Predicated region
  $region6: #{ph_bottleneck_forward.12} parent=0 // pred_check
    _
  $region7: #{ph_bottleneck_forward.12} parent=0 // pred_check_branch
    %12 = sbr.rel (0) target = $region9
  $region8: #{ph_bottleneck_forward.12} parent=0 // pred_region
    _
  $region9: #{ph_bottleneck_forward.12} parent=0 // pred_fallthru
    _
  %v14 = vld [vmem:[%s0] sm:$0xf]
  %v15 = vld [vmem:[%s0 + $0x4] sm:$0xf]
  %v16 = vld [vmem:[%s0 + $0x8] sm:$0xf]
  %v17 = vld [vmem:[%s0 + $0xc] sm:$0xf]
  %v18 = vld [vmem:[%s0 + $0x10] sm:$0xf]
  %v19 = vld [vmem:[%s0 + $0x14] sm:$0xf]
  %v20 = vld [vmem:[%s0 + $0x18] sm:$0xf]
  %v21 = vld [vmem:[%s0 + $0x1c] sm:$0xf]
  %v22 = vld [vmem:[%s0 + $0x20] sm:$0xf]
  %v23 = vld [vmem:[%s0 + $0x24] sm:$0xf]
  %v24 = vld [vmem:[%s0 + $0x28] sm:$0xf]
  %v25 = vld [vmem:[%s0 + $0x2c] sm:$0xf]
  %v26 = vld [vmem:[%s0 + $0x30] sm:$0xf]
  %v27 = vld [vmem:[%s0 + $0x34] sm:$0xf]
  %v28 = vld [vmem:[%s0 + $0x38] sm:$0xf]
  %v29 = vld [vmem:[%s0 + $0x3c] sm:$0xf]
  %v30 = vld [vmem:[%s1] sm:$0xf]
  %v47 = vunpack.c.l.b16 %v14
  %v48 = vunpack.c.l.b16 %v15
  %v49 = vunpack.c.l.b16 %v16
  %v50 = vunpack.c.l.b16 %v17
  %v51 = vunpack.c.l.b16 %v18
  %v52 = vunpack.c.l.b16 %v19
  %v53 = vunpack.c.l.b16 %v20
  %v54 = vunpack.c.l.b16 %v21
  %v55 = vunpack.c.l.b16 %v22
  %v56 = vunpack.c.l.b16 %v23
  %v57 = vunpack.c.l.b16 %v24
  %v58 = vunpack.c.l.b16 %v25
  %v59 = vunpack.c.l.b16 %v26
  %v60 = vunpack.c.l.b16 %v27
  %v61 = vunpack.c.l.b16 %v28
  %v62 = vunpack.c.l.b16 %v29
  %v63 = vpack.c.b16 %v48, %v47
  %v64 = vpack.c.b16 %v50, %v49
  %v65 = vpack.c.b16 %v52, %v51
  %v66 = vpack.c.b16 %v54, %v53
  %v67 = vpack.c.b16 %v56, %v55
  %v68 = vpack.c.b16 %v58, %v57
  %v69 = vpack.c.b16 %v60, %v59
  %v70 = vpack.c.b16 %v62, %v61
  %vm71 = vcmask 64512
  %v73 = vsel %vm71, %v63, 0
  %v76 = vsel %vm71, %v64, 0
  %v79 = vsel %vm71, %v65, 0
  %v82 = vsel %vm71, %v66, 0
  %v85 = vsel %vm71, %v67, 0
  %v88 = vsel %vm71, %v68, 0
  %v91 = vsel %vm71, %v69, 0
  %v94 = vsel %vm71, %v70, 0
  %vm96 = vcmask 1043456
  %v98 = vsel %vm96, %v30, 0
  %100 = vmatprep.subr.bf16.mxu0 0
  %101 = vmatpush1.bf16.msra.mxu0 0
  %102 = vmatprep.subr.bf16.mxu0 0
  %103 = vmatpush1.bf16.msra.mxu0 0
  %104 = vmatprep.subr.bf16.mxu0 0
  %105 = vmatpush1.bf16.msra.mxu0 0
  %106 = vmatprep.subr.bf16.mxu0 0
  %107 = vmatpush1.bf16.msra.mxu0 0
  %108 = vmatprep.subr.bf16.mxu0 0
  %109 = vmatpush1.bf16.msra.mxu0 0
  %110 = vmatprep.subr.bf16.mxu0 0
  %111 = vmatpush1.bf16.msra.mxu0 0
  %112 = vmatprep.subr.bf16.mxu0 0
  %113 = vmatpush1.bf16.msra.mxu0 0
  %114 = vmatprep.subr.bf16.mxu0 0
  %115 = vmatpush1.bf16.msra.mxu0 %v98
  %116 = vmatprep.subr.bf16.mxu0 0
  %117 = vmatpush2.bf16.msra.mxu0 0
  %118 = vmatprep.subr.bf16.mxu0 0
  %119 = vmatpush2.bf16.msra.mxu0 0
  %120 = vmatprep.subr.bf16.mxu0 0
  %121 = vmatpush2.bf16.msra.mxu0 0
  %122 = vmatprep.subr.bf16.mxu0 0
  %123 = vmatpush2.bf16.msra.mxu0 0
  %124 = vmatprep.subr.bf16.mxu0 0
  %125 = vmatpush2.bf16.msra.mxu0 0
  %126 = vmatprep.subr.bf16.mxu0 0
  %127 = vmatpush2.bf16.msra.mxu0 0
  %128 = vmatprep.subr.bf16.mxu0 0
  %129 = vmatpush2.bf16.msra.mxu0 0
  %130 = vmatprep.subr.bf16.mxu0 0
  %131 = vmatpush2.bf16.msra.mxu0 0
  %132 = vmatprep.mubr.bf16.mxu0 0
  %133 = vmatmul.mubr.bf16.gmra.mxu0 %v73
  %v134 = vpop.f32.mrf.mxu0
  %v135 = vadd.f32 0.0, %v134
  %v136 = vpop.f32.mrf.mxu0
  %v137 = vpop.f32.mrf.mxu0
  %v138 = vadd.f32 0.0, %v137
  %v139 = vpop.f32.mrf.mxu0
  %140 = vmatprep.mubr.bf16.mxu0 0
  %141 = vmatmul.mubr.bf16.gmra.mxu0 %v76
  %v142 = vpop.f32.mrf.mxu0
  %v143 = vadd.f32 0.0, %v142
  %v144 = vpop.f32.mrf.mxu0
  %v145 = vpop.f32.mrf.mxu0
  %v146 = vadd.f32 0.0, %v145
  %v147 = vpop.f32.mrf.mxu0
  %148 = vmatprep.mubr.bf16.mxu0 0
  %149 = vmatmul.mubr.bf16.gmra.mxu0 %v79
  %v150 = vpop.f32.mrf.mxu0
  %v151 = vadd.f32 0.0, %v150
  %v152 = vpop.f32.mrf.mxu0
  %v153 = vpop.f32.mrf.mxu0
  %v154 = vadd.f32 0.0, %v153
  %v155 = vpop.f32.mrf.mxu0
  %156 = vmatprep.mubr.bf16.mxu0 0
  %157 = vmatmul.mubr.bf16.gmra.mxu0 %v82
  %v158 = vpop.f32.mrf.mxu0
  %v159 = vadd.f32 0.0, %v158
  %v160 = vpop.f32.mrf.mxu0
  %v161 = vpop.f32.mrf.mxu0
  %v162 = vadd.f32 0.0, %v161
  %v163 = vpop.f32.mrf.mxu0
  %164 = vmatprep.mubr.bf16.mxu0 0
  %165 = vmatmul.mubr.bf16.gmra.mxu0 %v85
  %v166 = vpop.f32.mrf.mxu0
  %v167 = vadd.f32 0.0, %v166
  %v168 = vpop.f32.mrf.mxu0
  %v169 = vpop.f32.mrf.mxu0
  %v170 = vadd.f32 0.0, %v169
  %v171 = vpop.f32.mrf.mxu0
  %172 = vmatprep.mubr.bf16.mxu0 0
  %173 = vmatmul.mubr.bf16.gmra.mxu0 %v88
  %v174 = vpop.f32.mrf.mxu0
  %v175 = vadd.f32 0.0, %v174
  %v176 = vpop.f32.mrf.mxu0
  %v177 = vpop.f32.mrf.mxu0
  %v178 = vadd.f32 0.0, %v177
  %v179 = vpop.f32.mrf.mxu0
  %180 = vmatprep.mubr.bf16.mxu0 0
  %181 = vmatmul.mubr.bf16.gmra.mxu0 %v91
  %v182 = vpop.f32.mrf.mxu0
  %v183 = vadd.f32 0.0, %v182
  %v184 = vpop.f32.mrf.mxu0
  %v185 = vpop.f32.mrf.mxu0
  %v186 = vadd.f32 0.0, %v185
  %v187 = vpop.f32.mrf.mxu0
  %188 = vmatprep.mubr.bf16.mxu0 0
  %189 = vmatmul.mubr.bf16.gmra.mxu0 %v94
  %v190 = vpop.f32.mrf.mxu0
  %v191 = vadd.f32 0.0, %v190
  %v192 = vpop.f32.mrf.mxu0
  %v193 = vpop.f32.mrf.mxu0
  %v194 = vadd.f32 0.0, %v193
  %v195 = vpop.f32.mrf.mxu0
  %196 = vdwg.mxu0
  %197 = vst [vmem:[%s2] sm:$0xff] %v135
  %198 = vst [vmem:[%s2 + $0x8] sm:$0xff] %v138
  %199 = vst [vmem:[%s2 + $0x10] sm:$0xff] %v143
  %200 = vst [vmem:[%s2 + $0x18] sm:$0xff] %v146
  %201 = vst [vmem:[%s2 + $0x20] sm:$0xff] %v151
  %202 = vst [vmem:[%s2 + $0x28] sm:$0xff] %v154
  %203 = vst [vmem:[%s2 + $0x30] sm:$0xff] %v159
  %204 = vst [vmem:[%s2 + $0x38] sm:$0xff] %v162
  %205 = vst [vmem:[%s2 + $0x40] sm:$0xff] %v167
  %206 = vst [vmem:[%s2 + $0x48] sm:$0xff] %v170
  %207 = vst [vmem:[%s2 + $0x50] sm:$0xff] %v175
  %208 = vst [vmem:[%s2 + $0x58] sm:$0xff] %v178
  %209 = vst [vmem:[%s2 + $0x60] sm:$0xff] %v183
  %210 = vst [vmem:[%s2 + $0x68] sm:$0xff] %v186
  %211 = vst [vmem:[%s2 + $0x70] sm:$0xff] %v191
  %212 = vst [vmem:[%s2 + $0x78] sm:$0xff] %v194
  %s213 = smul.u32 0, 128
  %v214 = vlaneseq
  %v215 = vshrl.u32 %v214, 7
  %v216 = vadd.s32 %v215, 8
  %v217 = vadd.s32 %v215, 16
  %v218 = vadd.s32 %v215, 24
  %v219 = vadd.s32 %v215, 32
  %v220 = vadd.s32 %v215, 40
  %v221 = vadd.s32 %v215, 48
  %v222 = vadd.s32 %v215, 56
  %v223 = vadd.s32 %v215, 64
  %v224 = vadd.s32 %v215, 72
  %v225 = vadd.s32 %v215, 80
  %v226 = vadd.s32 %v215, 88
  %v227 = vadd.s32 %v215, 96
  %v228 = vadd.s32 %v215, 104
  %v229 = vadd.s32 %v215, 112
  %v230 = vadd.s32 %v215, 120
  %v231 = vstv %s213
  %v232 = vadd.s32 %v215, %v231
  %v233 = vadd.s32 %v216, %v231
  %v234 = vadd.s32 %v217, %v231
  %v235 = vadd.s32 %v218, %v231
  %v236 = vadd.s32 %v219, %v231
  %v237 = vadd.s32 %v220, %v231
  %v238 = vadd.s32 %v221, %v231
  %v239 = vadd.s32 %v222, %v231
  %v240 = vadd.s32 %v223, %v231
  %v241 = vadd.s32 %v224, %v231
  %v242 = vadd.s32 %v225, %v231
  %v243 = vadd.s32 %v226, %v231
  %v244 = vadd.s32 %v227, %v231
  %v245 = vadd.s32 %v228, %v231
  %v246 = vadd.s32 %v229, %v231
  %v247 = vadd.s32 %v230, %v231
  %vm248 = vcmp.lt.s32.totalorder %v232, 128
  %vm249 = vcmp.lt.s32.totalorder %v233, 128
  %vm250 = vcmp.lt.s32.totalorder %v234, 128
  %vm251 = vcmp.lt.s32.totalorder %v235, 128
  %vm252 = vcmp.lt.s32.totalorder %v236, 128
  %vm253 = vcmp.lt.s32.totalorder %v237, 128
  %vm254 = vcmp.lt.s32.totalorder %v238, 128
  %vm255 = vcmp.lt.s32.totalorder %v239, 128
  %vm256 = vcmp.lt.s32.totalorder %v240, 128
  %vm257 = vcmp.lt.s32.totalorder %v241, 128
  %vm258 = vcmp.lt.s32.totalorder %v242, 128
  %vm259 = vcmp.lt.s32.totalorder %v243, 128
  %vm260 = vcmp.lt.s32.totalorder %v244, 128
  %vm261 = vcmp.lt.s32.totalorder %v245, 128
  %vm262 = vcmp.lt.s32.totalorder %v246, 128
  %vm263 = vcmp.lt.s32.totalorder %v247, 128
  %s264 = ssub.s32 128, %s213
  %p265 = scmp.lt.s32.totalorder %s264, 128
  %s266 = scalar_select %p265, %s264, 128
  %p267 = scmp.gt.s32.totalorder %s266, 1
  %s268 = scalar_select %p267, %s266, 1
  %s269 = scvt.s32.f32 %s268
  %v270 = vsel %vm248, %v135, 0.0
  %v271 = vsel %vm249, %v138, 0.0
  %v272 = vsel %vm250, %v143, 0.0
  %v273 = vsel %vm251, %v146, 0.0
  %v274 = vsel %vm252, %v151, 0.0
  %v275 = vsel %vm253, %v154, 0.0
  %v276 = vsel %vm254, %v159, 0.0
  %v277 = vsel %vm255, %v162, 0.0
  %v278 = vsel %vm256, %v167, 0.0
  %v279 = vsel %vm257, %v170, 0.0
  %v280 = vsel %vm258, %v175, 0.0
  %v281 = vsel %vm259, %v178, 0.0
  %v282 = vsel %vm260, %v183, 0.0
  %v283 = vsel %vm261, %v186, 0.0
  %v284 = vsel %vm262, %v191, 0.0
  %v285 = vsel %vm263, %v194, 0.0
  %v286 = vadd.f32 %v270, %v271
  %v287 = vadd.f32 %v286, %v272
  %v288 = vadd.f32 %v287, %v273
  %v289 = vadd.f32 %v288, %v274
  %v290 = vadd.f32 %v289, %v275
  %v291 = vadd.f32 %v290, %v276
  %v292 = vadd.f32 %v291, %v277
  %v293 = vadd.f32 %v292, %v278
  %v294 = vadd.f32 %v293, %v279
  %v295 = vadd.f32 %v294, %v280
  %v296 = vadd.f32 %v295, %v281
  %v297 = vadd.f32 %v296, %v282
  %v298 = vadd.f32 %v297, %v283
  %v299 = vadd.f32 %v298, %v284
  %v300 = vadd.f32 %v299, %v285
  %v301 = vrot.slane %v300, 4
  %v302 = vadd.f32 %v300, %v301
  %v303 = vrot.slane %v302, 2
  %v304 = vadd.f32 %v302, %v303
  %v305 = vrot.slane %v304, 1
  %v306 = vadd.f32 %v304, %v305
  %v307 = vstv %s269
  %v308 = vrcp.pop %v307
  %v309 = vmul.f32 %v306, %v308
  %v310 = vsub.f32 %v135, %v309
  %v311 = vsub.f32 %v138, %v309
  %v312 = vsub.f32 %v143, %v309
  %v313 = vsub.f32 %v146, %v309
  %v314 = vsub.f32 %v151, %v309
  %v315 = vsub.f32 %v154, %v309
  %v316 = vsub.f32 %v159, %v309
  %v317 = vsub.f32 %v162, %v309
  %v318 = vsub.f32 %v167, %v309
  %v319 = vsub.f32 %v170, %v309
  %v320 = vsub.f32 %v175, %v309
  %v321 = vsub.f32 %v178, %v309
  %v322 = vsub.f32 %v183, %v309
  %v323 = vsub.f32 %v186, %v309
  %v324 = vsub.f32 %v191, %v309
  %v325 = vsub.f32 %v194, %v309
  %v326 = vsel %vm248, %v310, 0.0
  %v327 = vsel %vm249, %v311, 0.0
  %v328 = vsel %vm250, %v312, 0.0
  %v329 = vsel %vm251, %v313, 0.0
  %v330 = vsel %vm252, %v314, 0.0
  %v331 = vsel %vm253, %v315, 0.0
  %v332 = vsel %vm254, %v316, 0.0
  %v333 = vsel %vm255, %v317, 0.0
  %v334 = vsel %vm256, %v318, 0.0
  %v335 = vsel %vm257, %v319, 0.0
  %v336 = vsel %vm258, %v320, 0.0
  %v337 = vsel %vm259, %v321, 0.0
  %v338 = vsel %vm260, %v322, 0.0
  %v339 = vsel %vm261, %v323, 0.0
  %v340 = vsel %vm262, %v324, 0.0
  %v341 = vsel %vm263, %v325, 0.0
  %v342 = vmul.f32 %v326, %v326
  %v343 = vmul.f32 %v327, %v327
  %v344 = vmul.f32 %v328, %v328
  %v345 = vmul.f32 %v329, %v329
  %v346 = vmul.f32 %v330, %v330
  %v347 = vmul.f32 %v331, %v331
  %v348 = vmul.f32 %v332, %v332
  %v349 = vmul.f32 %v333, %v333
  %v350 = vmul.f32 %v334, %v334
  %v351 = vmul.f32 %v335, %v335
  %v352 = vmul.f32 %v336, %v336
  %v353 = vmul.f32 %v337, %v337
  %v354 = vmul.f32 %v338, %v338
  %v355 = vmul.f32 %v339, %v339
  %v356 = vmul.f32 %v340, %v340
  %v357 = vmul.f32 %v341, %v341
  %v358 = vadd.f32 %v342, %v343
  %v359 = vadd.f32 %v358, %v344
  %v360 = vadd.f32 %v359, %v345
  %v361 = vadd.f32 %v360, %v346
  %v362 = vadd.f32 %v361, %v347
  %v363 = vadd.f32 %v362, %v348
  %v364 = vadd.f32 %v363, %v349
  %v365 = vadd.f32 %v364, %v350
  %v366 = vadd.f32 %v365, %v351
  %v367 = vadd.f32 %v366, %v352
  %v368 = vadd.f32 %v367, %v353
  %v369 = vadd.f32 %v368, %v354
  %v370 = vadd.f32 %v369, %v355
  %v371 = vadd.f32 %v370, %v356
  %v372 = vadd.f32 %v371, %v357
  %v373 = vrot.slane %v372, 4
  %v374 = vadd.f32 %v372, %v373
  %v375 = vrot.slane %v374, 2
  %v376 = vadd.f32 %v374, %v375
  %v377 = vrot.slane %v376, 1
  %v378 = vadd.f32 %v376, %v377
  %vm379 = vcmask 1040384
  %v380 = vsel %vm379, %v306, %v378
  %vm381 = vcmask 1041408
  %v382 = vsel %vm381, %v380, 0.0
  %383 = vst [vmem:[%s3] sm:$0xff] %v382
  // Predicated region
  $region10: #{ph_bottleneck_forward.12} parent=0 // pred_check
    _
  $region11: #{ph_bottleneck_forward.12} parent=0 // pred_check_branch
    %385 = sbr.rel (0) target = $region13
  $region12: #{ph_bottleneck_forward.12} parent=0 // pred_region
    _
  $region13: #{ph_bottleneck_forward.12} parent=0 // pred_fallthru
    _
  // Predicated region
  $region14: #{ph_bottleneck_forward.12} parent=0 // pred_check
    _
  $region15: #{ph_bottleneck_forward.12} parent=0 // pred_check_branch
    %387 = sbr.rel (0) target = $region17
  $region16: #{ph_bottleneck_forward.12} parent=0 // pred_region
    _
  $region17: #{ph_bottleneck_forward.12} parent=0 // pred_fallthru
    _
  // Predicated region
  $region18: #{ph_bottleneck_forward.12} parent=0 // pred_check
    _
  $region19: #{ph_bottleneck_forward.12} parent=0 // pred_check_branch
    %389 = sbr.rel (0) target = $region21
  $region20: #{ph_bottleneck_forward.12} parent=0 // pred_region
    _
  $region21: #{ph_bottleneck_forward.12} parent=0 // pred_fallthru
    _
  // Predicated region
  $region22: #{ph_bottleneck_forward.12} parent=0 // pred_check
    _
  $region23: #{ph_bottleneck_forward.12} parent=0 // pred_check_branch
    %391 = sbr.rel (0) target = $region25
  $region24: #{ph_bottleneck_forward.12} parent=0 // pred_region
    _
  $region25: #{ph_bottleneck_forward.12} parent=0 // pred_fallthru
    _

// kernel: ph_bottleneck_forward.15
$region0: #{ph_bottleneck_forward.15}
  #allocation0 [shape = 'u32[]', space=smem, size = 0x4, offset = 0x4, fixed_abs, tag = 'smem constant byte address 0x4 - core index']
  #allocation1 [shape = 'u32[144,128]{1,0:T(1,128)}', space=vmem, size = 0x12000, scoped, tag = 'internal scratch']
  %s0 = inlined_call_operand.vmem [shape: f32[128,128], index: 0, kind: input, shape index: {}]
  %s1 = inlined_call_operand.vmem [shape: f32[128,128], index: 1, kind: input, shape index: {}]
  %s2 = inlined_call_operand.vmem [shape: f32[1,128], index: 2, kind: input, shape index: {}]
  %s3 = inlined_call_operand.vmem [shape: f32[1,128], index: 3, kind: input, shape index: {}]
  %s4 = inlined_call_operand.hbm [shape: f32[128,128], index: 4, kind: output, shape index: {}]
  %s5 = sld [smem:[#allocation0]]
  $region26: #{ph_bottleneck_forward.15} parent=0
    _
  %s7 = ssub.s32 1, %s5
  %s8 = scalar_select 0, %s7, %s5
  $region1: #{ph_bottleneck_forward.15} parent=0
    #allocation2 [shape = 'u8[65536]{0}', space=vmem, size = 0x10000, scoped, tag = 'output window, operand 0, single buffered']
    #allocation3 [shape = 's32[1]{0}', space=sflag, size = 0x4, scoped, tag = 'scoped memory for ph_bottleneck_forward.15']
    %9 = vsyncpa [#allocation3], 0
    // Predicated region
    $region2: #{ph_bottleneck_forward.15} parent=1 // pred_check
      _
    $region3: #{ph_bottleneck_forward.15} parent=1 // pred_check_branch
      %11 = sbr.rel (0) target = $region5
    $region4: #{ph_bottleneck_forward.15} parent=1 // pred_region
      _
    $region5: #{ph_bottleneck_forward.15} parent=1 // pred_fallthru
      _
    // Predicated region
    $region6: #{ph_bottleneck_forward.15} parent=1 // pred_check
      _
    $region7: #{ph_bottleneck_forward.15} parent=1 // pred_check_branch
      %13 = sbr.rel (0) target = $region9
    $region8: #{ph_bottleneck_forward.15} parent=1 // pred_region
      _
    $region9: #{ph_bottleneck_forward.15} parent=1 // pred_fallthru
      _
    // Predicated region
    $region10: #{ph_bottleneck_forward.15} parent=1 // pred_check
      _
    $region11: #{ph_bottleneck_forward.15} parent=1 // pred_check_branch
      %15 = sbr.rel (0) target = $region13
    $region12: #{ph_bottleneck_forward.15} parent=1 // pred_region
      _
    $region13: #{ph_bottleneck_forward.15} parent=1 // pred_fallthru
      _
    // Predicated region
    $region14: #{ph_bottleneck_forward.15} parent=1 // pred_check
      _
    $region15: #{ph_bottleneck_forward.15} parent=1 // pred_check_branch
      %17 = sbr.rel (0) target = $region17
    $region16: #{ph_bottleneck_forward.15} parent=1 // pred_region
      _
    $region17: #{ph_bottleneck_forward.15} parent=1 // pred_fallthru
      _
    %v18 = vld [vmem:[%s0] sm:$0xff]
    %v19 = vld [vmem:[%s0 + $0x8] sm:$0xff]
    %v20 = vld [vmem:[%s0 + $0x10] sm:$0xff]
    %v21 = vld [vmem:[%s0 + $0x18] sm:$0xff]
    %v22 = vld [vmem:[%s0 + $0x20] sm:$0xff]
    %v23 = vld [vmem:[%s0 + $0x28] sm:$0xff]
    %v24 = vld [vmem:[%s0 + $0x30] sm:$0xff]
    %v25 = vld [vmem:[%s0 + $0x38] sm:$0xff]
    %v26 = vld [vmem:[%s0 + $0x40] sm:$0xff]
    %v27 = vld [vmem:[%s0 + $0x48] sm:$0xff]
    %v28 = vld [vmem:[%s0 + $0x50] sm:$0xff]
    %v29 = vld [vmem:[%s0 + $0x58] sm:$0xff]
    %v30 = vld [vmem:[%s0 + $0x60] sm:$0xff]
    %v31 = vld [vmem:[%s0 + $0x68] sm:$0xff]
    %v32 = vld [vmem:[%s0 + $0x70] sm:$0xff]
    %v33 = vld [vmem:[%s0 + $0x78] sm:$0xff]
    %v34 = vld [vmem:[%s2] sm:$0x1]
    %v36 = vlaneseq
    %v37 = vshrl.u32 %v36, 7
    %v38 = vsub.s32 0, %v37
    %v39 = vrot.slane %v34, %v38
    %v41 = vmul.f32 %v18, %v39
    %v42 = vmul.f32 %v19, %v39
    %v43 = vmul.f32 %v20, %v39
    %v44 = vmul.f32 %v21, %v39
    %v45 = vmul.f32 %v22, %v39
    %v46 = vmul.f32 %v23, %v39
    %v47 = vmul.f32 %v24, %v39
    %v48 = vmul.f32 %v25, %v39
    %v49 = vmul.f32 %v26, %v39
    %v50 = vmul.f32 %v27, %v39
    %v51 = vmul.f32 %v28, %v39
    %v52 = vmul.f32 %v29, %v39
    %v53 = vmul.f32 %v30, %v39
    %v54 = vmul.f32 %v31, %v39
    %v55 = vmul.f32 %v32, %v39
    %v56 = vmul.f32 %v33, %v39
    %v57 = vld [vmem:[%s3] sm:$0x1]
    %v59 = vlaneseq
    %v60 = vshrl.u32 %v59, 7
    %v61 = vsub.s32 0, %v60
    %v62 = vrot.slane %v57, %v61
    %v64 = vadd.f32 %v41, %v62
    %v65 = vadd.f32 %v42, %v62
    %v66 = vadd.f32 %v43, %v62
    %v67 = vadd.f32 %v44, %v62
    %v68 = vadd.f32 %v45, %v62
    %v69 = vadd.f32 %v46, %v62
    %v70 = vadd.f32 %v47, %v62
    %v71 = vadd.f32 %v48, %v62
    %v72 = vadd.f32 %v49, %v62
    %v73 = vadd.f32 %v50, %v62
    %v74 = vadd.f32 %v51, %v62
    %v75 = vadd.f32 %v52, %v62
    %v76 = vadd.f32 %v53, %v62
    %v77 = vadd.f32 %v54, %v62
    %v78 = vadd.f32 %v55, %v62
    %v79 = vadd.f32 %v56, %v62
    %v80 = vld [vmem:[%s1] sm:$0xff]
    %v81 = vld [vmem:[%s1 + $0x8] sm:$0xff]
    %v82 = vld [vmem:[%s1 + $0x10] sm:$0xff]
    %v83 = vld [vmem:[%s1 + $0x18] sm:$0xff]
    %v84 = vld [vmem:[%s1 + $0x20] sm:$0xff]
    %v85 = vld [vmem:[%s1 + $0x28] sm:$0xff]
    %v86 = vld [vmem:[%s1 + $0x30] sm:$0xff]
    %v87 = vld [vmem:[%s1 + $0x38] sm:$0xff]
    %v88 = vld [vmem:[%s1 + $0x40] sm:$0xff]
    %v89 = vld [vmem:[%s1 + $0x48] sm:$0xff]
    %v90 = vld [vmem:[%s1 + $0x50] sm:$0xff]
    %v91 = vld [vmem:[%s1 + $0x58] sm:$0xff]
    %v92 = vld [vmem:[%s1 + $0x60] sm:$0xff]
    %v93 = vld [vmem:[%s1 + $0x68] sm:$0xff]
    %v94 = vld [vmem:[%s1 + $0x70] sm:$0xff]
    %v95 = vld [vmem:[%s1 + $0x78] sm:$0xff]
    %v96 = vadd.f32 %v64, %v80
    %v97 = vadd.f32 %v65, %v81
    %v98 = vadd.f32 %v66, %v82
    %v99 = vadd.f32 %v67, %v83
    %v100 = vadd.f32 %v68, %v84
    %v101 = vadd.f32 %v69, %v85
    %v102 = vadd.f32 %v70, %v86
    %v103 = vadd.f32 %v71, %v87
    %v104 = vadd.f32 %v72, %v88
    %v105 = vadd.f32 %v73, %v89
    %v106 = vadd.f32 %v74, %v90
    %v107 = vadd.f32 %v75, %v91
    %v108 = vadd.f32 %v76, %v92
    %v109 = vadd.f32 %v77, %v93
    %v110 = vadd.f32 %v78, %v94
    %v111 = vadd.f32 %v79, %v95
    %v112 = vmax.f32 %v96, 0.0
    %v113 = vmax.f32 %v97, 0.0
    %v114 = vmax.f32 %v98, 0.0
    %v115 = vmax.f32 %v99, 0.0
    %v116 = vmax.f32 %v100, 0.0
    %v117 = vmax.f32 %v101, 0.0
    %v118 = vmax.f32 %v102, 0.0
    %v119 = vmax.f32 %v103, 0.0
    %v120 = vmax.f32 %v104, 0.0
    %v121 = vmax.f32 %v105, 0.0
    %v122 = vmax.f32 %v106, 0.0
    %v123 = vmax.f32 %v107, 0.0
    %v124 = vmax.f32 %v108, 0.0
    %v125 = vmax.f32 %v109, 0.0
    %v126 = vmax.f32 %v110, 0.0
    %v127 = vmax.f32 %v111, 0.0
    %128 = vst [vmem:[#allocation2] sm:$0xff] %v112
    %129 = vst [vmem:[#allocation2 + $0x8] sm:$0xff] %v113
    %130 = vst [vmem:[#allocation2 + $0x10] sm:$0xff] %v114
    %131 = vst [vmem:[#allocation2 + $0x18] sm:$0xff] %v115
    %132 = vst [vmem:[#allocation2 + $0x20] sm:$0xff] %v116
    %133 = vst [vmem:[#allocation2 + $0x28] sm:$0xff] %v117
    %134 = vst [vmem:[#allocation2 + $0x30] sm:$0xff] %v118
    %135 = vst [vmem:[#allocation2 + $0x38] sm:$0xff] %v119
    %136 = vst [vmem:[#allocation2 + $0x40] sm:$0xff] %v120
    %137 = vst [vmem:[#allocation2 + $0x48] sm:$0xff] %v121
    %138 = vst [vmem:[#allocation2 + $0x50] sm:$0xff] %v122
    %139 = vst [vmem:[#allocation2 + $0x58] sm:$0xff] %v123
    %140 = vst [vmem:[#allocation2 + $0x60] sm:$0xff] %v124
    %141 = vst [vmem:[#allocation2 + $0x68] sm:$0xff] %v125
    %142 = vst [vmem:[#allocation2 + $0x70] sm:$0xff] %v126
    %143 = vst [vmem:[#allocation2 + $0x78] sm:$0xff] %v127
    // Predicated region
    $region18: #{ph_bottleneck_forward.15} parent=1 // pred_check
      _
    $region19: #{ph_bottleneck_forward.15} parent=1 // pred_check_branch
      %145 = sbr.rel (0) target = $region21
    $region20: #{ph_bottleneck_forward.15} parent=1 // pred_region
      %s147 = ssub.s32 2048, 2048
      %148 = vsyncadd [#allocation3], %s147
      %s149 = sshll.u32 [#allocation2], 4
      %s150 = int_to_ptr.vmem [resolvable:$true] %s149
      %155 = dma.vmem_to_hbm [thread:$0]  %s150, 2048, %s4, [#allocation3], 128, 128, 8
    $region21: #{ph_bottleneck_forward.15} parent=1 // pred_fallthru
      _
    // Predicated region
    $region22: #{ph_bottleneck_forward.15} parent=1 // pred_check
      _
    $region23: #{ph_bottleneck_forward.15} parent=1 // pred_check_branch
      %157 = sbr.rel (0) target = $region25
    $region24: #{ph_bottleneck_forward.15} parent=1 // pred_region
      %158 = dma.done [#allocation3], 2048
    $region25: #{ph_bottleneck_forward.15} parent=1 // pred_fallthru
      _
    %159 = vsyncpa [#allocation3], 1

// kernel: ph_bottleneck_forward.14
$region0: #{ph_bottleneck_forward.14}
  #allocation0 [shape = 'u32[]', space=smem, size = 0x4, offset = 0x4, fixed_abs, tag = 'smem constant byte address 0x4 - core index']
  #allocation1 [shape = 'u32[144,128]{1,0:T(1,128)}', space=vmem, size = 0x12000, scoped, tag = 'internal scratch']
  %s0 = inlined_call_operand.vmem [shape: f32[128,128], index: 0, kind: input, shape index: {}]
  %s1 = inlined_call_operand.vmem [shape: f32[1,128], index: 1, kind: input, shape index: {}]
  %s2 = inlined_call_operand.vmem [shape: f32[1,128], index: 2, kind: input, shape index: {}]
  %s3 = inlined_call_operand.vmem [shape: f32[128,128], index: 3, kind: output, shape index: {}]
  %s4 = sld [smem:[#allocation0]]
  $region22: #{ph_bottleneck_forward.14} parent=0
    _
  %s6 = ssub.s32 1, %s4
  %s7 = scalar_select 0, %s6, %s4
  // Predicated region
  $region2: #{ph_bottleneck_forward.14} parent=0 // pred_check
    _
  $region3: #{ph_bottleneck_forward.14} parent=0 // pred_check_branch
    %9 = sbr.rel (0) target = $region5
  $region4: #{ph_bottleneck_forward.14} parent=0 // pred_region
    _
  $region5: #{ph_bottleneck_forward.14} parent=0 // pred_fallthru
    _
  // Predicated region
  $region6: #{ph_bottleneck_forward.14} parent=0 // pred_check
    _
  $region7: #{ph_bottleneck_forward.14} parent=0 // pred_check_branch
    %11 = sbr.rel (0) target = $region9
  $region8: #{ph_bottleneck_forward.14} parent=0 // pred_region
    _
  $region9: #{ph_bottleneck_forward.14} parent=0 // pred_fallthru
    _
  // Predicated region
  $region10: #{ph_bottleneck_forward.14} parent=0 // pred_check
    _
  $region11: #{ph_bottleneck_forward.14} parent=0 // pred_check_branch
    %13 = sbr.rel (0) target = $region13
  $region12: #{ph_bottleneck_forward.14} parent=0 // pred_region
    _
  $region13: #{ph_bottleneck_forward.14} parent=0 // pred_fallthru
    _
  %v14 = vld [vmem:[%s0] sm:$0xff]
  %v15 = vld [vmem:[%s0 + $0x8] sm:$0xff]
  %v16 = vld [vmem:[%s0 + $0x10] sm:$0xff]
  %v17 = vld [vmem:[%s0 + $0x18] sm:$0xff]
  %v18 = vld [vmem:[%s0 + $0x20] sm:$0xff]
  %v19 = vld [vmem:[%s0 + $0x28] sm:$0xff]
  %v20 = vld [vmem:[%s0 + $0x30] sm:$0xff]
  %v21 = vld [vmem:[%s0 + $0x38] sm:$0xff]
  %v22 = vld [vmem:[%s0 + $0x40] sm:$0xff]
  %v23 = vld [vmem:[%s0 + $0x48] sm:$0xff]
  %v24 = vld [vmem:[%s0 + $0x50] sm:$0xff]
  %v25 = vld [vmem:[%s0 + $0x58] sm:$0xff]
  %v26 = vld [vmem:[%s0 + $0x60] sm:$0xff]
  %v27 = vld [vmem:[%s0 + $0x68] sm:$0xff]
  %v28 = vld [vmem:[%s0 + $0x70] sm:$0xff]
  %v29 = vld [vmem:[%s0 + $0x78] sm:$0xff]
  %v30 = vld [vmem:[%s1] sm:$0x1]
  %v32 = vlaneseq
  %v33 = vshrl.u32 %v32, 7
  %v34 = vsub.s32 0, %v33
  %v35 = vrot.slane %v30, %v34
  %v37 = vmul.f32 %v14, %v35
  %v38 = vmul.f32 %v15, %v35
  %v39 = vmul.f32 %v16, %v35
  %v40 = vmul.f32 %v17, %v35
  %v41 = vmul.f32 %v18, %v35
  %v42 = vmul.f32 %v19, %v35
  %v43 = vmul.f32 %v20, %v35
  %v44 = vmul.f32 %v21, %v35
  %v45 = vmul.f32 %v22, %v35
  %v46 = vmul.f32 %v23, %v35
  %v47 = vmul.f32 %v24, %v35
  %v48 = vmul.f32 %v25, %v35
  %v49 = vmul.f32 %v26, %v35
  %v50 = vmul.f32 %v27, %v35
  %v51 = vmul.f32 %v28, %v35
  %v52 = vmul.f32 %v29, %v35
  %v53 = vld [vmem:[%s2] sm:$0x1]
  %v55 = vlaneseq
  %v56 = vshrl.u32 %v55, 7
  %v57 = vsub.s32 0, %v56
  %v58 = vrot.slane %v53, %v57
  %v60 = vadd.f32 %v37, %v58
  %v61 = vadd.f32 %v38, %v58
  %v62 = vadd.f32 %v39, %v58
  %v63 = vadd.f32 %v40, %v58
  %v64 = vadd.f32 %v41, %v58
  %v65 = vadd.f32 %v42, %v58
  %v66 = vadd.f32 %v43, %v58
  %v67 = vadd.f32 %v44, %v58
  %v68 = vadd.f32 %v45, %v58
  %v69 = vadd.f32 %v46, %v58
  %v70 = vadd.f32 %v47, %v58
  %v71 = vadd.f32 %v48, %v58
  %v72 = vadd.f32 %v49, %v58
  %v73 = vadd.f32 %v50, %v58
  %v74 = vadd.f32 %v51, %v58
  %v75 = vadd.f32 %v52, %v58
  %76 = vst [vmem:[%s3] sm:$0xff] %v60
  %77 = vst [vmem:[%s3 + $0x8] sm:$0xff] %v61
  %78 = vst [vmem:[%s3 + $0x10] sm:$0xff] %v62
  %79 = vst [vmem:[%s3 + $0x18] sm:$0xff] %v63
  %80 = vst [vmem:[%s3 + $0x20] sm:$0xff] %v64
  %81 = vst [vmem:[%s3 + $0x28] sm:$0xff] %v65
  %82 = vst [vmem:[%s3 + $0x30] sm:$0xff] %v66
  %83 = vst [vmem:[%s3 + $0x38] sm:$0xff] %v67
  %84 = vst [vmem:[%s3 + $0x40] sm:$0xff] %v68
  %85 = vst [vmem:[%s3 + $0x48] sm:$0xff] %v69
  %86 = vst [vmem:[%s3 + $0x50] sm:$0xff] %v70
  %87 = vst [vmem:[%s3 + $0x58] sm:$0xff] %v71
  %88 = vst [vmem:[%s3 + $0x60] sm:$0xff] %v72
  %89 = vst [vmem:[%s3 + $0x68] sm:$0xff] %v73
  %90 = vst [vmem:[%s3 + $0x70] sm:$0xff] %v74
  %91 = vst [vmem:[%s3 + $0x78] sm:$0xff] %v75
  // Predicated region
  $region14: #{ph_bottleneck_forward.14} parent=0 // pred_check
    _
  $region15: #{ph_bottleneck_forward.14} parent=0 // pred_check_branch
    %93 = sbr.rel (0) target = $region17
  $region16: #{ph_bottleneck_forward.14} parent=0 // pred_region
    _
  $region17: #{ph_bottleneck_forward.14} parent=0 // pred_fallthru
    _
  // Predicated region
  $region18: #{ph_bottleneck_forward.14} parent=0 // pred_check
    _
  $region19: #{ph_bottleneck_forward.14} parent=0 // pred_check_branch
    %95 = sbr.rel (0) target = $region21
  $region20: #{ph_bottleneck_forward.14} parent=0 // pred_region
    _
  $region21: #{ph_bottleneck_forward.14} parent=0 // pred_fallthru
    _

// kernel: ph_bottleneck_forward.10
$region0: #{ph_bottleneck_forward.10}
  #allocation0 [shape = 'u32[]', space=smem, size = 0x4, offset = 0x4, fixed_abs, tag = 'smem constant byte address 0x4 - core index']
  #allocation1 [shape = 'u32[144,128]{1,0:T(1,128)}', space=vmem, size = 0x12000, scoped, tag = 'internal scratch']
  %s0 = inlined_call_operand.vmem [shape: bf16[8,9,9,8], index: 0, kind: input, shape index: {}]
  %s1 = inlined_call_operand.vmem [shape: bf16[9,8,128], index: 1, kind: input, shape index: {}]
  %s2 = inlined_call_operand.vmem [shape: f32[2,64,128], index: 2, kind: output, shape index: {0}]
  %s3 = inlined_call_operand.vmem [shape: f32[2,8,128], index: 3, kind: output, shape index: {1}]
  %4 = xla_tuple %s2, %s3
  %s5 = sld [smem:[#allocation0]]
  $region49: #{ph_bottleneck_forward.10} parent=0
    _
  %s7 = ssub.s32 1, %s5
  %s8 = scalar_select 0, %s7, %s5
  loop: start=0, step=1, limit=4
  $region2: #{ph_bottleneck_forward.10} parent=0 // loop_pre_header
    _
  $region3: #{ph_bottleneck_forward.10} parent=0 // loop_header
    %s10 = sphi 0, %s14
    %p11 = scmp.ge.s32.totalorder %s10, 4
    %s20 = sphi 0, %s22
    %s23 = sphi 0, %s20
    %s24 = sphi 0, %s23
    %s40 = sphi 0, %s24
    %s44 = sphi 0, %s44
    %s46 = sphi 0, %s44
    %s47 = sphi 0, %s46
    %s61 = sphi 0, %s47
    %s67 = sphi 0, %s69
    %s70 = sphi 0, %s67
    %s71 = sphi 0, %s70
    %s87 = sphi 0, %s71
    %s93 = sphi 0, %s95
    %s96 = sphi 0, %s93
    %s97 = sphi 0, %s96
    %s113 = sphi 0, %s97
  $region4: #{ph_bottleneck_forward.10} parent=0 // loop_header_branch
    %13 = sbr.rel (%p11) target = $region8
  $region5: #{ph_bottleneck_forward.10} parent=0 // loop_body
    %s15 = ssub.s32 %s10, 1
    %s16 = ssub.s32 %s10, 2
    %s17 = sadd.s32 %s10, 1
    %s18 = ssub.s32 %s10, %s17
    %p19 = scmp.eq.s32.totalorder %s18, 0
    %s21 = sadd.s32 %s20, 1
    %s22 = scalar_select %p19, %s20, %s21
    %p25 = pneg %p19
    %p26 = scmp.eq.s32.totalorder %s10, 1
    %p27 = por %p25, %p26
    %p28 = scmp.ne.s32.totalorder %s20, %s23
    %p29 = scmp.eq.s32.totalorder %s10, 0
    %p30 = por %p28, %p29
    %p31 = scmp.ne.s32.totalorder %s20, %s23
    %p32 = scmp.eq.s32.totalorder %s15, 1
    %p33 = por %p31, %p32
    %p34 = scmp.ne.s32.totalorder %s23, %s24
    %p35 = scmp.eq.s32.totalorder %s15, 0
    %p36 = por %p34, %p35
    %p37 = scmp.ne.s32.totalorder %s23, %s24
    %p38 = scmp.eq.s32.totalorder %s16, 1
    %p39 = por %p37, %p38
    %p41 = scmp.ne.s32.totalorder %s24, %s40
    %p42 = scmp.eq.s32.totalorder %s16, 0
    %p43 = por %p41, %p42
    %s45 = sadd.s32 %s44, 1
    %p48 = scmp.eq.s32.totalorder %s10, 1
    %p49 = scmp.ne.s32.totalorder %s44, %s46
    %p50 = scmp.eq.s32.totalorder %s10, 0
    %p51 = por %p49, %p50
    %p52 = scmp.ne.s32.totalorder %s44, %s46
    %p53 = scmp.eq.s32.totalorder %s15, 1
    %p54 = por %p52, %p53
    %p55 = scmp.ne.s32.totalorder %s46, %s47
    %p56 = scmp.eq.s32.totalorder %s15, 0
    %p57 = por %p55, %p56
    %p58 = scmp.ne.s32.totalorder %s46, %s47
    %p59 = scmp.eq.s32.totalorder %s16, 1
    %p60 = por %p58, %p59
    %p62 = scmp.ne.s32.totalorder %s47, %s61
    %p63 = scmp.eq.s32.totalorder %s16, 0
    %p64 = por %p62, %p63
    %s65 = ssub.s32 %s10, %s17
    %p66 = scmp.eq.s32.totalorder %s65, 0
    %s68 = sadd.s32 %s67, 1
    %s69 = scalar_select %p66, %s67, %s68
    %p72 = pneg %p66
    %p73 = scmp.eq.s32.totalorder %s10, 1
    %p74 = por %p72, %p73
    %p75 = scmp.ne.s32.totalorder %s67, %s70
    %p76 = scmp.eq.s32.totalorder %s10, 0
    %p77 = por %p75, %p76
    %p78 = scmp.ne.s32.totalorder %s67, %s70
    %p79 = scmp.eq.s32.totalorder %s15, 1
    %p80 = por %p78, %p79
    %p81 = scmp.ne.s32.totalorder %s70, %s71
    %p82 = scmp.eq.s32.totalorder %s15, 0
    %p83 = por %p81, %p82
    %p84 = scmp.ne.s32.totalorder %s70, %s71
    %p85 = scmp.eq.s32.totalorder %s16, 1
    %p86 = por %p84, %p85
    %p88 = scmp.ne.s32.totalorder %s71, %s87
    %p89 = scmp.eq.s32.totalorder %s16, 0
    %p90 = por %p88, %p89
    %s91 = ssub.s32 %s10, %s17
    %p92 = scmp.eq.s32.totalorder %s91, 0
    %s94 = sadd.s32 %s93, 1
    %s95 = scalar_select %p92, %s93, %s94
    %p98 = pneg %p92
    %p99 = scmp.eq.s32.totalorder %s10, 1
    %p100 = por %p98, %p99
    %p101 = scmp.ne.s32.totalorder %s93, %s96
    %p102 = scmp.eq.s32.totalorder %s10, 0
    %p103 = por %p101, %p102
    %p104 = scmp.ne.s32.totalorder %s93, %s96
    %p105 = scmp.eq.s32.totalorder %s15, 1
    %p106 = por %p104, %p105
    %p107 = scmp.ne.s32.totalorder %s96, %s97
    %p108 = scmp.eq.s32.totalorder %s15, 0
    %p109 = por %p107, %p108
    %p110 = scmp.ne.s32.totalorder %s96, %s97
    %p111 = scmp.eq.s32.totalorder %s16, 1
    %p112 = por %p110, %p111
    %p114 = scmp.ne.s32.totalorder %s97, %s113
    %p115 = scmp.eq.s32.totalorder %s16, 0
    %p116 = por %p114, %p115
    %p117 = scmp.le.s32.totalorder 1, %s10
    %p118 = scmp.lt.s32.totalorder %s10, 3
    %p119 = pnand %p117, %p118
    %p120 = pneg %p119
    // Predicated region
    $region9: #{ph_bottleneck_forward.10} parent=5 // pred_check
      _
    $region10: #{ph_bottleneck_forward.10} parent=5 // pred_check_branch
      %122 = sbr.rel (%p119) target = $region12
    $region11: #{ph_bottleneck_forward.10} parent=5 // pred_region
      %s123 = ssub.s32 %s10, 1
      // Predicated region
      $region13: #{ph_bottleneck_forward.10} parent=11 // pred_check
        %p124 = pneg %p57
      $region14: #{ph_bottleneck_forward.10} parent=11 // pred_check_branch
        %126 = sbr.rel (%p124) target = $region16
      $region15: #{ph_bottleneck_forward.10} parent=11 // pred_region
        _
      $region16: #{ph_bottleneck_forward.10} parent=11 // pred_fallthru
        _
    $region12: #{ph_bottleneck_forward.10} parent=5 // pred_fallthru
      _
    %p127 = scmp.lt.s32.totalorder %s10, 2
    // Predicated region
    $region17: #{ph_bottleneck_forward.10} parent=5 // pred_check
      %p128 = pneg %p127
    $region18: #{ph_bottleneck_forward.10} parent=5 // pred_check_branch
      %130 = sbr.rel (%p128) target = $region20
    $region19: #{ph_bottleneck_forward.10} parent=5 // pred_region
      // Predicated region
      $region21: #{ph_bottleneck_forward.10} parent=19 // pred_check
        %p131 = pneg %p30
      $region22: #{ph_bottleneck_forward.10} parent=19 // pred_check_branch
        %133 = sbr.rel (%p131) target = $region24
      $region23: #{ph_bottleneck_forward.10} parent=19 // pred_region
        %s134 = smul.u32 4, %s10
        %p135 = scmp.lt.s32.totalorder %s134, 7
        %s136 = scalar_select %p135, %s134, 7
        %s137 = smul.addr %s136, 18
        %s138 = smul.addr %s137, 4
        %s139 = scalar_lea.vmem %s0, %s138
        %s140 = smul.u32 4, %s10
      $region24: #{ph_bottleneck_forward.10} parent=19 // pred_fallthru
        _
    $region20: #{ph_bottleneck_forward.10} parent=5 // pred_fallthru
      _
    %p141 = scmp.le.s32.totalorder 1, %s10
    %p142 = scmp.lt.s32.totalorder %s10, 3
    %p143 = pnand %p141, %p142
    %p144 = pneg %p143
    // Predicated region
    $region25: #{ph_bottleneck_forward.10} parent=5 // pred_check
      _
    $region26: #{ph_bottleneck_forward.10} parent=5 // pred_check_branch
      %146 = sbr.rel (%p143) target = $region28
    $region27: #{ph_bottleneck_forward.10} parent=5 // pred_region
      %s147 = ssub.s32 %s10, 1
      %s148 = smul.u32 4, %s15
      %p149 = scmp.lt.s32.totalorder %s148, 7
      %s150 = scalar_select %p149, %s148, 7
      %s151 = smul.addr %s150, 18
      %s152 = smul.addr %s151, 4
      %s153 = scalar_lea.vmem %s0, %s152
      %p154 = pneg %p36
      %p155 = pneg %p33
      %p156 = pneg %p57
      %p157 = pneg %p54
      %p158 = pneg %p83
      %p159 = pneg %p80
      %p160 = scmp.lt.s32.totalorder %s15, 1
      %s161 = scalar_select %p160, %s15, 1
      %s162 = smul.addr %s161, 8
      %s163 = smul.addr %s162, 8
      %s164 = scalar_lea.vmem %s2, %s163
      %p165 = pneg %p109
      %p166 = pneg %p106
      %p167 = scmp.lt.s32.totalorder %s15, 1
      %s168 = scalar_select %p167, %s15, 1
      %s169 = smul.addr %s168, 8
      %s170 = scalar_lea.vmem %s3, %s169
      %s171 = smul.u32 4, %s15
      %p172 = scmp.lt.s32.totalorder %s171, 7
      %s173 = scalar_select %p172, %s171, 7
      %s174 = smul.addr %s173, 18
      %s175 = smul.addr %s174, 4
      %s176 = scalar_lea.vmem %s0, %s175
      %s177 = smul.u32 4, %s15
      %p178 = scmp.lt.s32.totalorder %s15, 1
      %s179 = scalar_select %p178, %s15, 1
      %s180 = smul.addr %s179, 8
      %s181 = smul.addr %s180, 8
      %s182 = scalar_lea.vmem %s2, %s181
      %p183 = scmp.lt.s32.totalorder %s15, 1
      %s184 = scalar_select %p183, %s15, 1
      %s185 = smul.addr %s184, 8
      %s186 = scalar_lea.vmem %s3, %s185
      %v188 = vld [vmem:[%s176] sm:$0xf]
      %v189 = vld [vmem:[%s176 + $0x8] sm:$0xf]
      %v190 = vld [vmem:[%s176 + $0x10] sm:$0xf]
      %v191 = vld [vmem:[%s176 + $0x18] sm:$0xf]
      %v192 = vld [vmem:[%s176 + $0x20] sm:$0xf]
      %v193 = vld [vmem:[%s176 + $0x28] sm:$0xf]
      %v194 = vld [vmem:[%s176 + $0x30] sm:$0xf]
      %v195 = vld [vmem:[%s176 + $0x38] sm:$0xf]
      %v196 = vld [vmem:[%s1] sm:$0xf]
      %s197 = scalar_lea.vmem %s176, 72
      %v198 = vld [vmem:[%s197] sm:$0xf]
      %v199 = vld [vmem:[%s197 + $0x8] sm:$0xf]
      %v200 = vld [vmem:[%s197 + $0x10] sm:$0xf]
      %v201 = vld [vmem:[%s197 + $0x18] sm:$0xf]
      %v202 = vld [vmem:[%s197 + $0x20] sm:$0xf]
      %v203 = vld [vmem:[%s197 + $0x28] sm:$0xf]
      %v204 = vld [vmem:[%s197 + $0x30] sm:$0xf]
      %v205 = vld [vmem:[%s197 + $0x38] sm:$0xf]
      %s206 = scalar_lea.vmem %s1, 4
      %v207 = vld [vmem:[%s206] sm:$0xf]
      %v216 = vunpack.c.l.b16 %v198
      %v217 = vunpack.c.l.b16 %v199
      %v218 = vunpack.c.l.b16 %v200
      %v219 = vunpack.c.l.b16 %v201
      %v220 = vunpack.c.l.b16 %v202
      %v221 = vunpack.c.l.b16 %v203
      %v222 = vunpack.c.l.b16 %v204
      %v223 = vunpack.c.l.b16 %v205
      %v224 = vpack.c.b16 %v217, %v216
      %v225 = vpack.c.b16 %v219, %v218
      %v226 = vpack.c.b16 %v221, %v220
      %v227 = vpack.c.b16 %v223, %v222
      %vm228 = vcmask 64512
      %v230 = vsel %vm228, %v224, 0
      %v233 = vsel %vm228, %v225, 0
      %v236 = vsel %vm228, %v226, 0
      %v239 = vsel %vm228, %v227, 0
      %vm241 = vcmask 1043456
      %v243 = vsel %vm241, %v207, 0
      %245 = vmatprep.subr.bf16.mxu0 0
      %246 = vmatpush1.bf16.msra.mxu0 0
      %247 = vmatprep.subr.bf16.mxu0 0
      %248 = vmatpush1.bf16.msra.mxu0 0
      %249 = vmatprep.subr.bf16.mxu0 0
      %250 = vmatpush1.bf16.msra.mxu0 0
      %251 = vmatprep.subr.bf16.mxu0 0
      %252 = vmatpush1.bf16.msra.mxu0 0
      %253 = vmatprep.subr.bf16.mxu0 0
      %254 = vmatpush1.bf16.msra.mxu0 0
      %255 = vmatprep.subr.bf16.mxu0 0
      %256 = vmatpush1.bf16.msra.mxu0 0
      %257 = vmatprep.subr.bf16.mxu0 0
      %258 = vmatpush1.bf16.msra.mxu0 0
      %259 = vmatprep.subr.bf16.mxu0 0
      %260 = vmatpush1.bf16.msra.mxu0 %v243
      %261 = vmatprep.subr.bf16.mxu0 0
      %262 = vmatpush2.bf16.msra.mxu0 0
      %263 = vmatprep.subr.bf16.mxu0 0
      %264 = vmatpush2.bf16.msra.mxu0 0
      %265 = vmatprep.subr.bf16.mxu0 0
      %266 = vmatpush2.bf16.msra.mxu0 0
      %267 = vmatprep.subr.bf16.mxu0 0
      %268 = vmatpush2.bf16.msra.mxu0 0
      %269 = vmatprep.subr.bf16.mxu0 0
      %270 = vmatpush2.bf16.msra.mxu0 0
      %271 = vmatprep.subr.bf16.mxu0 0
      %272 = vmatpush2.bf16.msra.mxu0 0
      %273 = vmatprep.subr.bf16.mxu0 0
      %274 = vmatpush2.bf16.msra.mxu0 0
      %275 = vmatprep.subr.bf16.mxu0 0
      %276 = vmatpush2.bf16.msra.mxu0 0
      %277 = vmatprep.mubr.bf16.mxu0 0
      %278 = vmatmul.mubr.bf16.gmra.mxu0 %v230
      %v279 = vpop.f32.mrf.mxu0
      %v280 = vadd.f32 0.0, %v279
      %v281 = vpop.f32.mrf.mxu0
      %v282 = vpop.f32.mrf.mxu0
      %v283 = vadd.f32 0.0, %v282
      %v284 = vpop.f32.mrf.mxu0
      %285 = vmatprep.mubr.bf16.mxu0 0
      %286 = vmatmul.mubr.bf16.gmra.mxu0 %v233
      %v287 = vpop.f32.mrf.mxu0
      %v288 = vadd.f32 0.0, %v287
      %v289 = vpop.f32.mrf.mxu0
      %v290 = vpop.f32.mrf.mxu0
      %v291 = vadd.f32 0.0, %v290
      %v292 = vpop.f32.mrf.mxu0
      %293 = vmatprep.mubr.bf16.mxu0 0
      %294 = vmatmul.mubr.bf16.gmra.mxu0 %v236
      %v295 = vpop.f32.mrf.mxu0
      %v296 = vadd.f32 0.0, %v295
      %v297 = vpop.f32.mrf.mxu0
      %v298 = vpop.f32.mrf.mxu0
      %v299 = vadd.f32 0.0, %v298
      %v300 = vpop.f32.mrf.mxu0
      %301 = vmatprep.mubr.bf16.mxu0 0
      %302 = vmatmul.mubr.bf16.gmra.mxu0 %v239
      %v303 = vpop.f32.mrf.mxu0
      %v304 = vadd.f32 0.0, %v303
      %v305 = vpop.f32.mrf.mxu0
      %v306 = vpop.f32.mrf.mxu0
      %v307 = vadd.f32 0.0, %v306
      %v308 = vpop.f32.mrf.mxu0
      %309 = vdwg.mxu0
      %v318 = vunpack.c.l.b16 %v188
      %v319 = vunpack.c.l.b16 %v189
      %v320 = vunpack.c.l.b16 %v190
      %v321 = vunpack.c.l.b16 %v191
      %v322 = vunpack.c.l.b16 %v192
      %v323 = vunpack.c.l.b16 %v193
      %v324 = vunpack.c.l.b16 %v194
      %v325 = vunpack.c.l.b16 %v195
      %v326 = vpack.c.b16 %v319, %v318
      %v327 = vpack.c.b16 %v321, %v320
      %v328 = vpack.c.b16 %v323, %v322
      %v329 = vpack.c.b16 %v325, %v324
      %v331 = vsel %vm228, %v326, 0
      %v334 = vsel %vm228, %v327, 0
      %v337 = vsel %vm228, %v328, 0
      %v340 = vsel %vm228, %v329, 0
      %v343 = vsel %vm241, %v196, 0
      %345 = vmatprep.subr.bf16.mxu0 0
      %346 = vmatpush1.bf16.msra.mxu0 0
      %347 = vmatprep.subr.bf16.mxu0 0
      %348 = vmatpush1.bf16.msra.mxu0 0
      %349 = vmatprep.subr.bf16.mxu0 0
      %350 = vmatpush1.bf16.msra.mxu0 0
      %351 = vmatprep.subr.bf16.mxu0 0
      %352 = vmatpush1.bf16.msra.mxu0 0
      %353 = vmatprep.subr.bf16.mxu0 0
      %354 = vmatpush1.bf16.msra.mxu0 0
      %355 = vmatprep.subr.bf16.mxu0 0
      %356 = vmatpush1.bf16.msra.mxu0 0
      %357 = vmatprep.subr.bf16.mxu0 0
      %358 = vmatpush1.bf16.msra.mxu0 0
      %359 = vmatprep.subr.bf16.mxu0 0
      %360 = vmatpush1.bf16.msra.mxu0 %v343
      %361 = vmatprep.subr.bf16.mxu0 0
      %362 = vmatpush2.bf16.msra.mxu0 0
      %363 = vmatprep.subr.bf16.mxu0 0
      %364 = vmatpush2.bf16.msra.mxu0 0
      %365 = vmatprep.subr.bf16.mxu0 0
      %366 = vmatpush2.bf16.msra.mxu0 0
      %367 = vmatprep.subr.bf16.mxu0 0
      %368 = vmatpush2.bf16.msra.mxu0 0
      %369 = vmatprep.subr.bf16.mxu0 0
      %370 = vmatpush2.bf16.msra.mxu0 0
      %371 = vmatprep.subr.bf16.mxu0 0
      %372 = vmatpush2.bf16.msra.mxu0 0
      %373 = vmatprep.subr.bf16.mxu0 0
      %374 = vmatpush2.bf16.msra.mxu0 0
      %375 = vmatprep.subr.bf16.mxu0 0
      %376 = vmatpush2.bf16.msra.mxu0 0
      %377 = vmatprep.mubr.bf16.mxu0 0
      %378 = vmatmul.mubr.bf16.gmra.mxu0 %v331
      %v379 = vpop.f32.mrf.mxu0
      %v380 = vadd.f32 %v280, %v379
      %v381 = vpop.f32.mrf.mxu0
      %v382 = vpop.f32.mrf.mxu0
      %v383 = vadd.f32 %v283, %v382
      %v384 = vpop.f32.mrf.mxu0
      %385 = vmatprep.mubr.bf16.mxu0 0
      %386 = vmatmul.mubr.bf16.gmra.mxu0 %v334
      %v387 = vpop.f32.mrf.mxu0
      %v388 = vadd.f32 %v288, %v387
      %v389 = vpop.f32.mrf.mxu0
      %v390 = vpop.f32.mrf.mxu0
      %v391 = vadd.f32 %v291, %v390
      %v392 = vpop.f32.mrf.mxu0
      %393 = vmatprep.mubr.bf16.mxu0 0
      %394 = vmatmul.mubr.bf16.gmra.mxu0 %v337
      %v395 = vpop.f32.mrf.mxu0
      %v396 = vadd.f32 %v296, %v395
      %v397 = vpop.f32.mrf.mxu0
      %v398 = vpop.f32.mrf.mxu0
      %v399 = vadd.f32 %v299, %v398
      %v400 = vpop.f32.mrf.mxu0
      %401 = vmatprep.mubr.bf16.mxu0 0
      %402 = vmatmul.mubr.bf16.gmra.mxu0 %v340
      %v403 = vpop.f32.mrf.mxu0
      %v404 = vadd.f32 %v304, %v403
      %v405 = vpop.f32.mrf.mxu0
      %v406 = vpop.f32.mrf.mxu0
      %v407 = vadd.f32 %v307, %v406
      %v408 = vpop.f32.mrf.mxu0
      %409 = vdwg.mxu0
      %v410 = vld [vmem:[%s176] sm:$0xf]
      %v411 = vld [vmem:[%s176 + $0x4] sm:$0x1]
      %v412 = vld [vmem:[%s176 + $0x8] sm:$0xf]
      %v413 = vld [vmem:[%s176 + $0xc] sm:$0x1]
      %v414 = vld [vmem:[%s176 + $0x10] sm:$0xf]
      %v415 = vld [vmem:[%s176 + $0x14] sm:$0x1]
      %v416 = vld [vmem:[%s176 + $0x18] sm:$0xf]
      %v417 = vld [vmem:[%s176 + $0x1c] sm:$0x1]
      %v418 = vld [vmem:[%s176 + $0x20] sm:$0xf]
      %v419 = vld [vmem:[%s176 + $0x24] sm:$0x1]
      %v420 = vld [vmem:[%s176 + $0x28] sm:$0xf]
      %v421 = vld [vmem:[%s176 + $0x2c] sm:$0x1]
      %v422 = vld [vmem:[%s176 + $0x30] sm:$0xf]
      %v423 = vld [vmem:[%s176 + $0x34] sm:$0x1]
      %v424 = vld [vmem:[%s176 + $0x38] sm:$0xf]
      %v425 = vld [vmem:[%s176 + $0x3c] sm:$0x1]
      %vm426 = vsmask.f32 3328
      %vm427 = vsmask.f32 7440
      %vm428 = vmor %vm426, %vm427
      %v430 = vshrl.u32 %v410, 16
      %v432 = vrot.slane %v430, 4
      %v433 = vshll.u32 %v410, 16
      %v435 = vrot.slane %v433, 5
      %v436 = vor.u32 %v432, %v435
      %v437 = vrot.slane %v436, 4
      %v439 = vshll.u32 %v411, 16
      %v441 = vrot.slane %v439, 5
      %v442 = vsel %vm428, %v437, %v441
      %v444 = vshrl.u32 %v412, 16
      %v446 = vrot.slane %v444, 4
      %v447 = vshll.u32 %v412, 16
      %v449 = vrot.slane %v447, 5
      %v450 = vor.u32 %v446, %v449
      %v451 = vrot.slane %v450, 4
      %v453 = vshll.u32 %v413, 16
      %v455 = vrot.slane %v453, 5
      %v456 = vsel %vm428, %v451, %v455
      %v458 = vshrl.u32 %v414, 16
      %v460 = vrot.slane %v458, 4
      %v461 = vshll.u32 %v414, 16
      %v463 = vrot.slane %v461, 5
      %v464 = vor.u32 %v460, %v463
      %v465 = vrot.slane %v464, 4
      %v467 = vshll.u32 %v415, 16
      %v469 = vrot.slane %v467, 5
      %v470 = vsel %vm428, %v465, %v469
      %v472 = vshrl.u32 %v416, 16
      %v474 = vrot.slane %v472, 4
      %v475 = vshll.u32 %v416, 16
      %v477 = vrot.slane %v475, 5
      %v478 = vor.u32 %v474, %v477
      %v479 = vrot.slane %v478, 4
      %v481 = vshll.u32 %v417, 16
      %v483 = vrot.slane %v481, 5
      %v484 = vsel %vm428, %v479, %v483
      %v486 = vshrl.u32 %v418, 16
      %v488 = vrot.slane %v486, 4
      %v489 = vshll.u32 %v418, 16
      %v491 = vrot.slane %v489, 5
      %v492 = vor.u32 %v488, %v491
      %v493 = vrot.slane %v492, 4
      %v495 = vshll.u32 %v419, 16
      %v497 = vrot.slane %v495, 5
      %v498 = vsel %vm428, %v493, %v497
      %v500 = vshrl.u32 %v420, 16
      %v502 = vrot.slane %v500, 4
      %v503 = vshll.u32 %v420, 16
      %v505 = vrot.slane %v503, 5
      %v506 = vor.u32 %v502, %v505
      %v507 = vrot.slane %v506, 4
      %v509 = vshll.u32 %v421, 16
      %v511 = vrot.slane %v509, 5
      %v512 = vsel %vm428, %v507, %v511
      %v514 = vshrl.u32 %v422, 16
      %v516 = vrot.slane %v514, 4
      %v517 = vshll.u32 %v422, 16
      %v519 = vrot.slane %v517, 5
      %v520 = vor.u32 %v516, %v519
      %v521 = vrot.slane %v520, 4
      %v523 = vshll.u32 %v423, 16
      %v525 = vrot.slane %v523, 5
      %v526 = vsel %vm428, %v521, %v525
      %v528 = vshrl.u32 %v424, 16
      %v530 = vrot.slane %v528, 4
      %v531 = vshll.u32 %v424, 16
      %v533 = vrot.slane %v531, 5
      %v534 = vor.u32 %v530, %v533
      %v535 = vrot.slane %v534, 4
      %v537 = vshll.u32 %v425, 16
      %v539 = vrot.slane %v537, 5
      %v540 = vsel %vm428, %v535, %v539
      %s541 = scalar_lea.vmem %s1, 8
      %v542 = vld [vmem:[%s541] sm:$0xf]
      %v543 = vunpack.c.l.b16 %v442
      %v544 = vunpack.c.l.b16 %v456
      %v545 = vunpack.c.l.b16 %v470
      %v546 = vunpack.c.l.b16 %v484
      %v547 = vunpack.c.l.b16 %v498
      %v548 = vunpack.c.l.b16 %v512
      %v549 = vunpack.c.l.b16 %v526
      %v550 = vunpack.c.l.b16 %v540
      %v551 = vpack.c.b16 %v544, %v543
      %v552 = vpack.c.b16 %v546, %v545
      %v553 = vpack.c.b16 %v548, %v547
      %v554 = vpack.c.b16 %v550, %v549
      %v556 = vsel %vm228, %v551, 0
      %v559 = vsel %vm228, %v552, 0
      %v562 = vsel %vm228, %v553, 0
      %v565 = vsel %vm228, %v554, 0
      %v568 = vsel %vm241, %v542, 0
      %570 = vmatprep.subr.bf16.mxu0 0
      %571 = vmatpush1.bf16.msra.mxu0 0
      %572 = vmatprep.subr.bf16.mxu0 0
      %573 = vmatpush1.bf16.msra.mxu0 0
      %574 = vmatprep.subr.bf16.mxu0 0
      %575 = vmatpush1.bf16.msra.mxu0 0
      %576 = vmatprep.subr.bf16.mxu0 0
      %577 = vmatpush1.bf16.msra.mxu0 0
      %578 = vmatprep.subr.bf16.mxu0 0
      %579 = vmatpush1.bf16.msra.mxu0 0
      %580 = vmatprep.subr.bf16.mxu0 0
      %581 = vmatpush1.bf16.msra.mxu0 0
      %582 = vmatprep.subr.bf16.mxu0 0
      %583 = vmatpush1.bf16.msra.mxu0 0
      %584 = vmatprep.subr.bf16.mxu0 0
      %585 = vmatpush1.bf16.msra.mxu0 %v568
      %586 = vmatprep.subr.bf16.mxu0 0
      %587 = vmatpush2.bf16.msra.mxu0 0
      %588 = vmatprep.subr.bf16.mxu0 0
      %589 = vmatpush2.bf16.msra.mxu0 0
      %590 = vmatprep.subr.bf16.mxu0 0
      %591 = vmatpush2.bf16.msra.mxu0 0
      %592 = vmatprep.subr.bf16.mxu0 0
      %593 = vmatpush2.bf16.msra.mxu0 0
      %594 = vmatprep.subr.bf16.mxu0 0
      %595 = vmatpush2.bf16.msra.mxu0 0
      %596 = vmatprep.subr.bf16.mxu0 0
      %597 = vmatpush2.bf16.msra.mxu0 0
      %598 = vmatprep.subr.bf16.mxu0 0
      %599 = vmatpush2.bf16.msra.mxu0 0
      %600 = vmatprep.subr.bf16.mxu0 0
      %601 = vmatpush2.bf16.msra.mxu0 0
      %602 = vmatprep.mubr.bf16.mxu0 0
      %603 = vmatmul.mubr.bf16.gmra.mxu0 %v556
      %v604 = vpop.f32.mrf.mxu0
      %v605 = vadd.f32 0.0, %v604
      %v606 = vpop.f32.mrf.mxu0
      %v607 = vpop.f32.mrf.mxu0
      %v608 = vadd.f32 0.0, %v607
      %v609 = vpop.f32.mrf.mxu0
      %610 = vmatprep.mubr.bf16.mxu0 0
      %611 = vmatmul.mubr.bf16.gmra.mxu0 %v559
      %v612 = vpop.f32.mrf.mxu0
      %v613 = vadd.f32 0.0, %v612
      %v614 = vpop.f32.mrf.mxu0
      %v615 = vpop.f32.mrf.mxu0
      %v616 = vadd.f32 0.0, %v615
      %v617 = vpop.f32.mrf.mxu0
      %618 = vmatprep.mubr.bf16.mxu0 0
      %619 = vmatmul.mubr.bf16.gmra.mxu0 %v562
      %v620 = vpop.f32.mrf.mxu0
      %v621 = vadd.f32 0.0, %v620
      %v622 = vpop.f32.mrf.mxu0
      %v623 = vpop.f32.mrf.mxu0
      %v624 = vadd.f32 0.0, %v623
      %v625 = vpop.f32.mrf.mxu0
      %626 = vmatprep.mubr.bf16.mxu0 0
      %627 = vmatmul.mubr.bf16.gmra.mxu0 %v565
      %v628 = vpop.f32.mrf.mxu0
      %v629 = vadd.f32 0.0, %v628
      %v630 = vpop.f32.mrf.mxu0
      %v631 = vpop.f32.mrf.mxu0
      %v632 = vadd.f32 0.0, %v631
      %v633 = vpop.f32.mrf.mxu0
      %634 = vdwg.mxu0
      %v635 = vadd.f32 %v380, %v605
      %v636 = vadd.f32 %v383, %v608
      %v637 = vadd.f32 %v388, %v613
      %v638 = vadd.f32 %v391, %v616
      %v639 = vadd.f32 %v396, %v621
      %v640 = vadd.f32 %v399, %v624
      %v641 = vadd.f32 %v404, %v629
      %v642 = vadd.f32 %v407, %v632
      %s643 = scalar_lea.vmem %s176, 144
      %v644 = vld [vmem:[%s643] sm:$0xf]
      %v645 = vld [vmem:[%s643 + $0x8] sm:$0xf]
      %v646 = vld [vmem:[%s643 + $0x10] sm:$0xf]
      %v647 = vld [vmem:[%s643 + $0x18] sm:$0xf]
      %v648 = vld [vmem:[%s643 + $0x20] sm:$0xf]
      %v649 = vld [vmem:[%s643 + $0x28] sm:$0xf]
      %v650 = vld [vmem:[%s643 + $0x30] sm:$0xf]
      %v651 = vld [vmem:[%s643 + $0x38] sm:$0xf]
      %s652 = scalar_lea.vmem %s1, 12
      %v653 = vld [vmem:[%s652] sm:$0xf]
      %v662 = vunpack.c.l.b16 %v644
      %v663 = vunpack.c.l.b16 %v645
      %v664 = vunpack.c.l.b16 %v646
      %v665 = vunpack.c.l.b16 %v647
      %v666 = vunpack.c.l.b16 %v648
      %v667 = vunpack.c.l.b16 %v649
      %v668 = vunpack.c.l.b16 %v650
      %v669 = vunpack.c.l.b16 %v651
      %v670 = vpack.c.b16 %v663, %v662
      %v671 = vpack.c.b16 %v665, %v664
      %v672 = vpack.c.b16 %v667, %v666
      %v673 = vpack.c.b16 %v669, %v668
      %v675 = vsel %vm228, %v670, 0
      %v678 = vsel %vm228, %v671, 0
      %v681 = vsel %vm228, %v672, 0
      %v684 = vsel %vm228, %v673, 0
      %v687 = vsel %vm241, %v653, 0
      %689 = vmatprep.subr.bf16.mxu0 0
      %690 = vmatpush1.bf16.msra.mxu0 0
      %691 = vmatprep.subr.bf16.mxu0 0
      %692 = vmatpush1.bf16.msra.mxu0 0
      %693 = vmatprep.subr.bf16.mxu0 0
      %694 = vmatpush1.bf16.msra.mxu0 0
      %695 = vmatprep.subr.bf16.mxu0 0
      %696 = vmatpush1.bf16.msra.mxu0 0
      %697 = vmatprep.subr.bf16.mxu0 0
      %698 = vmatpush1.bf16.msra.mxu0 0
      %699 = vmatprep.subr.bf16.mxu0 0
      %700 = vmatpush1.bf16.msra.mxu0 0
      %701 = vmatprep.subr.bf16.mxu0 0
      %702 = vmatpush1.bf16.msra.mxu0 0
      %703 = vmatprep.subr.bf16.mxu0 0
      %704 = vmatpush1.bf16.msra.mxu0 %v687
      %705 = vmatprep.subr.bf16.mxu0 0
      %706 = vmatpush2.bf16.msra.mxu0 0
      %707 = vmatprep.subr.bf16.mxu0 0
      %708 = vmatpush2.bf16.msra.mxu0 0
      %709 = vmatprep.subr.bf16.mxu0 0
      %710 = vmatpush2.bf16.msra.mxu0 0
      %711 = vmatprep.subr.bf16.mxu0 0
      %712 = vmatpush2.bf16.msra.mxu0 0
      %713 = vmatprep.subr.bf16.mxu0 0
      %714 = vmatpush2.bf16.msra.mxu0 0
      %715 = vmatprep.subr.bf16.mxu0 0
      %716 = vmatpush2.bf16.msra.mxu0 0
      %717 = vmatprep.subr.bf16.mxu0 0
      %718 = vmatpush2.bf16.msra.mxu0 0
      %719 = vmatprep.subr.bf16.mxu0 0
      %720 = vmatpush2.bf16.msra.mxu0 0
      %721 = vmatprep.mubr.bf16.mxu0 0
      %722 = vmatmul.mubr.bf16.gmra.mxu0 %v675
      %v723 = vpop.f32.mrf.mxu0
      %v724 = vadd.f32 0.0, %v723
      %v725 = vpop.f32.mrf.mxu0
      %v726 = vpop.f32.mrf.mxu0
      %v727 = vadd.f32 0.0, %v726
      %v728 = vpop.f32.mrf.mxu0
      %729 = vmatprep.mubr.bf16.mxu0 0
      %730 = vmatmul.mubr.bf16.gmra.mxu0 %v678
      %v731 = vpop.f32.mrf.mxu0
      %v732 = vadd.f32 0.0, %v731
      %v733 = vpop.f32.mrf.mxu0
      %v734 = vpop.f32.mrf.mxu0
      %v735 = vadd.f32 0.0, %v734
      %v736 = vpop.f32.mrf.mxu0
      %737 = vmatprep.mubr.bf16.mxu0 0
      %738 = vmatmul.mubr.bf16.gmra.mxu0 %v681
      %v739 = vpop.f32.mrf.mxu0
      %v740 = vadd.f32 0.0, %v739
      %v741 = vpop.f32.mrf.mxu0
      %v742 = vpop.f32.mrf.mxu0
      %v743 = vadd.f32 0.0, %v742
      %v744 = vpop.f32.mrf.mxu0
      %745 = vmatprep.mubr.bf16.mxu0 0
      %746 = vmatmul.mubr.bf16.gmra.mxu0 %v684
      %v747 = vpop.f32.mrf.mxu0
      %v748 = vadd.f32 0.0, %v747
      %v749 = vpop.f32.mrf.mxu0
      %v750 = vpop.f32.mrf.mxu0
      %v751 = vadd.f32 0.0, %v750
      %v752 = vpop.f32.mrf.mxu0
      %753 = vdwg.mxu0
      %v754 = vadd.f32 %v635, %v724
      %v755 = vadd.f32 %v636, %v727
      %v756 = vadd.f32 %v637, %v732
      %v757 = vadd.f32 %v638, %v735
      %v758 = vadd.f32 %v639, %v740
      %v759 = vadd.f32 %v640, %v743
      %v760 = vadd.f32 %v641, %v748
      %v761 = vadd.f32 %v642, %v751
      %s762 = scalar_lea.vmem %s176, 216
      %v763 = vld [vmem:[%s762] sm:$0xf]
      %v764 = vld [vmem:[%s762 + $0x8] sm:$0xf]
      %v765 = vld [vmem:[%s762 + $0x10] sm:$0xf]
      %v766 = vld [vmem:[%s762 + $0x18] sm:$0xf]
      %v767 = vld [vmem:[%s762 + $0x20] sm:$0xf]
      %v768 = vld [vmem:[%s762 + $0x28] sm:$0xf]
      %v769 = vld [vmem:[%s762 + $0x30] sm:$0xf]
      %v770 = vld [vmem:[%s762 + $0x38] sm:$0xf]
      %s771 = scalar_lea.vmem %s1, 16
      %v772 = vld [vmem:[%s771] sm:$0xf]
      %v781 = vunpack.c.l.b16 %v763
      %v782 = vunpack.c.l.b16 %v764
      %v783 = vunpack.c.l.b16 %v765
      %v784 = vunpack.c.l.b16 %v766
      %v785 = vunpack.c.l.b16 %v767
      %v786 = vunpack.c.l.b16 %v768
      %v787 = vunpack.c.l.b16 %v769
      %v788 = vunpack.c.l.b16 %v770
      %v789 = vpack.c.b16 %v782, %v781
      %v790 = vpack.c.b16 %v784, %v783
      %v791 = vpack.c.b16 %v786, %v785
      %v792 = vpack.c.b16 %v788, %v787
      %v794 = vsel %vm228, %v789, 0
      %v797 = vsel %vm228, %v790, 0
      %v800 = vsel %vm228, %v791, 0
      %v803 = vsel %vm228, %v792, 0
      %v806 = vsel %vm241, %v772, 0
      %808 = vmatprep.subr.bf16.mxu0 0
      %809 = vmatpush1.bf16.msra.mxu0 0
      %810 = vmatprep.subr.bf16.mxu0 0
      %811 = vmatpush1.bf16.msra.mxu0 0
      %812 = vmatprep.subr.bf16.mxu0 0
      %813 = vmatpush1.bf16.msra.mxu0 0
      %814 = vmatprep.subr.bf16.mxu0 0
      %815 = vmatpush1.bf16.msra.mxu0 0
      %816 = vmatprep.subr.bf16.mxu0 0
      %817 = vmatpush1.bf16.msra.mxu0 0
      %818 = vmatprep.subr.bf16.mxu0 0
      %819 = vmatpush1.bf16.msra.mxu0 0
      %820 = vmatprep.subr.bf16.mxu0 0
      %821 = vmatpush1.bf16.msra.mxu0 0
      %822 = vmatprep.subr.bf16.mxu0 0
      %823 = vmatpush1.bf16.msra.mxu0 %v806
      %824 = vmatprep.subr.bf16.mxu0 0
      %825 = vmatpush2.bf16.msra.mxu0 0
      %826 = vmatprep.subr.bf16.mxu0 0
      %827 = vmatpush2.bf16.msra.mxu0 0
      %828 = vmatprep.subr.bf16.mxu0 0
      %829 = vmatpush2.bf16.msra.mxu0 0
      %830 = vmatprep.subr.bf16.mxu0 0
      %831 = vmatpush2.bf16.msra.mxu0 0
      %832 = vmatprep.subr.bf16.mxu0 0
      %833 = vmatpush2.bf16.msra.mxu0 0
      %834 = vmatprep.subr.bf16.mxu0 0
      %835 = vmatpush2.bf16.msra.mxu0 0
      %836 = vmatprep.subr.bf16.mxu0 0
      %837 = vmatpush2.bf16.msra.mxu0 0
      %838 = vmatprep.subr.bf16.mxu0 0
      %839 = vmatpush2.bf16.msra.mxu0 0
      %840 = vmatprep.mubr.bf16.mxu0 0
      %841 = vmatmul.mubr.bf16.gmra.mxu0 %v794
      %v842 = vpop.f32.mrf.mxu0
      %v843 = vadd.f32 0.0, %v842
      %v844 = vpop.f32.mrf.mxu0
      %v845 = vpop.f32.mrf.mxu0
      %v846 = vadd.f32 0.0, %v845
      %v847 = vpop.f32.mrf.mxu0
      %848 = vmatprep.mubr.bf16.mxu0 0
      %849 = vmatmul.mubr.bf16.gmra.mxu0 %v797
      %v850 = vpop.f32.mrf.mxu0
      %v851 = vadd.f32 0.0, %v850
      %v852 = vpop.f32.mrf.mxu0
      %v853 = vpop.f32.mrf.mxu0
      %v854 = vadd.f32 0.0, %v853
      %v855 = vpop.f32.mrf.mxu0
      %856 = vmatprep.mubr.bf16.mxu0 0
      %857 = vmatmul.mubr.bf16.gmra.mxu0 %v800
      %v858 = vpop.f32.mrf.mxu0
      %v859 = vadd.f32 0.0, %v858
      %v860 = vpop.f32.mrf.mxu0
      %v861 = vpop.f32.mrf.mxu0
      %v862 = vadd.f32 0.0, %v861
      %v863 = vpop.f32.mrf.mxu0
      %864 = vmatprep.mubr.bf16.mxu0 0
      %865 = vmatmul.mubr.bf16.gmra.mxu0 %v803
      %v866 = vpop.f32.mrf.mxu0
      %v867 = vadd.f32 0.0, %v866
      %v868 = vpop.f32.mrf.mxu0
      %v869 = vpop.f32.mrf.mxu0
      %v870 = vadd.f32 0.0, %v869
      %v871 = vpop.f32.mrf.mxu0
      %872 = vdwg.mxu0
      %v873 = vadd.f32 %v754, %v843
      %v874 = vadd.f32 %v755, %v846
      %v875 = vadd.f32 %v756, %v851
      %v876 = vadd.f32 %v757, %v854
      %v877 = vadd.f32 %v758, %v859
      %v878 = vadd.f32 %v759, %v862
      %v879 = vadd.f32 %v760, %v867
      %v880 = vadd.f32 %v761, %v870
      %v881 = vld [vmem:[%s643] sm:$0xf]
      %v882 = vld [vmem:[%s643 + $0x4] sm:$0x1]
      %v883 = vld [vmem:[%s643 + $0x8] sm:$0xf]
      %v884 = vld [vmem:[%s643 + $0xc] sm:$0x1]
      %v885 = vld [vmem:[%s643 + $0x10] sm:$0xf]
      %v886 = vld [vmem:[%s643 + $0x14] sm:$0x1]
      %v887 = vld [vmem:[%s643 + $0x18] sm:$0xf]
      %v888 = vld [vmem:[%s643 + $0x1c] sm:$0x1]
      %v889 = vld [vmem:[%s643 + $0x20] sm:$0xf]
      %v890 = vld [vmem:[%s643 + $0x24] sm:$0x1]
      %v891 = vld [vmem:[%s643 + $0x28] sm:$0xf]
      %v892 = vld [vmem:[%s643 + $0x2c] sm:$0x1]
      %v893 = vld [vmem:[%s643 + $0x30] sm:$0xf]
      %v894 = vld [vmem:[%s643 + $0x34] sm:$0x1]
      %v895 = vld [vmem:[%s643 + $0x38] sm:$0xf]
      %v896 = vld [vmem:[%s643 + $0x3c] sm:$0x1]
      %v898 = vshrl.u32 %v881, 16
      %v900 = vrot.slane %v898, 4
      %v901 = vshll.u32 %v881, 16
      %v903 = vrot.slane %v901, 5
      %v904 = vor.u32 %v900, %v903
      %v905 = vrot.slane %v904, 4
      %v907 = vshll.u32 %v882, 16
      %v909 = vrot.slane %v907, 5
      %v910 = vsel %vm428, %v905, %v909
      %v912 = vshrl.u32 %v883, 16
      %v914 = vrot.slane %v912, 4
      %v915 = vshll.u32 %v883, 16
      %v917 = vrot.slane %v915, 5
      %v918 = vor.u32 %v914, %v917
      %v919 = vrot.slane %v918, 4
      %v921 = vshll.u32 %v884, 16
      %v923 = vrot.slane %v921, 5
      %v924 = vsel %vm428, %v919, %v923
      %v926 = vshrl.u32 %v885, 16
      %v928 = vrot.slane %v926, 4
      %v929 = vshll.u32 %v885, 16
      %v931 = vrot.slane %v929, 5
      %v932 = vor.u32 %v928, %v931
      %v933 = vrot.slane %v932, 4
      %v935 = vshll.u32 %v886, 16
      %v937 = vrot.slane %v935, 5
      %v938 = vsel %vm428, %v933, %v937
      %v940 = vshrl.u32 %v887, 16
      %v942 = vrot.slane %v940, 4
      %v943 = vshll.u32 %v887, 16
      %v945 = vrot.slane %v943, 5
      %v946 = vor.u32 %v942, %v945
      %v947 = vrot.slane %v946, 4
      %v949 = vshll.u32 %v888, 16
      %v951 = vrot.slane %v949, 5
      %v952 = vsel %vm428, %v947, %v951
      %v954 = vshrl.u32 %v889, 16
      %v956 = vrot.slane %v954, 4
      %v957 = vshll.u32 %v889, 16
      %v959 = vrot.slane %v957, 5
      %v960 = vor.u32 %v956, %v959
      %v961 = vrot.slane %v960, 4
      %v963 = vshll.u32 %v890, 16
      %v965 = vrot.slane %v963, 5
      %v966 = vsel %vm428, %v961, %v965
      %v968 = vshrl.u32 %v891, 16
      %v970 = vrot.slane %v968, 4
      %v971 = vshll.u32 %v891, 16
      %v973 = vrot.slane %v971, 5
      %v974 = vor.u32 %v970, %v973
      %v975 = vrot.slane %v974, 4
      %v977 = vshll.u32 %v892, 16
      %v979 = vrot.slane %v977, 5
      %v980 = vsel %vm428, %v975, %v979
      %v982 = vshrl.u32 %v893, 16
      %v984 = vrot.slane %v982, 4
      %v985 = vshll.u32 %v893, 16
      %v987 = vrot.slane %v985, 5
      %v988 = vor.u32 %v984, %v987
      %v989 = vrot.slane %v988, 4
      %v991 = vshll.u32 %v894, 16
      %v993 = vrot.slane %v991, 5
      %v994 = vsel %vm428, %v989, %v993
      %v996 = vshrl.u32 %v895, 16
      %v998 = vrot.slane %v996, 4
      %v999 = vshll.u32 %v895, 16
      %v1001 = vrot.slane %v999, 5
      %v1002 = vor.u32 %v998, %v1001
      %v1003 = vrot.slane %v1002, 4
      %v1005 = vshll.u32 %v896, 16
      %v1007 = vrot.slane %v1005, 5
      %v1008 = vsel %vm428, %v1003, %v1007
      %s1009 = scalar_lea.vmem %s1, 20
      %v1010 = vld [vmem:[%s1009] sm:$0xf]
      %v1011 = vunpack.c.l.b16 %v910
      %v1012 = vunpack.c.l.b16 %v924
      %v1013 = vunpack.c.l.b16 %v938
      %v1014 = vunpack.c.l.b16 %v952
      %v1015 = vunpack.c.l.b16 %v966
      %v1016 = vunpack.c.l.b16 %v980
      %v1017 = vunpack.c.l.b16 %v994
      %v1018 = vunpack.c.l.b16 %v1008
      %v1019 = vpack.c.b16 %v1012, %v1011
      %v1020 = vpack.c.b16 %v1014, %v1013
      %v1021 = vpack.c.b16 %v1016, %v1015
      %v1022 = vpack.c.b16 %v1018, %v1017
      %v1024 = vsel %vm228, %v1019, 0
      %v1027 = vsel %vm228, %v1020, 0
      %v1030 = vsel %vm228, %v1021, 0
      %v1033 = vsel %vm228, %v1022, 0
      %v1036 = vsel %vm241, %v1010, 0
      %1038 = vmatprep.subr.bf16.mxu0 0
      %1039 = vmatpush1.bf16.msra.mxu0 0
      %1040 = vmatprep.subr.bf16.mxu0 0
      %1041 = vmatpush1.bf16.msra.mxu0 0
      %1042 = vmatprep.subr.bf16.mxu0 0
      %1043 = vmatpush1.bf16.msra.mxu0 0
      %1044 = vmatprep.subr.bf16.mxu0 0
      %1045 = vmatpush1.bf16.msra.mxu0 0
      %1046 = vmatprep.subr.bf16.mxu0 0
      %1047 = vmatpush1.bf16.msra.mxu0 0
      %1048 = vmatprep.subr.bf16.mxu0 0
      %1049 = vmatpush1.bf16.msra.mxu0 0
      %1050 = vmatprep.subr.bf16.mxu0 0
      %1051 = vmatpush1.bf16.msra.mxu0 0
      %1052 = vmatprep.subr.bf16.mxu0 0
      %1053 = vmatpush1.bf16.msra.mxu0 %v1036
      %1054 = vmatprep.subr.bf16.mxu0 0
      %1055 = vmatpush2.bf16.msra.mxu0 0
      %1056 = vmatprep.subr.bf16.mxu0 0
      %1057 = vmatpush2.bf16.msra.mxu0 0
      %1058 = vmatprep.subr.bf16.mxu0 0
      %1059 = vmatpush2.bf16.msra.mxu0 0
      %1060 = vmatprep.subr.bf16.mxu0 0
      %1061 = vmatpush2.bf16.msra.mxu0 0
      %1062 = vmatprep.subr.bf16.mxu0 0
      %1063 = vmatpush2.bf16.msra.mxu0 0
      %1064 = vmatprep.subr.bf16.mxu0 0
      %1065 = vmatpush2.bf16.msra.mxu0 0
      %1066 = vmatprep.subr.bf16.mxu0 0
      %1067 = vmatpush2.bf16.msra.mxu0 0
      %1068 = vmatprep.subr.bf16.mxu0 0
      %1069 = vmatpush2.bf16.msra.mxu0 0
      %1070 = vmatprep.mubr.bf16.mxu0 0
      %1071 = vmatmul.mubr.bf16.gmra.mxu0 %v1024
      %v1072 = vpop.f32.mrf.mxu0
      %v1073 = vadd.f32 0.0, %v1072
      %v1074 = vpop.f32.mrf.mxu0
      %v1075 = vpop.f32.mrf.mxu0
      %v1076 = vadd.f32 0.0, %v1075
      %v1077 = vpop.f32.mrf.mxu0
      %1078 = vmatprep.mubr.bf16.mxu0 0
      %1079 = vmatmul.mubr.bf16.gmra.mxu0 %v1027
      %v1080 = vpop.f32.mrf.mxu0
      %v1081 = vadd.f32 0.0, %v1080
      %v1082 = vpop.f32.mrf.mxu0
      %v1083 = vpop.f32.mrf.mxu0
      %v1084 = vadd.f32 0.0, %v1083
      %v1085 = vpop.f32.mrf.mxu0
      %1086 = vmatprep.mubr.bf16.mxu0 0
      %1087 = vmatmul.mubr.bf16.gmra.mxu0 %v1030
      %v1088 = vpop.f32.mrf.mxu0
      %v1089 = vadd.f32 0.0, %v1088
      %v1090 = vpop.f32.mrf.mxu0
      %v1091 = vpop.f32.mrf.mxu0
      %v1092 = vadd.f32 0.0, %v1091
      %v1093 = vpop.f32.mrf.mxu0
      %1094 = vmatprep.mubr.bf16.mxu0 0
      %1095 = vmatmul.mubr.bf16.gmra.mxu0 %v1033
      %v1096 = vpop.f32.mrf.mxu0
      %v1097 = vadd.f32 0.0, %v1096
      %v1098 = vpop.f32.mrf.mxu0
      %v1099 = vpop.f32.mrf.mxu0
      %v1100 = vadd.f32 0.0, %v1099
      %v1101 = vpop.f32.mrf.mxu0
      %1102 = vdwg.mxu0
      %v1103 = vadd.f32 %v873, %v1073
      %v1104 = vadd.f32 %v874, %v1076
      %v1105 = vadd.f32 %v875, %v1081
      %v1106 = vadd.f32 %v876, %v1084
      %v1107 = vadd.f32 %v877, %v1089
      %v1108 = vadd.f32 %v878, %v1092
      %v1109 = vadd.f32 %v879, %v1097
      %v1110 = vadd.f32 %v880, %v1100
      %s1111 = scalar_lea.vmem %s176, 8
      %v1112 = vld [vmem:[%s1111] sm:$0xf]
      %v1113 = vld [vmem:[%s1111 + $0x8] sm:$0xf]
      %v1114 = vld [vmem:[%s1111 + $0x10] sm:$0xf]
      %v1115 = vld [vmem:[%s1111 + $0x18] sm:$0xf]
      %v1116 = vld [vmem:[%s1111 + $0x20] sm:$0xf]
      %v1117 = vld [vmem:[%s1111 + $0x28] sm:$0xf]
      %v1118 = vld [vmem:[%s1111 + $0x30] sm:$0xf]
      %v1119 = vld [vmem:[%s1111 + $0x38] sm:$0xf]
      %s1120 = scalar_lea.vmem %s1, 24
      %v1121 = vld [vmem:[%s1120] sm:$0xf]
      %v1130 = vunpack.c.l.b16 %v1112
      %v1131 = vunpack.c.l.b16 %v1113
      %v1132 = vunpack.c.l.b16 %v1114
      %v1133 = vunpack.c.l.b16 %v1115
      %v1134 = vunpack.c.l.b16 %v1116
      %v1135 = vunpack.c.l.b16 %v1117
      %v1136 = vunpack.c.l.b16 %v1118
      %v1137 = vunpack.c.l.b16 %v1119
      %v1138 = vpack.c.b16 %v1131, %v1130
      %v1139 = vpack.c.b16 %v1133, %v1132
      %v1140 = vpack.c.b16 %v1135, %v1134
      %v1141 = vpack.c.b16 %v1137, %v1136
      %v1143 = vsel %vm228, %v1138, 0
      %v1146 = vsel %vm228, %v1139, 0
      %v1149 = vsel %vm228, %v1140, 0
      %v1152 = vsel %vm228, %v1141, 0
      %v1155 = vsel %vm241, %v1121, 0
      %1157 = vmatprep.subr.bf16.mxu0 0
      %1158 = vmatpush1.bf16.msra.mxu0 0
      %1159 = vmatprep.subr.bf16.mxu0 0
      %1160 = vmatpush1.bf16.msra.mxu0 0
      %1161 = vmatprep.subr.bf16.mxu0 0
      %1162 = vmatpush1.bf16.msra.mxu0 0
      %1163 = vmatprep.subr.bf16.mxu0 0
      %1164 = vmatpush1.bf16.msra.mxu0 0
      %1165 = vmatprep.subr.bf16.mxu0 0
      %1166 = vmatpush1.bf16.msra.mxu0 0
      %1167 = vmatprep.subr.bf16.mxu0 0
      %1168 = vmatpush1.bf16.msra.mxu0 0
      %1169 = vmatprep.subr.bf16.mxu0 0
      %1170 = vmatpush1.bf16.msra.mxu0 0
      %1171 = vmatprep.subr.bf16.mxu0 0
      %1172 = vmatpush1.bf16.msra.mxu0 %v1155
      %1173 = vmatprep.subr.bf16.mxu0 0
      %1174 = vmatpush2.bf16.msra.mxu0 0
      %1175 = vmatprep.subr.bf16.mxu0 0
      %1176 = vmatpush2.bf16.msra.mxu0 0
      %1177 = vmatprep.subr.bf16.mxu0 0
      %1178 = vmatpush2.bf16.msra.mxu0 0
      %1179 = vmatprep.subr.bf16.mxu0 0
      %1180 = vmatpush2.bf16.msra.mxu0 0
      %1181 = vmatprep.subr.bf16.mxu0 0
      %1182 = vmatpush2.bf16.msra.mxu0 0
      %1183 = vmatprep.subr.bf16.mxu0 0
      %1184 = vmatpush2.bf16.msra.mxu0 0
      %1185 = vmatprep.subr.bf16.mxu0 0
      %1186 = vmatpush2.bf16.msra.mxu0 0
      %1187 = vmatprep.subr.bf16.mxu0 0
      %1188 = vmatpush2.bf16.msra.mxu0 0
      %1189 = vmatprep.mubr.bf16.mxu0 0
      %1190 = vmatmul.mubr.bf16.gmra.mxu0 %v1143
      %v1191 = vpop.f32.mrf.mxu0
      %v1192 = vadd.f32 0.0, %v1191
      %v1193 = vpop.f32.mrf.mxu0
      %v1194 = vpop.f32.mrf.mxu0
      %v1195 = vadd.f32 0.0, %v1194
      %v1196 = vpop.f32.mrf.mxu0
      %1197 = vmatprep.mubr.bf16.mxu0 0
      %1198 = vmatmul.mubr.bf16.gmra.mxu0 %v1146
      %v1199 = vpop.f32.mrf.mxu0
      %v1200 = vadd.f32 0.0, %v1199
      %v1201 = vpop.f32.mrf.mxu0
      %v1202 = vpop.f32.mrf.mxu0
      %v1203 = vadd.f32 0.0, %v1202
      %v1204 = vpop.f32.mrf.mxu0
      %1205 = vmatprep.mubr.bf16.mxu0 0
      %1206 = vmatmul.mubr.bf16.gmra.mxu0 %v1149
      %v1207 = vpop.f32.mrf.mxu0
      %v1208 = vadd.f32 0.0, %v1207
      %v1209 = vpop.f32.mrf.mxu0
      %v1210 = vpop.f32.mrf.mxu0
      %v1211 = vadd.f32 0.0, %v1210
      %v1212 = vpop.f32.mrf.mxu0
      %1213 = vmatprep.mubr.bf16.mxu0 0
      %1214 = vmatmul.mubr.bf16.gmra.mxu0 %v1152
      %v1215 = vpop.f32.mrf.mxu0
      %v1216 = vadd.f32 0.0, %v1215
      %v1217 = vpop.f32.mrf.mxu0
      %v1218 = vpop.f32.mrf.mxu0
      %v1219 = vadd.f32 0.0, %v1218
      %v1220 = vpop.f32.mrf.mxu0
      %1221 = vdwg.mxu0
      %v1222 = vadd.f32 %v1103, %v1192
      %v1223 = vadd.f32 %v1104, %v1195
      %v1224 = vadd.f32 %v1105, %v1200
      %v1225 = vadd.f32 %v1106, %v1203
      %v1226 = vadd.f32 %v1107, %v1208
      %v1227 = vadd.f32 %v1108, %v1211
      %v1228 = vadd.f32 %v1109, %v1216
      %v1229 = vadd.f32 %v1110, %v1219
      %s1230 = scalar_lea.vmem %s176, 80
      %v1231 = vld [vmem:[%s1230] sm:$0xf]
      %v1232 = vld [vmem:[%s1230 + $0x8] sm:$0xf]
      %v1233 = vld [vmem:[%s1230 + $0x10] sm:$0xf]
      %v1234 = vld [vmem:[%s1230 + $0x18] sm:$0xf]
      %v1235 = vld [vmem:[%s1230 + $0x20] sm:$0xf]
      %v1236 = vld [vmem:[%s1230 + $0x28] sm:$0xf]
      %v1237 = vld [vmem:[%s1230 + $0x30] sm:$0xf]
      %v1238 = vld [vmem:[%s1230 + $0x38] sm:$0xf]
      %s1239 = scalar_lea.vmem %s1, 28
      %v1240 = vld [vmem:[%s1239] sm:$0xf]
      %v1249 = vunpack.c.l.b16 %v1231
      %v1250 = vunpack.c.l.b16 %v1232
      %v1251 = vunpack.c.l.b16 %v1233
      %v1252 = vunpack.c.l.b16 %v1234
      %v1253 = vunpack.c.l.b16 %v1235
      %v1254 = vunpack.c.l.b16 %v1236
      %v1255 = vunpack.c.l.b16 %v1237
      %v1256 = vunpack.c.l.b16 %v1238
      %v1257 = vpack.c.b16 %v1250, %v1249
      %v1258 = vpack.c.b16 %v1252, %v1251
      %v1259 = vpack.c.b16 %v1254, %v1253
      %v1260 = vpack.c.b16 %v1256, %v1255
      %v1262 = vsel %vm228, %v1257, 0
      %v1265 = vsel %vm228, %v1258, 0
      %v1268 = vsel %vm228, %v1259, 0
      %v1271 = vsel %vm228, %v1260, 0
      %v1274 = vsel %vm241, %v1240, 0
      %1276 = vmatprep.subr.bf16.mxu0 0
      %1277 = vmatpush1.bf16.msra.mxu0 0
      %1278 = vmatprep.subr.bf16.mxu0 0
      %1279 = vmatpush1.bf16.msra.mxu0 0
      %1280 = vmatprep.subr.bf16.mxu0 0
      %1281 = vmatpush1.bf16.msra.mxu0 0
      %1282 = vmatprep.subr.bf16.mxu0 0
      %1283 = vmatpush1.bf16.msra.mxu0 0
      %1284 = vmatprep.subr.bf16.mxu0 0
      %1285 = vmatpush1.bf16.msra.mxu0 0
      %1286 = vmatprep.subr.bf16.mxu0 0
      %1287 = vmatpush1.bf16.msra.mxu0 0
      %1288 = vmatprep.subr.bf16.mxu0 0
      %1289 = vmatpush1.bf16.msra.mxu0 0
      %1290 = vmatprep.subr.bf16.mxu0 0
      %1291 = vmatpush1.bf16.msra.mxu0 %v1274
      %1292 = vmatprep.subr.bf16.mxu0 0
      %1293 = vmatpush2.bf16.msra.mxu0 0
      %1294 = vmatprep.subr.bf16.mxu0 0
      %1295 = vmatpush2.bf16.msra.mxu0 0
      %1296 = vmatprep.subr.bf16.mxu0 0
      %1297 = vmatpush2.bf16.msra.mxu0 0
      %1298 = vmatprep.subr.bf16.mxu0 0
      %1299 = vmatpush2.bf16.msra.mxu0 0
      %1300 = vmatprep.subr.bf16.mxu0 0
      %1301 = vmatpush2.bf16.msra.mxu0 0
      %1302 = vmatprep.subr.bf16.mxu0 0
      %1303 = vmatpush2.bf16.msra.mxu0 0
      %1304 = vmatprep.subr.bf16.mxu0 0
      %1305 = vmatpush2.bf16.msra.mxu0 0
      %1306 = vmatprep.subr.bf16.mxu0 0
      %1307 = vmatpush2.bf16.msra.mxu0 0
      %1308 = vmatprep.mubr.bf16.mxu0 0
      %1309 = vmatmul.mubr.bf16.gmra.mxu0 %v1262
      %v1310 = vpop.f32.mrf.mxu0
      %v1311 = vadd.f32 0.0, %v1310
      %v1312 = vpop.f32.mrf.mxu0
      %v1313 = vpop.f32.mrf.mxu0
      %v1314 = vadd.f32 0.0, %v1313
      %v1315 = vpop.f32.mrf.mxu0
      %1316 = vmatprep.mubr.bf16.mxu0 0
      %1317 = vmatmul.mubr.bf16.gmra.mxu0 %v1265
      %v1318 = vpop.f32.mrf.mxu0
      %v1319 = vadd.f32 0.0, %v1318
      %v1320 = vpop.f32.mrf.mxu0
      %v1321 = vpop.f32.mrf.mxu0
      %v1322 = vadd.f32 0.0, %v1321
      %v1323 = vpop.f32.mrf.mxu0
      %1324 = vmatprep.mubr.bf16.mxu0 0
      %1325 = vmatmul.mubr.bf16.gmra.mxu0 %v1268
      %v1326 = vpop.f32.mrf.mxu0
      %v1327 = vadd.f32 0.0, %v1326
      %v1328 = vpop.f32.mrf.mxu0
      %v1329 = vpop.f32.mrf.mxu0
      %v1330 = vadd.f32 0.0, %v1329
      %v1331 = vpop.f32.mrf.mxu0
      %1332 = vmatprep.mubr.bf16.mxu0 0
      %1333 = vmatmul.mubr.bf16.gmra.mxu0 %v1271
      %v1334 = vpop.f32.mrf.mxu0
      %v1335 = vadd.f32 0.0, %v1334
      %v1336 = vpop.f32.mrf.mxu0
      %v1337 = vpop.f32.mrf.mxu0
      %v1338 = vadd.f32 0.0, %v1337
      %v1339 = vpop.f32.mrf.mxu0
      %1340 = vdwg.mxu0
      %v1341 = vadd.f32 %v1222, %v1311
      %v1342 = vadd.f32 %v1223, %v1314
      %v1343 = vadd.f32 %v1224, %v1319
      %v1344 = vadd.f32 %v1225, %v1322
      %v1345 = vadd.f32 %v1226, %v1327
      %v1346 = vadd.f32 %v1227, %v1330
      %v1347 = vadd.f32 %v1228, %v1335
      %v1348 = vadd.f32 %v1229, %v1338
      %v1349 = vld [vmem:[%s1111] sm:$0xf]
      %v1350 = vld [vmem:[%s1111 + $0x4] sm:$0x1]
      %v1351 = vld [vmem:[%s1111 + $0x8] sm:$0xf]
      %v1352 = vld [vmem:[%s1111 + $0xc] sm:$0x1]
      %v1353 = vld [vmem:[%s1111 + $0x10] sm:$0xf]
      %v1354 = vld [vmem:[%s1111 + $0x14] sm:$0x1]
      %v1355 = vld [vmem:[%s1111 + $0x18] sm:$0xf]
      %v1356 = vld [vmem:[%s1111 + $0x1c] sm:$0x1]
      %v1357 = vld [vmem:[%s1111 + $0x20] sm:$0xf]
      %v1358 = vld [vmem:[%s1111 + $0x24] sm:$0x1]
      %v1359 = vld [vmem:[%s1111 + $0x28] sm:$0xf]
      %v1360 = vld [vmem:[%s1111 + $0x2c] sm:$0x1]
      %v1361 = vld [vmem:[%s1111 + $0x30] sm:$0xf]
      %v1362 = vld [vmem:[%s1111 + $0x34] sm:$0x1]
      %v1363 = vld [vmem:[%s1111 + $0x38] sm:$0xf]
      %v1364 = vld [vmem:[%s1111 + $0x3c] sm:$0x1]
      %v1366 = vshrl.u32 %v1349, 16
      %v1368 = vrot.slane %v1366, 4
      %v1369 = vshll.u32 %v1349, 16
      %v1371 = vrot.slane %v1369, 5
      %v1372 = vor.u32 %v1368, %v1371
      %v1373 = vrot.slane %v1372, 4
      %v1375 = vshll.u32 %v1350, 16
      %v1377 = vrot.slane %v1375, 5
      %v1378 = vsel %vm428, %v1373, %v1377
      %v1380 = vshrl.u32 %v1351, 16
      %v1382 = vrot.slane %v1380, 4
      %v1383 = vshll.u32 %v1351, 16
      %v1385 = vrot.slane %v1383, 5
      %v1386 = vor.u32 %v1382, %v1385
      %v1387 = vrot.slane %v1386, 4
      %v1389 = vshll.u32 %v1352, 16
      %v1391 = vrot.slane %v1389, 5
      %v1392 = vsel %vm428, %v1387, %v1391
      %v1394 = vshrl.u32 %v1353, 16
      %v1396 = vrot.slane %v1394, 4
      %v1397 = vshll.u32 %v1353, 16
      %v1399 = vrot.slane %v1397, 5
      %v1400 = vor.u32 %v1396, %v1399
      %v1401 = vrot.slane %v1400, 4
      %v1403 = vshll.u32 %v1354, 16
      %v1405 = vrot.slane %v1403, 5
      %v1406 = vsel %vm428, %v1401, %v1405
      %v1408 = vshrl.u32 %v1355, 16
      %v1410 = vrot.slane %v1408, 4
      %v1411 = vshll.u32 %v1355, 16
      %v1413 = vrot.slane %v1411, 5
      %v1414 = vor.u32 %v1410, %v1413
      %v1415 = vrot.slane %v1414, 4
      %v1417 = vshll.u32 %v1356, 16
      %v1419 = vrot.slane %v1417, 5
      %v1420 = vsel %vm428, %v1415, %v1419
      %v1422 = vshrl.u32 %v1357, 16
      %v1424 = vrot.slane %v1422, 4
      %v1425 = vshll.u32 %v1357, 16
      %v1427 = vrot.slane %v1425, 5
      %v1428 = vor.u32 %v1424, %v1427
      %v1429 = vrot.slane %v1428, 4
      %v1431 = vshll.u32 %v1358, 16
      %v1433 = vrot.slane %v1431, 5
      %v1434 = vsel %vm428, %v1429, %v1433
      %v1436 = vshrl.u32 %v1359, 16
      %v1438 = vrot.slane %v1436, 4
      %v1439 = vshll.u32 %v1359, 16
      %v1441 = vrot.slane %v1439, 5
      %v1442 = vor.u32 %v1438, %v1441
      %v1443 = vrot.slane %v1442, 4
      %v1445 = vshll.u32 %v1360, 16
      %v1447 = vrot.slane %v1445, 5
      %v1448 = vsel %vm428, %v1443, %v1447
      %v1450 = vshrl.u32 %v1361, 16
      %v1452 = vrot.slane %v1450, 4
      %v1453 = vshll.u32 %v1361, 16
      %v1455 = vrot.slane %v1453, 5
      %v1456 = vor.u32 %v1452, %v1455
      %v1457 = vrot.slane %v1456, 4
      %v1459 = vshll.u32 %v1362, 16
      %v1461 = vrot.slane %v1459, 5
      %v1462 = vsel %vm428, %v1457, %v1461
      %v1464 = vshrl.u32 %v1363, 16
      %v1466 = vrot.slane %v1464, 4
      %v1467 = vshll.u32 %v1363, 16
      %v1469 = vrot.slane %v1467, 5
      %v1470 = vor.u32 %v1466, %v1469
      %v1471 = vrot.slane %v1470, 4
      %v1473 = vshll.u32 %v1364, 16
      %v1475 = vrot.slane %v1473, 5
      %v1476 = vsel %vm428, %v1471, %v1475
      %s1477 = scalar_lea.vmem %s1, 32
      %v1478 = vld [vmem:[%s1477] sm:$0xf]
      %v1479 = vunpack.c.l.b16 %v1378
      %v1480 = vunpack.c.l.b16 %v1392
      %v1481 = vunpack.c.l.b16 %v1406
      %v1482 = vunpack.c.l.b16 %v1420
      %v1483 = vunpack.c.l.b16 %v1434
      %v1484 = vunpack.c.l.b16 %v1448
      %v1485 = vunpack.c.l.b16 %v1462
      %v1486 = vunpack.c.l.b16 %v1476
      %v1487 = vpack.c.b16 %v1480, %v1479
      %v1488 = vpack.c.b16 %v1482, %v1481
      %v1489 = vpack.c.b16 %v1484, %v1483
      %v1490 = vpack.c.b16 %v1486, %v1485
      %v1492 = vsel %vm228, %v1487, 0
      %v1495 = vsel %vm228, %v1488, 0
      %v1498 = vsel %vm228, %v1489, 0
      %v1501 = vsel %vm228, %v1490, 0
      %v1504 = vsel %vm241, %v1478, 0
      %1506 = vmatprep.subr.bf16.mxu0 0
      %1507 = vmatpush1.bf16.msra.mxu0 0
      %1508 = vmatprep.subr.bf16.mxu0 0
      %1509 = vmatpush1.bf16.msra.mxu0 0
      %1510 = vmatprep.subr.bf16.mxu0 0
      %1511 = vmatpush1.bf16.msra.mxu0 0
      %1512 = vmatprep.subr.bf16.mxu0 0
      %1513 = vmatpush1.bf16.msra.mxu0 0
      %1514 = vmatprep.subr.bf16.mxu0 0
      %1515 = vmatpush1.bf16.msra.mxu0 0
      %1516 = vmatprep.subr.bf16.mxu0 0
      %1517 = vmatpush1.bf16.msra.mxu0 0
      %1518 = vmatprep.subr.bf16.mxu0 0
      %1519 = vmatpush1.bf16.msra.mxu0 0
      %1520 = vmatprep.subr.bf16.mxu0 0
      %1521 = vmatpush1.bf16.msra.mxu0 %v1504
      %1522 = vmatprep.subr.bf16.mxu0 0
      %1523 = vmatpush2.bf16.msra.mxu0 0
      %1524 = vmatprep.subr.bf16.mxu0 0
      %1525 = vmatpush2.bf16.msra.mxu0 0
      %1526 = vmatprep.subr.bf16.mxu0 0
      %1527 = vmatpush2.bf16.msra.mxu0 0
      %1528 = vmatprep.subr.bf16.mxu0 0
      %1529 = vmatpush2.bf16.msra.mxu0 0
      %1530 = vmatprep.subr.bf16.mxu0 0
      %1531 = vmatpush2.bf16.msra.mxu0 0
      %1532 = vmatprep.subr.bf16.mxu0 0
      %1533 = vmatpush2.bf16.msra.mxu0 0
      %1534 = vmatprep.subr.bf16.mxu0 0
      %1535 = vmatpush2.bf16.msra.mxu0 0
      %1536 = vmatprep.subr.bf16.mxu0 0
      %1537 = vmatpush2.bf16.msra.mxu0 0
      %1538 = vmatprep.mubr.bf16.mxu0 0
      %1539 = vmatmul.mubr.bf16.gmra.mxu0 %v1492
      %v1540 = vpop.f32.mrf.mxu0
      %v1541 = vadd.f32 0.0, %v1540
      %v1542 = vpop.f32.mrf.mxu0
      %v1543 = vpop.f32.mrf.mxu0
      %v1544 = vadd.f32 0.0, %v1543
      %v1545 = vpop.f32.mrf.mxu0
      %1546 = vmatprep.mubr.bf16.mxu0 0
      %1547 = vmatmul.mubr.bf16.gmra.mxu0 %v1495
      %v1548 = vpop.f32.mrf.mxu0
      %v1549 = vadd.f32 0.0, %v1548
      %v1550 = vpop.f32.mrf.mxu0
      %v1551 = vpop.f32.mrf.mxu0
      %v1552 = vadd.f32 0.0, %v1551
      %v1553 = vpop.f32.mrf.mxu0
      %1554 = vmatprep.mubr.bf16.mxu0 0
      %1555 = vmatmul.mubr.bf16.gmra.mxu0 %v1498
      %v1556 = vpop.f32.mrf.mxu0
      %v1557 = vadd.f32 0.0, %v1556
      %v1558 = vpop.f32.mrf.mxu0
      %v1559 = vpop.f32.mrf.mxu0
      %v1560 = vadd.f32 0.0, %v1559
      %v1561 = vpop.f32.mrf.mxu0
      %1562 = vmatprep.mubr.bf16.mxu0 0
      %1563 = vmatmul.mubr.bf16.gmra.mxu0 %v1501
      %v1564 = vpop.f32.mrf.mxu0
      %v1565 = vadd.f32 0.0, %v1564
      %v1566 = vpop.f32.mrf.mxu0
      %v1567 = vpop.f32.mrf.mxu0
      %v1568 = vadd.f32 0.0, %v1567
      %v1569 = vpop.f32.mrf.mxu0
      %1570 = vdwg.mxu0
      %v1571 = vadd.f32 %v1341, %v1541
      %v1572 = vadd.f32 %v1342, %v1544
      %v1573 = vadd.f32 %v1343, %v1549
      %v1574 = vadd.f32 %v1344, %v1552
      %v1575 = vadd.f32 %v1345, %v1557
      %v1576 = vadd.f32 %v1346, %v1560
      %v1577 = vadd.f32 %v1347, %v1565
      %v1578 = vadd.f32 %v1348, %v1568
      %1579 = vst [vmem:[%s182] sm:$0xff] %v1571
      %1580 = vst [vmem:[%s182 + $0x8] sm:$0xff] %v1572
      %1581 = vst [vmem:[%s182 + $0x10] sm:$0xff] %v1573
      %1582 = vst [vmem:[%s182 + $0x18] sm:$0xff] %v1574
      %1583 = vst [vmem:[%s182 + $0x20] sm:$0xff] %v1575
      %1584 = vst [vmem:[%s182 + $0x28] sm:$0xff] %v1576
      %1585 = vst [vmem:[%s182 + $0x30] sm:$0xff] %v1577
      %1586 = vst [vmem:[%s182 + $0x38] sm:$0xff] %v1578
      %v1587 = vadd.f32 %v1571, %v1572
      %v1588 = vadd.f32 %v1587, %v1573
      %v1589 = vadd.f32 %v1588, %v1574
      %v1590 = vadd.f32 %v1589, %v1575
      %v1591 = vadd.f32 %v1590, %v1576
      %v1592 = vadd.f32 %v1591, %v1577
      %v1593 = vadd.f32 %v1592, %v1578
      %v1594 = vrot.slane %v1593, 4
      %v1595 = vadd.f32 %v1593, %v1594
      %v1596 = vrot.slane %v1595, 2
      %v1597 = vadd.f32 %v1595, %v1596
      %v1598 = vrot.slane %v1597, 1
      %v1599 = vadd.f32 %v1597, %v1598
      %v1600 = vrcp.pop 64.0
      %v1601 = vmul.f32 %v1599, %v1600
      %v1602 = vsub.f32 %v1571, %v1601
      %v1603 = vsub.f32 %v1572, %v1601
      %v1604 = vsub.f32 %v1573, %v1601
      %v1605 = vsub.f32 %v1574, %v1601
      %v1606 = vsub.f32 %v1575, %v1601
      %v1607 = vsub.f32 %v1576, %v1601
      %v1608 = vsub.f32 %v1577, %v1601
      %v1609 = vsub.f32 %v1578, %v1601
      %v1610 = vmul.f32 %v1602, %v1602
      %v1611 = vmul.f32 %v1603, %v1603
      %v1612 = vmul.f32 %v1604, %v1604
      %v1613 = vmul.f32 %v1605, %v1605
      %v1614 = vmul.f32 %v1606, %v1606
      %v1615 = vmul.f32 %v1607, %v1607
      %v1616 = vmul.f32 %v1608, %v1608
      %v1617 = vmul.f32 %v1609, %v1609
      %v1618 = vadd.f32 %v1610, %v1611
      %v1619 = vadd.f32 %v1618, %v1612
      %v1620 = vadd.f32 %v1619, %v1613
      %v1621 = vadd.f32 %v1620, %v1614
      %v1622 = vadd.f32 %v1621, %v1615
      %v1623 = vadd.f32 %v1622, %v1616
      %v1624 = vadd.f32 %v1623, %v1617
      %v1625 = vrot.slane %v1624, 4
      %v1626 = vadd.f32 %v1624, %v1625
      %v1627 = vrot.slane %v1626, 2
      %v1628 = vadd.f32 %v1626, %v1627
      %v1629 = vrot.slane %v1628, 1
      %v1630 = vadd.f32 %v1628, %v1629
      %vm1631 = vcmask 1040384
      %v1632 = vsel %vm1631, %v1599, %v1630
      %vm1633 = vcmask 1041408
      %v1634 = vsel %vm1633, %v1632, 0.0
      %1635 = vst [vmem:[%s186] sm:$0xff] %v1634
      %p1636 = scmp.lt.s32.totalorder %s15, 1
      %s1637 = scalar_select %p1636, %s15, 1
      %s1638 = smul.addr %s1637, 8
      %s1639 = smul.addr %s1638, 8
      %s1640 = scalar_lea.vmem %s2, %s1639
      %p1641 = scmp.lt.s32.totalorder %s15, 1
      %s1642 = scalar_select %p1641, %s15, 1
      %s1643 = smul.addr %s1642, 8
      %s1644 = scalar_lea.vmem %s3, %s1643
      // Predicated region
      $region29: #{ph_bottleneck_forward.10} parent=27 // pred_check
        %p1645 = pneg %p80
      $region30: #{ph_bottleneck_forward.10} parent=27 // pred_check_branch
        %1647 = sbr.rel (%p1645) target = $region32
      $region31: #{ph_bottleneck_forward.10} parent=27 // pred_region
        _
      $region32: #{ph_bottleneck_forward.10} parent=27 // pred_fallthru
        _
      // Predicated region
      $region33: #{ph_bottleneck_forward.10} parent=27 // pred_check
        %p1648 = pneg %p106
      $region34: #{ph_bottleneck_forward.10} parent=27 // pred_check_branch
        %1650 = sbr.rel (%p1648) target = $region36
      $region35: #{ph_bottleneck_forward.10} parent=27 // pred_region
        _
      $region36: #{ph_bottleneck_forward.10} parent=27 // pred_fallthru
        _
    $region28: #{ph_bottleneck_forward.10} parent=5 // pred_fallthru
      _
    %p1651 = scmp.le.s32.totalorder 2, %s10
    // Predicated region
    $region37: #{ph_bottleneck_forward.10} parent=5 // pred_check
      %p1652 = pneg %p1651
    $region38: #{ph_bottleneck_forward.10} parent=5 // pred_check_branch
      %1654 = sbr.rel (%p1652) target = $region40
    $region39: #{ph_bottleneck_forward.10} parent=5 // pred_region
      %s1655 = ssub.s32 %s10, 2
      // Predicated region
      $region41: #{ph_bottleneck_forward.10} parent=39 // pred_check
        %p1656 = pneg %p86
      $region42: #{ph_bottleneck_forward.10} parent=39 // pred_check_branch
        %1658 = sbr.rel (%p1656) target = $region44
      $region43: #{ph_bottleneck_forward.10} parent=39 // pred_region
        %p1659 = scmp.lt.s32.totalorder %s16, 1
        %s1660 = scalar_select %p1659, %s16, 1
        %s1661 = smul.addr %s1660, 8
        %s1662 = smul.addr %s1661, 8
        %s1663 = scalar_lea.vmem %s2, %s1662
      $region44: #{ph_bottleneck_forward.10} parent=39 // pred_fallthru
        _
      // Predicated region
      $region45: #{ph_bottleneck_forward.10} parent=39 // pred_check
        %p1664 = pneg %p112
      $region46: #{ph_bottleneck_forward.10} parent=39 // pred_check_branch
        %1666 = sbr.rel (%p1664) target = $region48
      $region47: #{ph_bottleneck_forward.10} parent=39 // pred_region
        %p1667 = scmp.lt.s32.totalorder %s16, 1
        %s1668 = scalar_select %p1667, %s16, 1
        %s1669 = smul.addr %s1668, 8
        %s1670 = scalar_lea.vmem %s3, %s1669
      $region48: #{ph_bottleneck_forward.10} parent=39 // pred_fallthru
        _
    $region40: #{ph_bottleneck_forward.10} parent=5 // pred_fallthru
      _
  $region6: #{ph_bottleneck_forward.10} parent=0 // loop_footer
    %s14 = sadd.s32 1, %s10
  $region7: #{ph_bottleneck_forward.10} parent=0 // loop_footer_branch
    %9 = sbr.rel target = $region3
  $region8: #{ph_bottleneck_forward.10} parent=0 // loop_exit
    _

</llo_original>
